<compile_context>
chip_gen: v6e
topology: v6e:2x2x1
jax: 0.10.0
libtpu: 0.0.40
codegen_flags: <defaults>
</compile_context>

<pallas_src>
import jax
import jax.numpy as jnp
import numpy as np
from jax import lax
from jax.experimental import pallas as pl
from jax.experimental.pallas import tpu as pltpu

EPS = 1e-5                 # BatchNorm eps
DILATIONS = (6, 12, 18)
LANE = 128
SUBLANE_BF16 = 16          # bf16 sublane packing


def _round_up(v, m):
    return ((v + m - 1) // m) * m


def _active_taps(H, W):
    """3x3 taps that can touch real (non-halo) pixels; others are statically zero."""
    taps = {}
    for d in DILATIONS:
        t = [(1, 1)]                                   # center tap always contributes
        for ky in range(3):
            for kx in range(3):
                if (ky, kx) == (1, 1):
                    continue
                if abs((ky - 1) * d) < H and abs((kx - 1) * d) < W:
                    t.append((ky, kx))
        taps[d] = t
    return taps


def _pick_tile_h(H):
    if H <= 8:
        return H
    for c in (16, 12, 8, 6, 4, 2):
        if c < H and H % c == 0:
            return c
    return H


def make_aspp_kernel(W, pad_y, pad_x, Cip, Cop, tile_h, active_taps):
    band_rows = tile_h + 2 * pad_y

    def kernel(x_ref, w1_ref, w3_ref, wfp_ref, gb_ref, s_ref, b_ref, o_ref):
        row0 = pl.multiple_of(pl.program_id(1) * tile_h, tile_h)

        # One dynamic row-band load per step; every tap below is a static slice of it.
        band = x_ref[0, pl.ds(row0, band_rows), :, :]          # (band_rows, Wp, Cip) bf16

        def patch(dy, dx):                                     # static offsets only
            oy, ox = pad_y + dy, pad_x + dx
            return band[oy:oy + tile_h, ox:ox + W, :].reshape(tile_h * W, Cip)

        def affine_relu(y, idx):                               # folded conv-bias + eval BN + ReLU
            return jnp.maximum(y * s_ref[idx, :][None, :] + b_ref[idx, :][None, :], 0.0)

        xc = patch(0, 0)                                       # core rows: 1x1 + all center taps

        # ---- branch 0: 1x1 conv ----
        z0 = affine_relu(jnp.dot(xc, w1_ref[...],
                                 preferred_element_type=jnp.float32), 0)

        # ---- dilated 3x3 branches (only statically-active taps) ----
        def dilated_branch(bi, d):
            acc = None
            for (ky, kx) in active_taps[d]:
                p = xc if (ky, kx) == (1, 1) else patch((ky - 1) * d, (kx - 1) * d)
                t = jnp.dot(p, w3_ref[bi, ky * 3 + kx],
                            preferred_element_type=jnp.float32)
                acc = t if acc is None else acc + t
            return affine_relu(acc, 1 + bi)

        z1 = dilated_branch(0, 6)
        z2 = dilated_branch(1, 12)
        z3 = dilated_branch(2, 18)

        # ---- final 1x1 mixing conv: two K=2*Cop matmuls (better MXU fill) plus the
        #      global-average-pool branch folded in as a per-image bias ----
        p01 = jnp.concatenate([z0.astype(jnp.bfloat16), z1.astype(jnp.bfloat16)], axis=1)
        p23 = jnp.concatenate([z2.astype(jnp.bfloat16), z3.astype(jnp.bfloat16)], axis=1)
        facc = jnp.dot(p01, wfp_ref[0], preferred_element_type=jnp.float32)
        facc = facc + jnp.dot(p23, wfp_ref[1], preferred_element_type=jnp.float32)
        facc = facc + gb_ref[0]                                # (1, Cop) GAP bias broadcast

        o_ref[...] = affine_relu(facc, 5).reshape(1, tile_h, W, Cop)

    return kernel


def aspp_forward(x_nchw, p, out_channels):
    N, Ci, H, W = x_nchw.shape
    Cip, Cop = p['w1'].shape

    active_taps = _active_taps(H, W)
    need_y = max([d for d in DILATIONS if d < H] + [0])
    need_x = max([d for d in DILATIONS if d < W] + [0])
    pad_y = need_y
    pad_x = _round_up(need_x, SUBLANE_BF16) if need_x else 0   # sublane-aligned center window
    Hp, Wp = H + 2 * pad_y, W + 2 * pad_x
    tile_h = _pick_tile_h(H)
    n_tiles = H // tile_h

    # NCHW -> NHWC, channel pad to lane width, spatial zero halo, bf16 for the MXU.
    x_nhwc = jnp.transpose(x_nchw, (0, 2, 3, 1))
    x_nhwc = jnp.pad(x_nhwc, ((0, 0), (0, 0), (0, 0), (0, Cip - Ci)))
    x_pad = jnp.pad(x_nhwc, ((0, 0), (pad_y, pad_y), (pad_x, pad_x), (0, 0))).astype(jnp.bfloat16)

    # Global-average-pool branch hoisted out of the kernel and folded into a per-image
    # (1, Cop) bias on the final 1x1 conv (its broadcast commutes with the conv).
    gmean = jnp.mean(x_nchw, axis=(2, 3))                                    # (N, Ci) f32
    gmean = jnp.pad(gmean, ((0, 0), (0, Cip - Ci))).astype(jnp.bfloat16)
    g = jnp.dot(gmean, p['wg'], preferred_element_type=jnp.float32)
    g = jnp.maximum(g * p['scale'][4][None, :] + p['bias'][4][None, :], 0.0)
    gbias = jnp.dot(g.astype(jnp.bfloat16), p['wf4'],
                    preferred_element_type=jnp.float32)[:, None, :]          # (N, 1, Cop)

    kernel = make_aspp_kernel(W, pad_y, pad_x, Cip, Cop, tile_h, active_taps)

    # VMEM budget: double-buffered image/output/gbias blocks, single-buffered weights,
    # the row band, per-tap relayout copies and live f32 tiles, plus headroom.
    n_taps = 1 + sum(len(v) for v in active_taps.values())
    img_blk = Hp * Wp * Cip * 2
    out_blk = tile_h * W * Cop * 4
    gb_blk = Cop * 4
    wts = (Cip * Cop + 27 * Cip * Cop + 2 * 2 * Cop * Cop) * 2 + 2 * 6 * Cop * 4
    band = (tile_h + 2 * pad_y) * Wp * Cip * 2
    patches = n_taps * tile_h * W * Cip * 2
    f32_live = 10 * tile_h * W * Cop * 4
    vmem_limit = int(min(2 * (img_blk + out_blk + gb_blk) + wts + band + patches
                         + f32_live + (8 << 20), 48 << 20))

    out_nhwc = pl.pallas_call(
        kernel,
        out_shape=jax.ShapeDtypeStruct((N, H, W, Cop), jnp.float32),
        grid=(N, n_tiles),
        in_specs=[
            pl.BlockSpec((1, Hp, Wp, Cip), lambda n, t: (n, 0, 0, 0)),       # padded image
            pl.BlockSpec((Cip, Cop), lambda n, t: (0, 0),                    # 1x1 weight
                         pipeline_mode=pl.Buffered(1)),
            pl.BlockSpec((3, 9, Cip, Cop), lambda n, t: (0, 0, 0, 0),        # 3x3 weights
                         pipeline_mode=pl.Buffered(1)),
            pl.BlockSpec((2, 2 * Cop, Cop), lambda n, t: (0, 0, 0),          # final-conv pairs
                         pipeline_mode=pl.Buffered(1)),
            pl.BlockSpec((1, 1, Cop), lambda n, t: (n, 0, 0)),               # GAP bias (per image)
            pl.BlockSpec((6, Cop), lambda n, t: (0, 0),                      # folded BN scale
                         pipeline_mode=pl.Buffered(1)),
            pl.BlockSpec((6, Cop), lambda n, t: (0, 0),                      # folded BN bias
                         pipeline_mode=pl.Buffered(1)),
        ],
        out_specs=pl.BlockSpec((1, tile_h, W, Cop), lambda n, t: (n, t, 0, 0)),
        compiler_params=pltpu.CompilerParams(
            dimension_semantics=("parallel", "parallel"),
            vmem_limit_bytes=vmem_limit),
    )(x_pad, p['w1'], p['w3'], p['wfp'], gbias, p['scale'], p['bias'])

    return jnp.transpose(out_nhwc[..., :out_channels], (0, 3, 1, 2))


def init_params(key, Ci, Co):
    Cip, Cop = _round_up(Ci, LANE), _round_up(Co, LANE)
    ks = jax.random.split(key, 16)

    def w(k, shape, s=0.1):
        return (s * jax.random.normal(k, shape)).astype(jnp.float32)

    # PyTorch-layout parameters (OIHW conv weights, per-layer BN stats)
    t = {}
    t['w1'], t['b1'] = w(ks[0], (Co, Ci, 1, 1)), w(ks[1], (Co,))
    t['w6'], t['b6'] = w(ks[2], (Co, Ci, 3, 3)), w(ks[3], (Co,))
    t['w12'], t['b12'] = w(ks[4], (Co, Ci, 3, 3)), w(ks[5], (Co,))
    t['w18'], t['b18'] = w(ks[6], (Co, Ci, 3, 3)), w(ks[7], (Co,))
    t['wg'], t['bg'] = w(ks[8], (Co, Ci, 1, 1)), w(ks[9], (Co,))
    t['wf'], t['bf'] = w(ks[10], (Co, 5 * Co, 1, 1)), w(ks[11], (Co,))
    t['gamma'] = (1.0 + 0.1 * jax.random.normal(ks[12], (6, Co))).astype(jnp.float32)
    t['beta'] = (0.1 * jax.random.normal(ks[13], (6, Co))).astype(jnp.float32)
    t['rmean'] = (0.1 * jax.random.normal(ks[14], (6, Co))).astype(jnp.float32)
    t['rvar'] = (1.0 + jnp.abs(0.1 * jax.random.normal(ks[15], (6, Co)))).astype(jnp.float32)

    # Fold conv bias + eval-mode BN into per-layer affine: y = conv(x) * scale + bias
    conv_b = jnp.stack([t['b1'], t['b6'], t['b12'], t['b18'], t['bg'], t['bf']])
    scale = t['gamma'] / jnp.sqrt(t['rvar'] + EPS)
    bias = t['beta'] + (conv_b - t['rmean']) * scale

    def to_ci_co(wt):   # (Co, Ci, 1, 1) -> (Ci, Co)
        return jnp.transpose(wt[:, :, 0, 0], (1, 0))

    def to_taps(wt):    # (Co, Ci, 3, 3) -> (9, Ci, Co), tap index = ky*3 + kx
        return jnp.transpose(wt, (2, 3, 1, 0)).reshape(9, Ci, Co)

    def pad_last2(a, r, c):
        return jnp.pad(a, [(0, 0)] * (a.ndim - 2)
                       + [(0, r - a.shape[-2]), (0, c - a.shape[-1])])

    def pad_last(a, c):
        return jnp.pad(a, [(0, 0)] * (a.ndim - 1) + [(0, c - a.shape[-1])])

    # Final-conv weight: (Co, 5*Co, 1, 1) -> 5 blocks of (Cop, Cop); blocks 0..3 are
    # stacked in pairs for K=2*Cop matmuls, block 4 (GAP) stays in the wrapper.
    wf5 = pad_last2(jnp.transpose(t['wf'][:, :, 0, 0], (1, 0)).reshape(5, Co, Co), Cop, Cop)
    wfp = jnp.stack([jnp.concatenate([wf5[0], wf5[1]], axis=0),
                     jnp.concatenate([wf5[2], wf5[3]], axis=0)])          # (2, 2*Cop, Cop)

    kparams = dict(
        w1=pad_last2(to_ci_co(t['w1']), Cip, Cop).astype(jnp.bfloat16),
        w3=pad_last2(jnp.stack([to_taps(t['w6']), to_taps(t['w12']), to_taps(t['w18'])]),
                     Cip, Cop).astype(jnp.bfloat16),
        wg=pad_last2(to_ci_co(t['wg']), Cip, Cop).astype(jnp.bfloat16),
        wfp=wfp.astype(jnp.bfloat16),
        wf4=wf5[4].astype(jnp.bfloat16),
        scale=pad_last(scale, Cop).astype(jnp.float32),
        bias=pad_last(bias, Cop).astype(jnp.float32),
    )
    return kparams, t


def reference_aspp(x, t):
    """Pure-JAX NCHW f32 reference matching the PyTorch module (eval-mode BN)."""
    def cbr(z, wt, b, li, dil, pad):
        y = lax.conv_general_dilated(
            z, wt, window_strides=(1, 1),
            padding=[(pad, pad), (pad, pad)],
            rhs_dilation=(dil, dil),
            dimension_numbers=('NCHW', 'OIHW', 'NCHW'))
        y = y + b[None, :, None, None]
        s = (t['gamma'][li] / jnp.sqrt(t['rvar'][li] + EPS))
        y = (y - t['rmean'][li][None, :, None, None]) * s[None, :, None, None] \
            + t['beta'][li][None, :, None, None]
        return jnp.maximum(y, 0.0)

    N, Ci, H, W = x.shape
    o1 = cbr(x, t['w1'], t['b1'], 0, 1, 0)
    o2 = cbr(x, t['w6'], t['b6'], 1, 6, 6)
    o3 = cbr(x, t['w12'], t['b12'], 2, 12, 12)
    o4 = cbr(x, t['w18'], t['b18'], 3, 18, 18)
    gap = jnp.mean(x, axis=(2, 3), keepdims=True)
    o5 = cbr(gap, t['wg'], t['bg'], 4, 1, 0)
    o5 = jnp.broadcast_to(o5, (N, o5.shape[1], H, W))
    cat = jnp.concatenate([o1, o2, o3, o4, o5], axis=1)
    return cbr(cat, t['wf'], t['bf'], 5, 1, 0)


if __name__ == "__main__":
    key = jax.random.PRNGKey(0)
    kx, kp = jax.random.split(key)

    N, Ci, Co, H, W = 2, 4, 8, 16, 16
    x = jax.random.normal(kx, (N, Ci, H, W), jnp.float32)

    kparams, tparams = init_params(kp, Ci, Co)

    out = aspp_forward(x, kparams, Co)
    out = jax.block_until_ready(out)
    assert out.shape == (N, Co, H, W)

    ref = reference_aspp(x, tparams)
    np.testing.assert_allclose(np.asarray(out), np.asarray(ref), rtol=3e-2, atol=3e-2)

    print("KERNEL_OK")
</pallas_src>

<mosaic_0001>
module attributes {stable_mosaic.version = 11 : i64} {
  func.func @kernel(%arg0: i32, %arg1: i32, %arg2: memref<1x40x48x128xbf16, #tpu.memory_space<vmem>>, %arg3: memref<128x128xbf16, #tpu.memory_space<vmem>>, %arg4: memref<3x9x128x128xbf16, #tpu.memory_space<vmem>>, %arg5: memref<2x256x128xbf16, #tpu.memory_space<vmem>>, %arg6: memref<1x1x128xf32, #tpu.memory_space<vmem>>, %arg7: memref<6x128xf32, #tpu.memory_space<vmem>>, %arg8: memref<6x128xf32, #tpu.memory_space<vmem>>, %arg9: memref<1x8x16x128xf32, #tpu.memory_space<vmem>>) attributes {dimension_semantics = [#tpu.dimension_semantics<parallel>, #tpu.dimension_semantics<parallel>], iteration_bounds = array<i64: 2, 2>, scalar_prefetch = 0 : i64, scratch_operands = 0 : i64, tpu.core_type = #tpu.core_type<tc>, window_params = [{transform_indices = @transform_0, window_bounds = array<i64: 1, 40, 48, 128>}, {pipeline_mode = #tpu.pipeline_mode<synchronous>, transform_indices = @transform_1, window_bounds = array<i64: 128, 128>}, {pipeline_mode = #tpu.pipeline_mode<synchronous>, transform_indices = @transform_2, window_bounds = array<i64: 3, 9, 128, 128>}, {pipeline_mode = #tpu.pipeline_mode<synchronous>, transform_indices = @transform_3, window_bounds = array<i64: 2, 256, 128>}, {transform_indices = @transform_4, window_bounds = array<i64: 1, 1, 128>}, {pipeline_mode = #tpu.pipeline_mode<synchronous>, transform_indices = @transform_5, window_bounds = array<i64: 6, 128>}, {pipeline_mode = #tpu.pipeline_mode<synchronous>, transform_indices = @transform_6, window_bounds = array<i64: 6, 128>}, {transform_indices = @transform_7, window_bounds = array<i64: 1, 8, 16, 128>}]} {
    %c8_i32 = arith.constant 8 : i32
    %0 = arith.muli %arg1, %c8_i32 : i32
    %1 = tpu.assume_multiple %0, 8 : i32
    %c0 = arith.constant 0 : index
    %2 = arith.index_cast %1 : i32 to index
    %c0_0 = arith.constant 0 : index
    %c0_1 = arith.constant 0 : index
    %3 = vector.load %arg2[%c0, %2, %c0_0, %c0_1] : memref<1x40x48x128xbf16, #tpu.memory_space<vmem>>, vector<1x32x48x128xbf16>
    %4 = vector.shape_cast %3 : vector<1x32x48x128xbf16> to vector<32x48x128xbf16>
    %5 = vector.extract_strided_slice %4 {offsets = [12, 16, 0], sizes = [8, 16, 128], strides = [1, 1, 1]} : vector<32x48x128xbf16> to vector<8x16x128xbf16>
    %6 = vector.shape_cast %5 : vector<8x16x128xbf16> to vector<128x128xbf16>
    %c0_2 = arith.constant 0 : index
    %c0_3 = arith.constant 0 : index
    %7 = vector.load %arg3[%c0_2, %c0_3] : memref<128x128xbf16, #tpu.memory_space<vmem>>, vector<128x128xbf16>
    %cst = arith.constant dense<0.000000e+00> : vector<128x128xf32>
    %8 = tpu.matmul %6, %7, %cst {dimension_numbers = #tpu.dot_dimension_numbers<[1], [0], [0], [1], [0, 0, 1, 1], [], []>} : vector<128x128xbf16>, vector<128x128xbf16>, vector<128x128xf32> -> vector<128x128xf32>
    %c0_4 = arith.constant 0 : index
    %c0_5 = arith.constant 0 : index
    %9 = vector.load %arg7[%c0_4, %c0_5] : memref<6x128xf32, #tpu.memory_space<vmem>>, vector<1x128xf32>
    %10 = vector.shape_cast %9 : vector<1x128xf32> to vector<128xf32>
    %11 = vector.shape_cast %10 : vector<128xf32> to vector<1x128xf32>
    %12 = vector.broadcast %11 : vector<1x128xf32> to vector<128x128xf32>
    %13 = arith.mulf %8, %12 : vector<128x128xf32>
    %c0_6 = arith.constant 0 : index
    %c0_7 = arith.constant 0 : index
    %14 = vector.load %arg8[%c0_6, %c0_7] : memref<6x128xf32, #tpu.memory_space<vmem>>, vector<1x128xf32>
    %15 = vector.shape_cast %14 : vector<1x128xf32> to vector<128xf32>
    %16 = vector.shape_cast %15 : vector<128xf32> to vector<1x128xf32>
    %17 = vector.broadcast %16 : vector<1x128xf32> to vector<128x128xf32>
    %18 = arith.addf %13, %17 : vector<128x128xf32>
    %cst_8 = arith.constant 0.000000e+00 : f32
    %19 = vector.broadcast %cst_8 : f32 to vector<128x128xf32>
    %20 = arith.maximumf %18, %19 : vector<128x128xf32>
    %c0_9 = arith.constant 0 : index
    %c4 = arith.constant 4 : index
    %c0_10 = arith.constant 0 : index
    %c0_11 = arith.constant 0 : index
    %21 = vector.load %arg4[%c0_9, %c4, %c0_10, %c0_11] : memref<3x9x128x128xbf16, #tpu.memory_space<vmem>>, vector<1x1x128x128xbf16>
    %22 = vector.shape_cast %21 : vector<1x1x128x128xbf16> to vector<128x128xbf16>
    %cst_12 = arith.constant dense<0.000000e+00> : vector<128x128xf32>
    %23 = tpu.matmul %6, %22, %cst_12 {dimension_numbers = #tpu.dot_dimension_numbers<[1], [0], [0], [1], [0, 0, 1, 1], [], []>} : vector<128x128xbf16>, vector<128x128xbf16>, vector<128x128xf32> -> vector<128x128xf32>
    %24 = vector.extract_strided_slice %4 {offsets = [6, 10, 0], sizes = [8, 16, 128], strides = [1, 1, 1]} : vector<32x48x128xbf16> to vector<8x16x128xbf16>
    %25 = vector.shape_cast %24 : vector<8x16x128xbf16> to vector<128x128xbf16>
    %c0_13 = arith.constant 0 : index
    %c0_14 = arith.constant 0 : index
    %c0_15 = arith.constant 0 : index
    %c0_16 = arith.constant 0 : index
    %26 = vector.load %arg4[%c0_13, %c0_14, %c0_15, %c0_16] : memref<3x9x128x128xbf16, #tpu.memory_space<vmem>>, vector<1x1x128x128xbf16>
    %27 = vector.shape_cast %26 : vector<1x1x128x128xbf16> to vector<128x128xbf16>
    %cst_17 = arith.constant dense<0.000000e+00> : vector<128x128xf32>
    %28 = tpu.matmul %25, %27, %cst_17 {dimension_numbers = #tpu.dot_dimension_numbers<[1], [0], [0], [1], [0, 0, 1, 1], [], []>} : vector<128x128xbf16>, vector<128x128xbf16>, vector<128x128xf32> -> vector<128x128xf32>
    %29 = arith.addf %23, %28 : vector<128x128xf32>
    %30 = vector.extract_strided_slice %4 {offsets = [6, 16, 0], sizes = [8, 16, 128], strides = [1, 1, 1]} : vector<32x48x128xbf16> to vector<8x16x128xbf16>
    %31 = vector.shape_cast %30 : vector<8x16x128xbf16> to vector<128x128xbf16>
    %c0_18 = arith.constant 0 : index
    %c1 = arith.constant 1 : index
    %c0_19 = arith.constant 0 : index
    %c0_20 = arith.constant 0 : index
    %32 = vector.load %arg4[%c0_18, %c1, %c0_19, %c0_20] : memref<3x9x128x128xbf16, #tpu.memory_space<vmem>>, vector<1x1x128x128xbf16>
    %33 = vector.shape_cast %32 : vector<1x1x128x128xbf16> to vector<128x128xbf16>
    %cst_21 = arith.constant dense<0.000000e+00> : vector<128x128xf32>
    %34 = tpu.matmul %31, %33, %cst_21 {dimension_numbers = #tpu.dot_dimension_numbers<[1], [0], [0], [1], [0, 0, 1, 1], [], []>} : vector<128x128xbf16>, vector<128x128xbf16>, vector<128x128xf32> -> vector<128x128xf32>
    %35 = arith.addf %29, %34 : vector<128x128xf32>
    %36 = vector.extract_strided_slice %4 {offsets = [6, 22, 0], sizes = [8, 16, 128], strides = [1, 1, 1]} : vector<32x48x128xbf16> to vector<8x16x128xbf16>
    %37 = vector.shape_cast %36 : vector<8x16x128xbf16> to vector<128x128xbf16>
    %c0_22 = arith.constant 0 : index
    %c2 = arith.constant 2 : index
    %c0_23 = arith.constant 0 : index
    %c0_24 = arith.constant 0 : index
    %38 = vector.load %arg4[%c0_22, %c2, %c0_23, %c0_24] : memref<3x9x128x128xbf16, #tpu.memory_space<vmem>>, vector<1x1x128x128xbf16>
    %39 = vector.shape_cast %38 : vector<1x1x128x128xbf16> to vector<128x128xbf16>
    %cst_25 = arith.constant dense<0.000000e+00> : vector<128x128xf32>
    %40 = tpu.matmul %37, %39, %cst_25 {dimension_numbers = #tpu.dot_dimension_numbers<[1], [0], [0], [1], [0, 0, 1, 1], [], []>} : vector<128x128xbf16>, vector<128x128xbf16>, vector<128x128xf32> -> vector<128x128xf32>
    %41 = arith.addf %35, %40 : vector<128x128xf32>
    %42 = vector.extract_strided_slice %4 {offsets = [12, 10, 0], sizes = [8, 16, 128], strides = [1, 1, 1]} : vector<32x48x128xbf16> to vector<8x16x128xbf16>
    %43 = vector.shape_cast %42 : vector<8x16x128xbf16> to vector<128x128xbf16>
    %c0_26 = arith.constant 0 : index
    %c3 = arith.constant 3 : index
    %c0_27 = arith.constant 0 : index
    %c0_28 = arith.constant 0 : index
    %44 = vector.load %arg4[%c0_26, %c3, %c0_27, %c0_28] : memref<3x9x128x128xbf16, #tpu.memory_space<vmem>>, vector<1x1x128x128xbf16>
    %45 = vector.shape_cast %44 : vector<1x1x128x128xbf16> to vector<128x128xbf16>
    %cst_29 = arith.constant dense<0.000000e+00> : vector<128x128xf32>
    %46 = tpu.matmul %43, %45, %cst_29 {dimension_numbers = #tpu.dot_dimension_numbers<[1], [0], [0], [1], [0, 0, 1, 1], [], []>} : vector<128x128xbf16>, vector<128x128xbf16>, vector<128x128xf32> -> vector<128x128xf32>
    %47 = arith.addf %41, %46 : vector<128x128xf32>
    %48 = vector.extract_strided_slice %4 {offsets = [12, 22, 0], sizes = [8, 16, 128], strides = [1, 1, 1]} : vector<32x48x128xbf16> to vector<8x16x128xbf16>
    %49 = vector.shape_cast %48 : vector<8x16x128xbf16> to vector<128x128xbf16>
    %c0_30 = arith.constant 0 : index
    %c5 = arith.constant 5 : index
    %c0_31 = arith.constant 0 : index
    %c0_32 = arith.constant 0 : index
    %50 = vector.load %arg4[%c0_30, %c5, %c0_31, %c0_32] : memref<3x9x128x128xbf16, #tpu.memory_space<vmem>>, vector<1x1x128x128xbf16>
    %51 = vector.shape_cast %50 : vector<1x1x128x128xbf16> to vector<128x128xbf16>
    %cst_33 = arith.constant dense<0.000000e+00> : vector<128x128xf32>
    %52 = tpu.matmul %49, %51, %cst_33 {dimension_numbers = #tpu.dot_dimension_numbers<[1], [0], [0], [1], [0, 0, 1, 1], [], []>} : vector<128x128xbf16>, vector<128x128xbf16>, vector<128x128xf32> -> vector<128x128xf32>
    %53 = arith.addf %47, %52 : vector<128x128xf32>
    %54 = vector.extract_strided_slice %4 {offsets = [18, 10, 0], sizes = [8, 16, 128], strides = [1, 1, 1]} : vector<32x48x128xbf16> to vector<8x16x128xbf16>
    %55 = vector.shape_cast %54 : vector<8x16x128xbf16> to vector<128x128xbf16>
    %c0_34 = arith.constant 0 : index
    %c6 = arith.constant 6 : index
    %c0_35 = arith.constant 0 : index
    %c0_36 = arith.constant 0 : index
    %56 = vector.load %arg4[%c0_34, %c6, %c0_35, %c0_36] : memref<3x9x128x128xbf16, #tpu.memory_space<vmem>>, vector<1x1x128x128xbf16>
    %57 = vector.shape_cast %56 : vector<1x1x128x128xbf16> to vector<128x128xbf16>
    %cst_37 = arith.constant dense<0.000000e+00> : vector<128x128xf32>
    %58 = tpu.matmul %55, %57, %cst_37 {dimension_numbers = #tpu.dot_dimension_numbers<[1], [0], [0], [1], [0, 0, 1, 1], [], []>} : vector<128x128xbf16>, vector<128x128xbf16>, vector<128x128xf32> -> vector<128x128xf32>
    %59 = arith.addf %53, %58 : vector<128x128xf32>
    %60 = vector.extract_strided_slice %4 {offsets = [18, 16, 0], sizes = [8, 16, 128], strides = [1, 1, 1]} : vector<32x48x128xbf16> to vector<8x16x128xbf16>
    %61 = vector.shape_cast %60 : vector<8x16x128xbf16> to vector<128x128xbf16>
    %c0_38 = arith.constant 0 : index
    %c7 = arith.constant 7 : index
    %c0_39 = arith.constant 0 : index
    %c0_40 = arith.constant 0 : index
    %62 = vector.load %arg4[%c0_38, %c7, %c0_39, %c0_40] : memref<3x9x128x128xbf16, #tpu.memory_space<vmem>>, vector<1x1x128x128xbf16>
    %63 = vector.shape_cast %62 : vector<1x1x128x128xbf16> to vector<128x128xbf16>
    %cst_41 = arith.constant dense<0.000000e+00> : vector<128x128xf32>
    %64 = tpu.matmul %61, %63, %cst_41 {dimension_numbers = #tpu.dot_dimension_numbers<[1], [0], [0], [1], [0, 0, 1, 1], [], []>} : vector<128x128xbf16>, vector<128x128xbf16>, vector<128x128xf32> -> vector<128x128xf32>
    %65 = arith.addf %59, %64 : vector<128x128xf32>
    %66 = vector.extract_strided_slice %4 {offsets = [18, 22, 0], sizes = [8, 16, 128], strides = [1, 1, 1]} : vector<32x48x128xbf16> to vector<8x16x128xbf16>
    %67 = vector.shape_cast %66 : vector<8x16x128xbf16> to vector<128x128xbf16>
    %c0_42 = arith.constant 0 : index
    %c8 = arith.constant 8 : index
    %c0_43 = arith.constant 0 : index
    %c0_44 = arith.constant 0 : index
    %68 = vector.load %arg4[%c0_42, %c8, %c0_43, %c0_44] : memref<3x9x128x128xbf16, #tpu.memory_space<vmem>>, vector<1x1x128x128xbf16>
    %69 = vector.shape_cast %68 : vector<1x1x128x128xbf16> to vector<128x128xbf16>
    %cst_45 = arith.constant dense<0.000000e+00> : vector<128x128xf32>
    %70 = tpu.matmul %67, %69, %cst_45 {dimension_numbers = #tpu.dot_dimension_numbers<[1], [0], [0], [1], [0, 0, 1, 1], [], []>} : vector<128x128xbf16>, vector<128x128xbf16>, vector<128x128xf32> -> vector<128x128xf32>
    %71 = arith.addf %65, %70 : vector<128x128xf32>
    %c1_46 = arith.constant 1 : index
    %c0_47 = arith.constant 0 : index
    %72 = vector.load %arg7[%c1_46, %c0_47] : memref<6x128xf32, #tpu.memory_space<vmem>>, vector<1x128xf32>
    %73 = vector.shape_cast %72 : vector<1x128xf32> to vector<128xf32>
    %74 = vector.shape_cast %73 : vector<128xf32> to vector<1x128xf32>
    %75 = vector.broadcast %74 : vector<1x128xf32> to vector<128x128xf32>
    %76 = arith.mulf %71, %75 : vector<128x128xf32>
    %c1_48 = arith.constant 1 : index
    %c0_49 = arith.constant 0 : index
    %77 = vector.load %arg8[%c1_48, %c0_49] : memref<6x128xf32, #tpu.memory_space<vmem>>, vector<1x128xf32>
    %78 = vector.shape_cast %77 : vector<1x128xf32> to vector<128xf32>
    %79 = vector.shape_cast %78 : vector<128xf32> to vector<1x128xf32>
    %80 = vector.broadcast %79 : vector<1x128xf32> to vector<128x128xf32>
    %81 = arith.addf %76, %80 : vector<128x128xf32>
    %cst_50 = arith.constant 0.000000e+00 : f32
    %82 = vector.broadcast %cst_50 : f32 to vector<128x128xf32>
    %83 = arith.maximumf %81, %82 : vector<128x128xf32>
    %c1_51 = arith.constant 1 : index
    %c4_52 = arith.constant 4 : index
    %c0_53 = arith.constant 0 : index
    %c0_54 = arith.constant 0 : index
    %84 = vector.load %arg4[%c1_51, %c4_52, %c0_53, %c0_54] : memref<3x9x128x128xbf16, #tpu.memory_space<vmem>>, vector<1x1x128x128xbf16>
    %85 = vector.shape_cast %84 : vector<1x1x128x128xbf16> to vector<128x128xbf16>
    %cst_55 = arith.constant dense<0.000000e+00> : vector<128x128xf32>
    %86 = tpu.matmul %6, %85, %cst_55 {dimension_numbers = #tpu.dot_dimension_numbers<[1], [0], [0], [1], [0, 0, 1, 1], [], []>} : vector<128x128xbf16>, vector<128x128xbf16>, vector<128x128xf32> -> vector<128x128xf32>
    %87 = vector.extract_strided_slice %4 {offsets = [0, 4, 0], sizes = [8, 16, 128], strides = [1, 1, 1]} : vector<32x48x128xbf16> to vector<8x16x128xbf16>
    %88 = vector.shape_cast %87 : vector<8x16x128xbf16> to vector<128x128xbf16>
    %c1_56 = arith.constant 1 : index
    %c0_57 = arith.constant 0 : index
    %c0_58 = arith.constant 0 : index
    %c0_59 = arith.constant 0 : index
    %89 = vector.load %arg4[%c1_56, %c0_57, %c0_58, %c0_59] : memref<3x9x128x128xbf16, #tpu.memory_space<vmem>>, vector<1x1x128x128xbf16>
    %90 = vector.shape_cast %89 : vector<1x1x128x128xbf16> to vector<128x128xbf16>
    %cst_60 = arith.constant dense<0.000000e+00> : vector<128x128xf32>
    %91 = tpu.matmul %88, %90, %cst_60 {dimension_numbers = #tpu.dot_dimension_numbers<[1], [0], [0], [1], [0, 0, 1, 1], [], []>} : vector<128x128xbf16>, vector<128x128xbf16>, vector<128x128xf32> -> vector<128x128xf32>
    %92 = arith.addf %86, %91 : vector<128x128xf32>
    %93 = vector.extract_strided_slice %4 {offsets = [0, 16, 0], sizes = [8, 16, 128], strides = [1, 1, 1]} : vector<32x48x128xbf16> to vector<8x16x128xbf16>
    %94 = vector.shape_cast %93 : vector<8x16x128xbf16> to vector<128x128xbf16>
    %c1_61 = arith.constant 1 : index
    %c1_62 = arith.constant 1 : index
    %c0_63 = arith.constant 0 : index
    %c0_64 = arith.constant 0 : index
    %95 = vector.load %arg4[%c1_61, %c1_62, %c0_63, %c0_64] : memref<3x9x128x128xbf16, #tpu.memory_space<vmem>>, vector<1x1x128x128xbf16>
    %96 = vector.shape_cast %95 : vector<1x1x128x128xbf16> to vector<128x128xbf16>
    %cst_65 = arith.constant dense<0.000000e+00> : vector<128x128xf32>
    %97 = tpu.matmul %94, %96, %cst_65 {dimension_numbers = #tpu.dot_dimension_numbers<[1], [0], [0], [1], [0, 0, 1, 1], [], []>} : vector<128x128xbf16>, vector<128x128xbf16>, vector<128x128xf32> -> vector<128x128xf32>
    %98 = arith.addf %92, %97 : vector<128x128xf32>
    %99 = vector.extract_strided_slice %4 {offsets = [0, 28, 0], sizes = [8, 16, 128], strides = [1, 1, 1]} : vector<32x48x128xbf16> to vector<8x16x128xbf16>
    %100 = vector.shape_cast %99 : vector<8x16x128xbf16> to vector<128x128xbf16>
    %c1_66 = arith.constant 1 : index
    %c2_67 = arith.constant 2 : index
    %c0_68 = arith.constant 0 : index
    %c0_69 = arith.constant 0 : index
    %101 = vector.load %arg4[%c1_66, %c2_67, %c0_68, %c0_69] : memref<3x9x128x128xbf16, #tpu.memory_space<vmem>>, vector<1x1x128x128xbf16>
    %102 = vector.shape_cast %101 : vector<1x1x128x128xbf16> to vector<128x128xbf16>
    %cst_70 = arith.constant dense<0.000000e+00> : vector<128x128xf32>
    %103 = tpu.matmul %100, %102, %cst_70 {dimension_numbers = #tpu.dot_dimension_numbers<[1], [0], [0], [1], [0, 0, 1, 1], [], []>} : vector<128x128xbf16>, vector<128x128xbf16>, vector<128x128xf32> -> vector<128x128xf32>
    %104 = arith.addf %98, %103 : vector<128x128xf32>
    %105 = vector.extract_strided_slice %4 {offsets = [12, 4, 0], sizes = [8, 16, 128], strides = [1, 1, 1]} : vector<32x48x128xbf16> to vector<8x16x128xbf16>
    %106 = vector.shape_cast %105 : vector<8x16x128xbf16> to vector<128x128xbf16>
    %c1_71 = arith.constant 1 : index
    %c3_72 = arith.constant 3 : index
    %c0_73 = arith.constant 0 : index
    %c0_74 = arith.constant 0 : index
    %107 = vector.load %arg4[%c1_71, %c3_72, %c0_73, %c0_74] : memref<3x9x128x128xbf16, #tpu.memory_space<vmem>>, vector<1x1x128x128xbf16>
    %108 = vector.shape_cast %107 : vector<1x1x128x128xbf16> to vector<128x128xbf16>
    %cst_75 = arith.constant dense<0.000000e+00> : vector<128x128xf32>
    %109 = tpu.matmul %106, %108, %cst_75 {dimension_numbers = #tpu.dot_dimension_numbers<[1], [0], [0], [1], [0, 0, 1, 1], [], []>} : vector<128x128xbf16>, vector<128x128xbf16>, vector<128x128xf32> -> vector<128x128xf32>
    %110 = arith.addf %104, %109 : vector<128x128xf32>
    %111 = vector.extract_strided_slice %4 {offsets = [12, 28, 0], sizes = [8, 16, 128], strides = [1, 1, 1]} : vector<32x48x128xbf16> to vector<8x16x128xbf16>
    %112 = vector.shape_cast %111 : vector<8x16x128xbf16> to vector<128x128xbf16>
    %c1_76 = arith.constant 1 : index
    %c5_77 = arith.constant 5 : index
    %c0_78 = arith.constant 0 : index
    %c0_79 = arith.constant 0 : index
    %113 = vector.load %arg4[%c1_76, %c5_77, %c0_78, %c0_79] : memref<3x9x128x128xbf16, #tpu.memory_space<vmem>>, vector<1x1x128x128xbf16>
    %114 = vector.shape_cast %113 : vector<1x1x128x128xbf16> to vector<128x128xbf16>
    %cst_80 = arith.constant dense<0.000000e+00> : vector<128x128xf32>
    %115 = tpu.matmul %112, %114, %cst_80 {dimension_numbers = #tpu.dot_dimension_numbers<[1], [0], [0], [1], [0, 0, 1, 1], [], []>} : vector<128x128xbf16>, vector<128x128xbf16>, vector<128x128xf32> -> vector<128x128xf32>
    %116 = arith.addf %110, %115 : vector<128x128xf32>
    %117 = vector.extract_strided_slice %4 {offsets = [24, 4, 0], sizes = [8, 16, 128], strides = [1, 1, 1]} : vector<32x48x128xbf16> to vector<8x16x128xbf16>
    %118 = vector.shape_cast %117 : vector<8x16x128xbf16> to vector<128x128xbf16>
    %c1_81 = arith.constant 1 : index
    %c6_82 = arith.constant 6 : index
    %c0_83 = arith.constant 0 : index
    %c0_84 = arith.constant 0 : index
    %119 = vector.load %arg4[%c1_81, %c6_82, %c0_83, %c0_84] : memref<3x9x128x128xbf16, #tpu.memory_space<vmem>>, vector<1x1x128x128xbf16>
    %120 = vector.shape_cast %119 : vector<1x1x128x128xbf16> to vector<128x128xbf16>
    %cst_85 = arith.constant dense<0.000000e+00> : vector<128x128xf32>
    %121 = tpu.matmul %118, %120, %cst_85 {dimension_numbers = #tpu.dot_dimension_numbers<[1], [0], [0], [1], [0, 0, 1, 1], [], []>} : vector<128x128xbf16>, vector<128x128xbf16>, vector<128x128xf32> -> vector<128x128xf32>
    %122 = arith.addf %116, %121 : vector<128x128xf32>
    %123 = vector.extract_strided_slice %4 {offsets = [24, 16, 0], sizes = [8, 16, 128], strides = [1, 1, 1]} : vector<32x48x128xbf16> to vector<8x16x128xbf16>
    %124 = vector.shape_cast %123 : vector<8x16x128xbf16> to vector<128x128xbf16>
    %c1_86 = arith.constant 1 : index
    %c7_87 = arith.constant 7 : index
    %c0_88 = arith.constant 0 : index
    %c0_89 = arith.constant 0 : index
    %125 = vector.load %arg4[%c1_86, %c7_87, %c0_88, %c0_89] : memref<3x9x128x128xbf16, #tpu.memory_space<vmem>>, vector<1x1x128x128xbf16>
    %126 = vector.shape_cast %125 : vector<1x1x128x128xbf16> to vector<128x128xbf16>
    %cst_90 = arith.constant dense<0.000000e+00> : vector<128x128xf32>
    %127 = tpu.matmul %124, %126, %cst_90 {dimension_numbers = #tpu.dot_dimension_numbers<[1], [0], [0], [1], [0, 0, 1, 1], [], []>} : vector<128x128xbf16>, vector<128x128xbf16>, vector<128x128xf32> -> vector<128x128xf32>
    %128 = arith.addf %122, %127 : vector<128x128xf32>
    %129 = vector.extract_strided_slice %4 {offsets = [24, 28, 0], sizes = [8, 16, 128], strides = [1, 1, 1]} : vector<32x48x128xbf16> to vector<8x16x128xbf16>
    %130 = vector.shape_cast %129 : vector<8x16x128xbf16> to vector<128x128xbf16>
    %c1_91 = arith.constant 1 : index
    %c8_92 = arith.constant 8 : index
    %c0_93 = arith.constant 0 : index
    %c0_94 = arith.constant 0 : index
    %131 = vector.load %arg4[%c1_91, %c8_92, %c0_93, %c0_94] : memref<3x9x128x128xbf16, #tpu.memory_space<vmem>>, vector<1x1x128x128xbf16>
    %132 = vector.shape_cast %131 : vector<1x1x128x128xbf16> to vector<128x128xbf16>
    %cst_95 = arith.constant dense<0.000000e+00> : vector<128x128xf32>
    %133 = tpu.matmul %130, %132, %cst_95 {dimension_numbers = #tpu.dot_dimension_numbers<[1], [0], [0], [1], [0, 0, 1, 1], [], []>} : vector<128x128xbf16>, vector<128x128xbf16>, vector<128x128xf32> -> vector<128x128xf32>
    %134 = arith.addf %128, %133 : vector<128x128xf32>
    %c2_96 = arith.constant 2 : index
    %c0_97 = arith.constant 0 : index
    %135 = vector.load %arg7[%c2_96, %c0_97] : memref<6x128xf32, #tpu.memory_space<vmem>>, vector<1x128xf32>
    %136 = vector.shape_cast %135 : vector<1x128xf32> to vector<128xf32>
    %137 = vector.shape_cast %136 : vector<128xf32> to vector<1x128xf32>
    %138 = vector.broadcast %137 : vector<1x128xf32> to vector<128x128xf32>
    %139 = arith.mulf %134, %138 : vector<128x128xf32>
    %c2_98 = arith.constant 2 : index
    %c0_99 = arith.constant 0 : index
    %140 = vector.load %arg8[%c2_98, %c0_99] : memref<6x128xf32, #tpu.memory_space<vmem>>, vector<1x128xf32>
    %141 = vector.shape_cast %140 : vector<1x128xf32> to vector<128xf32>
    %142 = vector.shape_cast %141 : vector<128xf32> to vector<1x128xf32>
    %143 = vector.broadcast %142 : vector<1x128xf32> to vector<128x128xf32>
    %144 = arith.addf %139, %143 : vector<128x128xf32>
    %cst_100 = arith.constant 0.000000e+00 : f32
    %145 = vector.broadcast %cst_100 : f32 to vector<128x128xf32>
    %146 = arith.maximumf %144, %145 : vector<128x128xf32>
    %c2_101 = arith.constant 2 : index
    %c4_102 = arith.constant 4 : index
    %c0_103 = arith.constant 0 : index
    %c0_104 = arith.constant 0 : index
    %147 = vector.load %arg4[%c2_101, %c4_102, %c0_103, %c0_104] : memref<3x9x128x128xbf16, #tpu.memory_space<vmem>>, vector<1x1x128x128xbf16>
    %148 = vector.shape_cast %147 : vector<1x1x128x128xbf16> to vector<128x128xbf16>
    %cst_105 = arith.constant dense<0.000000e+00> : vector<128x128xf32>
    %149 = tpu.matmul %6, %148, %cst_105 {dimension_numbers = #tpu.dot_dimension_numbers<[1], [0], [0], [1], [0, 0, 1, 1], [], []>} : vector<128x128xbf16>, vector<128x128xbf16>, vector<128x128xf32> -> vector<128x128xf32>
    %c3_106 = arith.constant 3 : index
    %c0_107 = arith.constant 0 : index
    %150 = vector.load %arg7[%c3_106, %c0_107] : memref<6x128xf32, #tpu.memory_space<vmem>>, vector<1x128xf32>
    %151 = vector.shape_cast %150 : vector<1x128xf32> to vector<128xf32>
    %152 = vector.shape_cast %151 : vector<128xf32> to vector<1x128xf32>
    %153 = vector.broadcast %152 : vector<1x128xf32> to vector<128x128xf32>
    %154 = arith.mulf %149, %153 : vector<128x128xf32>
    %c3_108 = arith.constant 3 : index
    %c0_109 = arith.constant 0 : index
    %155 = vector.load %arg8[%c3_108, %c0_109] : memref<6x128xf32, #tpu.memory_space<vmem>>, vector<1x128xf32>
    %156 = vector.shape_cast %155 : vector<1x128xf32> to vector<128xf32>
    %157 = vector.shape_cast %156 : vector<128xf32> to vector<1x128xf32>
    %158 = vector.broadcast %157 : vector<1x128xf32> to vector<128x128xf32>
    %159 = arith.addf %154, %158 : vector<128x128xf32>
    %cst_110 = arith.constant 0.000000e+00 : f32
    %160 = vector.broadcast %cst_110 : f32 to vector<128x128xf32>
    %161 = arith.maximumf %159, %160 : vector<128x128xf32>
    %162 = arith.truncf %20 : vector<128x128xf32> to vector<128x128xbf16>
    %163 = arith.truncf %83 : vector<128x128xf32> to vector<128x128xbf16>
    %164 = tpu.concatenate %162, %163 in 1 : vector<128x128xbf16>, vector<128x128xbf16> -> vector<128x256xbf16>
    %165 = arith.truncf %146 : vector<128x128xf32> to vector<128x128xbf16>
    %166 = arith.truncf %161 : vector<128x128xf32> to vector<128x128xbf16>
    %167 = tpu.concatenate %165, %166 in 1 : vector<128x128xbf16>, vector<128x128xbf16> -> vector<128x256xbf16>
    %c0_111 = arith.constant 0 : index
    %c0_112 = arith.constant 0 : index
    %c0_113 = arith.constant 0 : index
    %168 = vector.load %arg5[%c0_111, %c0_112, %c0_113] : memref<2x256x128xbf16, #tpu.memory_space<vmem>>, vector<1x256x128xbf16>
    %169 = vector.shape_cast %168 : vector<1x256x128xbf16> to vector<256x128xbf16>
    %cst_114 = arith.constant dense<0.000000e+00> : vector<128x128xf32>
    %170 = tpu.matmul %164, %169, %cst_114 {dimension_numbers = #tpu.dot_dimension_numbers<[1], [0], [0], [1], [0, 0, 1, 1], [], []>} : vector<128x256xbf16>, vector<256x128xbf16>, vector<128x128xf32> -> vector<128x128xf32>
    %c1_115 = arith.constant 1 : index
    %c0_116 = arith.constant 0 : index
    %c0_117 = arith.constant 0 : index
    %171 = vector.load %arg5[%c1_115, %c0_116, %c0_117] : memref<2x256x128xbf16, #tpu.memory_space<vmem>>, vector<1x256x128xbf16>
    %172 = vector.shape_cast %171 : vector<1x256x128xbf16> to vector<256x128xbf16>
    %cst_118 = arith.constant dense<0.000000e+00> : vector<128x128xf32>
    %173 = tpu.matmul %167, %172, %cst_118 {dimension_numbers = #tpu.dot_dimension_numbers<[1], [0], [0], [1], [0, 0, 1, 1], [], []>} : vector<128x256xbf16>, vector<256x128xbf16>, vector<128x128xf32> -> vector<128x128xf32>
    %174 = arith.addf %170, %173 : vector<128x128xf32>
    %c0_119 = arith.constant 0 : index
    %c0_120 = arith.constant 0 : index
    %c0_121 = arith.constant 0 : index
    %175 = vector.load %arg6[%c0_119, %c0_120, %c0_121] : memref<1x1x128xf32, #tpu.memory_space<vmem>>, vector<1x1x128xf32>
    %176 = vector.shape_cast %175 : vector<1x1x128xf32> to vector<1x128xf32>
    %177 = vector.broadcast %176 : vector<1x128xf32> to vector<128x128xf32>
    %178 = arith.addf %174, %177 : vector<128x128xf32>
    %c5_122 = arith.constant 5 : index
    %c0_123 = arith.constant 0 : index
    %179 = vector.load %arg7[%c5_122, %c0_123] : memref<6x128xf32, #tpu.memory_space<vmem>>, vector<1x128xf32>
    %180 = vector.shape_cast %179 : vector<1x128xf32> to vector<128xf32>
    %181 = vector.shape_cast %180 : vector<128xf32> to vector<1x128xf32>
    %182 = vector.broadcast %181 : vector<1x128xf32> to vector<128x128xf32>
    %183 = arith.mulf %178, %182 : vector<128x128xf32>
    %c5_124 = arith.constant 5 : index
    %c0_125 = arith.constant 0 : index
    %184 = vector.load %arg8[%c5_124, %c0_125] : memref<6x128xf32, #tpu.memory_space<vmem>>, vector<1x128xf32>
    %185 = vector.shape_cast %184 : vector<1x128xf32> to vector<128xf32>
    %186 = vector.shape_cast %185 : vector<128xf32> to vector<1x128xf32>
    %187 = vector.broadcast %186 : vector<1x128xf32> to vector<128x128xf32>
    %188 = arith.addf %183, %187 : vector<128x128xf32>
    %cst_126 = arith.constant 0.000000e+00 : f32
    %189 = vector.broadcast %cst_126 : f32 to vector<128x128xf32>
    %190 = arith.maximumf %188, %189 : vector<128x128xf32>
    %191 = vector.shape_cast %190 : vector<128x128xf32> to vector<1x8x16x128xf32>
    %c0_127 = arith.constant 0 : index
    %c0_128 = arith.constant 0 : index
    %c0_129 = arith.constant 0 : index
    %c0_130 = arith.constant 0 : index
    %192 = vector.load %arg9[%c0_127, %c0_128, %c0_129, %c0_130] : memref<1x8x16x128xf32, #tpu.memory_space<vmem>>, vector<1x8x16x128xf32>
    tpu.vector_store %arg9[%c0_127, %c0_128, %c0_129, %c0_130], %191 {strides = array<i32>} : memref<1x8x16x128xf32, #tpu.memory_space<vmem>>, vector<1x8x16x128xf32>,
    return
  }
  func.func @transform_0(%arg0: i32, %arg1: i32) -> (i32, i32, i32, i32) {
    %c0_i32 = arith.constant 0 : i32
    %c0_i32_0 = arith.constant 0 : i32
    %c0_i32_1 = arith.constant 0 : i32
    %c0_i32_2 = arith.constant 0 : i32
    return %arg0, %c0_i32, %c0_i32_0, %c0_i32_1 : i32, i32, i32, i32
  }
  func.func @transform_1(%arg0: i32, %arg1: i32) -> (i32, i32) {
    %c0_i32 = arith.constant 0 : i32
    %c0_i32_0 = arith.constant 0 : i32
    %c0_i32_1 = arith.constant 0 : i32
    return %c0_i32, %c0_i32_0 : i32, i32
  }
  func.func @transform_2(%arg0: i32, %arg1: i32) -> (i32, i32, i32, i32) {
    %c0_i32 = arith.constant 0 : i32
    %c0_i32_0 = arith.constant 0 : i32
    %c0_i32_1 = arith.constant 0 : i32
    %c0_i32_2 = arith.constant 0 : i32
    %c0_i32_3 = arith.constant 0 : i32
    return %c0_i32, %c0_i32_0, %c0_i32_1, %c0_i32_2 : i32, i32, i32, i32
  }
  func.func @transform_3(%arg0: i32, %arg1: i32) -> (i32, i32, i32) {
    %c0_i32 = arith.constant 0 : i32
    %c0_i32_0 = arith.constant 0 : i32
    %c0_i32_1 = arith.constant 0 : i32
    %c0_i32_2 = arith.constant 0 : i32
    return %c0_i32, %c0_i32_0, %c0_i32_1 : i32, i32, i32
  }
  func.func @transform_4(%arg0: i32, %arg1: i32) -> (i32, i32, i32) {
    %c0_i32 = arith.constant 0 : i32
    %c0_i32_0 = arith.constant 0 : i32
    %c0_i32_1 = arith.constant 0 : i32
    return %arg0, %c0_i32, %c0_i32_0 : i32, i32, i32
  }
  func.func @transform_5(%arg0: i32, %arg1: i32) -> (i32, i32) {
    %c0_i32 = arith.constant 0 : i32
    %c0_i32_0 = arith.constant 0 : i32
    %c0_i32_1 = arith.constant 0 : i32
    return %c0_i32, %c0_i32_0 : i32, i32
  }
  func.func @transform_6(%arg0: i32, %arg1: i32) -> (i32, i32) {
    %c0_i32 = arith.constant 0 : i32
    %c0_i32_0 = arith.constant 0 : i32
    %c0_i32_1 = arith.constant 0 : i32
    return %c0_i32, %c0_i32_0 : i32, i32
  }
  func.func @transform_7(%arg0: i32, %arg1: i32) -> (i32, i32, i32, i32) {
    %c0_i32 = arith.constant 0 : i32
    %c0_i32_0 = arith.constant 0 : i32
    %c0_i32_1 = arith.constant 0 : i32
    return %arg0, %arg1, %c0_i32, %c0_i32_0 : i32, i32, i32, i32
  }
}

</mosaic_0001>

<llo_original>
// kernel: tpu_custom_call.1
$region0: #{tpu_custom_call.1}
  #allocation0 [shape = 'u32[]', space=smem, size = 0x4, offset = 0x4, fixed_abs, tag = 'smem constant byte address 0x4 - core index']
  #allocation1 [shape = 'u32[144,128]{1,0:T(1,128)}', space=vmem, size = 0x12000, scoped, tag = 'internal scratch']
  %s0 = inlined_call_operand.hbm [shape: bf16[2,40,48,128], index: 0, kind: input, shape index: {}]
  %s1 = inlined_call_operand.hbm [shape: bf16[128,128], index: 1, kind: input, shape index: {}]
  %s2 = inlined_call_operand.hbm [shape: bf16[3,9,128,128], index: 2, kind: input, shape index: {}]
  %s3 = inlined_call_operand.hbm [shape: bf16[2,256,128], index: 3, kind: input, shape index: {}]
  %s4 = inlined_call_operand.hbm [shape: f32[2,1,128], index: 4, kind: input, shape index: {}]
  %s5 = inlined_call_operand.vmem [shape: f32[6,128], index: 5, kind: input, shape index: {}]
  %s6 = inlined_call_operand.hbm [shape: f32[6,128], index: 6, kind: input, shape index: {}]
  %s7 = inlined_call_operand.hbm [shape: f32[2,16,16,128], index: 7, kind: output, shape index: {}]
  %s8 = sld [smem:[#allocation0]]
  $region85: #{tpu_custom_call.1} parent=0
    _
  %s10 = ssub.s32 1, %s8
  %s11 = scalar_select 0, %s10, %s8
  $region1: #{tpu_custom_call.1} parent=0
    #allocation2 [shape = 'u8[983040]{0}', space=vmem, size = 0xf0000, scoped, tag = 'input window, operand 0']
    #allocation3 [shape = 's32[2]{0}', space=sflag, size = 0x8, scoped, tag = 'scoped memory for tpu_custom_call.1']
    #allocation4 [shape = 's32[2]{0}', space=sflag, size = 0x8, scoped, tag = 'scoped memory for tpu_custom_call.1']
    #allocation5 [shape = 'u8[32768]{0}', space=vmem, size = 0x8000, scoped, tag = 'input window, operand 1, single buffered']
    #allocation6 [shape = 's32[1]{0}', space=sflag, size = 0x4, scoped, tag = 'scoped memory for tpu_custom_call.1']
    #allocation7 [shape = 'u8[884736]{0}', space=vmem, size = 0xd8000, scoped, tag = 'input window, operand 2, single buffered']
    #allocation8 [shape = 'u8[131072]{0}', space=vmem, size = 0x20000, scoped, tag = 'input window, operand 3, single buffered']
    #allocation9 [shape = 's32[1]{0}', space=sflag, size = 0x4, scoped, tag = 'scoped memory for tpu_custom_call.1']
    #allocation10 [shape = 'u8[1024]{0}', space=vmem, size = 0x400, scoped, tag = 'input window, operand 4']
    #allocation11 [shape = 'u8[4096]{0}', space=vmem, size = 0x1000, scoped, tag = 'input window, operand 6, single buffered']
    #allocation12 [shape = 'u8[131072]{0}', space=vmem, size = 0x20000, scoped, tag = 'output window, operand 0']
    %12 = vsyncpa [#allocation3], 0
    %s13 = scalar_lea.sflag [#allocation3], 1
    %14 = vsyncpa %s13, 0
    %15 = vsyncpa [#allocation6], 0
    %16 = vsyncpa [#allocation9], 0
    %17 = vsyncpa [#allocation4], 0
    %s18 = scalar_lea.sflag [#allocation4], 1
    %19 = vsyncpa %s18, 0
    loop: start=0, step=1, limit=6
    $region2: #{tpu_custom_call.1} parent=1 // loop_pre_header
      _
    $region3: #{tpu_custom_call.1} parent=1 // loop_header
      %s21 = sphi 0, %s25
      %p22 = scmp.ge.s32.totalorder %s21, 6
      %s28 = sphi 0, %s40
      %s29 = sphi 0, %s36
      %s30 = sphi 0, %s28
      %s31 = sphi 0, %s29
      %s32 = sphi 0, %s30
      %s33 = sphi 0, %s31
      %s43 = sphi 0, %s45
      %s46 = sphi 0, %s43
      %s47 = sphi 0, %s46
      %s63 = sphi 0, %s47
      %s67 = sphi 0, %s67
      %s69 = sphi 0, %s67
      %s70 = sphi 0, %s69
      %s84 = sphi 0, %s70
      %s88 = sphi 0, %s88
      %s90 = sphi 0, %s88
      %s91 = sphi 0, %s90
      %s105 = sphi 0, %s91
      %s109 = sphi 0, %s109
      %s111 = sphi 0, %s109
      %s112 = sphi 0, %s111
      %s126 = sphi 0, %s112
      %s132 = sphi 0, %s134
      %s135 = sphi 0, %s132
      %s136 = sphi 0, %s135
      %s152 = sphi 0, %s136
      %s156 = sphi 0, %s156
      %s158 = sphi 0, %s156
      %s159 = sphi 0, %s158
      %s173 = sphi 0, %s159
      %s177 = sphi 0, %s177
      %s179 = sphi 0, %s177
      %s180 = sphi 0, %s179
      %s194 = sphi 0, %s180
      %s202 = sphi 0, %s204
      %s205 = sphi 0, %s202
      %s206 = sphi 0, %s205
      %s222 = sphi 0, %s206
    $region4: #{tpu_custom_call.1} parent=1 // loop_header_branch
      %24 = sbr.rel (%p22) target = $region8
    $region5: #{tpu_custom_call.1} parent=1 // loop_body
      %s26 = ssub.s32 %s21, 1
      %s27 = ssub.s32 %s21, 2
      %s34 = sadd.s32 1, %s29
      %p35 = scmp.ge.s32.totalorder %s34, 2
      %s36 = scalar_select %p35, 0, %s34
      %s37 = sadd.s32 1, %s28
      %s38 = scalar_select %p35, %s37, %s28
      %p39 = scmp.ge.s32.totalorder %s38, 2
      %s40 = scalar_select %p39, 0, %s38
      %s41 = ssub.s32 %s28, %s40
      %p42 = scmp.eq.s32.totalorder %s41, 0
      %s44 = sadd.s32 %s43, 1
      %s45 = scalar_select %p42, %s43, %s44
      %p48 = pneg %p42
      %p49 = scmp.eq.s32.totalorder %s21, 3
      %p50 = por %p48, %p49
      %p51 = scmp.ne.s32.totalorder %s43, %s46
      %p52 = scmp.eq.s32.totalorder %s21, 0
      %p53 = por %p51, %p52
      %p54 = scmp.ne.s32.totalorder %s43, %s46
      %p55 = scmp.eq.s32.totalorder %s26, 3
      %p56 = por %p54, %p55
      %p57 = scmp.ne.s32.totalorder %s46, %s47
      %p58 = scmp.eq.s32.totalorder %s26, 0
      %p59 = por %p57, %p58
      %p60 = scmp.ne.s32.totalorder %s46, %s47
      %p61 = scmp.eq.s32.totalorder %s27, 3
      %p62 = por %p60, %p61
      %p64 = scmp.ne.s32.totalorder %s47, %s63
      %p65 = scmp.eq.s32.totalorder %s27, 0
      %p66 = por %p64, %p65
      %s68 = sadd.s32 %s67, 1
      %p71 = scmp.eq.s32.totalorder %s21, 3
      %p72 = scmp.ne.s32.totalorder %s67, %s69
      %p73 = scmp.eq.s32.totalorder %s21, 0
      %p74 = por %p72, %p73
      %p75 = scmp.ne.s32.totalorder %s67, %s69
      %p76 = scmp.eq.s32.totalorder %s26, 3
      %p77 = por %p75, %p76
      %p78 = scmp.ne.s32.totalorder %s69, %s70
      %p79 = scmp.eq.s32.totalorder %s26, 0
      %p80 = por %p78, %p79
      %p81 = scmp.ne.s32.totalorder %s69, %s70
      %p82 = scmp.eq.s32.totalorder %s27, 3
      %p83 = por %p81, %p82
      %p85 = scmp.ne.s32.totalorder %s70, %s84
      %p86 = scmp.eq.s32.totalorder %s27, 0
      %p87 = por %p85, %p86
      %s89 = sadd.s32 %s88, 1
      %p92 = scmp.eq.s32.totalorder %s21, 3
      %p93 = scmp.ne.s32.totalorder %s88, %s90
      %p94 = scmp.eq.s32.totalorder %s21, 0
      %p95 = por %p93, %p94
      %p96 = scmp.ne.s32.totalorder %s88, %s90
      %p97 = scmp.eq.s32.totalorder %s26, 3
      %p98 = por %p96, %p97
      %p99 = scmp.ne.s32.totalorder %s90, %s91
      %p100 = scmp.eq.s32.totalorder %s26, 0
      %p101 = por %p99, %p100
      %p102 = scmp.ne.s32.totalorder %s90, %s91
      %p103 = scmp.eq.s32.totalorder %s27, 3
      %p104 = por %p102, %p103
      %p106 = scmp.ne.s32.totalorder %s91, %s105
      %p107 = scmp.eq.s32.totalorder %s27, 0
      %p108 = por %p106, %p107
      %s110 = sadd.s32 %s109, 1
      %p113 = scmp.eq.s32.totalorder %s21, 3
      %p114 = scmp.ne.s32.totalorder %s109, %s111
      %p115 = scmp.eq.s32.totalorder %s21, 0
      %p116 = por %p114, %p115
      %p117 = scmp.ne.s32.totalorder %s109, %s111
      %p118 = scmp.eq.s32.totalorder %s26, 3
      %p119 = por %p117, %p118
      %p120 = scmp.ne.s32.totalorder %s111, %s112
      %p121 = scmp.eq.s32.totalorder %s26, 0
      %p122 = por %p120, %p121
      %p123 = scmp.ne.s32.totalorder %s111, %s112
      %p124 = scmp.eq.s32.totalorder %s27, 3
      %p125 = por %p123, %p124
      %p127 = scmp.ne.s32.totalorder %s112, %s126
      %p128 = scmp.eq.s32.totalorder %s27, 0
      %p129 = por %p127, %p128
      %s130 = ssub.s32 %s28, %s40
      %p131 = scmp.eq.s32.totalorder %s130, 0
      %s133 = sadd.s32 %s132, 1
      %s134 = scalar_select %p131, %s132, %s133
      %p137 = pneg %p131
      %p138 = scmp.eq.s32.totalorder %s21, 3
      %p139 = por %p137, %p138
      %p140 = scmp.ne.s32.totalorder %s132, %s135
      %p141 = scmp.eq.s32.totalorder %s21, 0
      %p142 = por %p140, %p141
      %p143 = scmp.ne.s32.totalorder %s132, %s135
      %p144 = scmp.eq.s32.totalorder %s26, 3
      %p145 = por %p143, %p144
      %p146 = scmp.ne.s32.totalorder %s135, %s136
      %p147 = scmp.eq.s32.totalorder %s26, 0
      %p148 = por %p146, %p147
      %p149 = scmp.ne.s32.totalorder %s135, %s136
      %p150 = scmp.eq.s32.totalorder %s27, 3
      %p151 = por %p149, %p150
      %p153 = scmp.ne.s32.totalorder %s136, %s152
      %p154 = scmp.eq.s32.totalorder %s27, 0
      %p155 = por %p153, %p154
      %s157 = sadd.s32 %s156, 1
      %p160 = scmp.eq.s32.totalorder %s21, 3
      %p161 = scmp.ne.s32.totalorder %s156, %s158
      %p162 = scmp.eq.s32.totalorder %s21, 0
      %p163 = por %p161, %p162
      %p164 = scmp.ne.s32.totalorder %s156, %s158
      %p165 = scmp.eq.s32.totalorder %s26, 3
      %p166 = por %p164, %p165
      %p167 = scmp.ne.s32.totalorder %s158, %s159
      %p168 = scmp.eq.s32.totalorder %s26, 0
      %p169 = por %p167, %p168
      %p170 = scmp.ne.s32.totalorder %s158, %s159
      %p171 = scmp.eq.s32.totalorder %s27, 3
      %p172 = por %p170, %p171
      %p174 = scmp.ne.s32.totalorder %s159, %s173
      %p175 = scmp.eq.s32.totalorder %s27, 0
      %p176 = por %p174, %p175
      %s178 = sadd.s32 %s177, 1
      %p181 = scmp.eq.s32.totalorder %s21, 3
      %p182 = scmp.ne.s32.totalorder %s177, %s179
      %p183 = scmp.eq.s32.totalorder %s21, 0
      %p184 = por %p182, %p183
      %p185 = scmp.ne.s32.totalorder %s177, %s179
      %p186 = scmp.eq.s32.totalorder %s26, 3
      %p187 = por %p185, %p186
      %p188 = scmp.ne.s32.totalorder %s179, %s180
      %p189 = scmp.eq.s32.totalorder %s26, 0
      %p190 = por %p188, %p189
      %p191 = scmp.ne.s32.totalorder %s179, %s180
      %p192 = scmp.eq.s32.totalorder %s27, 3
      %p193 = por %p191, %p192
      %p195 = scmp.ne.s32.totalorder %s180, %s194
      %p196 = scmp.eq.s32.totalorder %s27, 0
      %p197 = por %p195, %p196
      %s198 = ssub.s32 %s28, %s40
      %s199 = ssub.s32 %s29, %s36
      %s200 = sor.u32 %s198, %s199
      %p201 = scmp.eq.s32.totalorder %s200, 0
      %s203 = sadd.s32 %s202, 1
      %s204 = scalar_select %p201, %s202, %s203
      %p207 = pneg %p201
      %p208 = scmp.eq.s32.totalorder %s21, 3
      %p209 = por %p207, %p208
      %p210 = scmp.ne.s32.totalorder %s202, %s205
      %p211 = scmp.eq.s32.totalorder %s21, 0
      %p212 = por %p210, %p211
      %p213 = scmp.ne.s32.totalorder %s202, %s205
      %p214 = scmp.eq.s32.totalorder %s26, 3
      %p215 = por %p213, %p214
      %p216 = scmp.ne.s32.totalorder %s205, %s206
      %p217 = scmp.eq.s32.totalorder %s26, 0
      %p218 = por %p216, %p217
      %p219 = scmp.ne.s32.totalorder %s205, %s206
      %p220 = scmp.eq.s32.totalorder %s27, 3
      %p221 = por %p219, %p220
      %p223 = scmp.ne.s32.totalorder %s206, %s222
      %p224 = scmp.eq.s32.totalorder %s27, 0
      %p225 = por %p223, %p224
      %p226 = scmp.le.s32.totalorder 1, %s21
      %p227 = scmp.lt.s32.totalorder %s21, 5
      %p228 = pnand %p226, %p227
      %p229 = pneg %p228
      // Predicated region
      $region9: #{tpu_custom_call.1} parent=5 // pred_check
        _
      $region10: #{tpu_custom_call.1} parent=5 // pred_check_branch
        %231 = sbr.rel (%p228) target = $region12
      $region11: #{tpu_custom_call.1} parent=5 // pred_region
        %s232 = ssub.s32 %s21, 1
        // Predicated region
        $region13: #{tpu_custom_call.1} parent=11 // pred_check
          %p233 = pneg %p80
        $region14: #{tpu_custom_call.1} parent=11 // pred_check_branch
          %235 = sbr.rel (%p233) target = $region16
        $region15: #{tpu_custom_call.1} parent=11 // pred_region
          %s237 = ssub.s32 1024, 1024
          %238 = vsyncadd [#allocation6], %s237
          %s239 = sshll.u32 [#allocation5], 4
          %s240 = int_to_ptr.vmem [resolvable:$true] %s239
          %245 = dma.hbm_to_vmem [thread:$0]  %s1, 1024, %s240, [#allocation6], 64, 64, 4
        $region16: #{tpu_custom_call.1} parent=11 // pred_fallthru
          _
        // Predicated region
        $region17: #{tpu_custom_call.1} parent=11 // pred_check
          %p246 = pneg %p101
        $region18: #{tpu_custom_call.1} parent=11 // pred_check_branch
          %248 = sbr.rel (%p246) target = $region20
        $region19: #{tpu_custom_call.1} parent=11 // pred_region
          %s250 = ssub.s32 27648, 27648
          %251 = vsyncadd [#allocation6], %s250
          %s252 = sshll.u32 [#allocation7], 4
          %s253 = int_to_ptr.vmem [resolvable:$true] %s252
          %258 = dma.hbm_to_vmem [thread:$0]  %s2, 27648, %s253, [#allocation6], 64, 64, 4
        $region20: #{tpu_custom_call.1} parent=11 // pred_fallthru
          _
        // Predicated region
        $region21: #{tpu_custom_call.1} parent=11 // pred_check
          %p259 = pneg %p122
        $region22: #{tpu_custom_call.1} parent=11 // pred_check_branch
          %261 = sbr.rel (%p259) target = $region24
        $region23: #{tpu_custom_call.1} parent=11 // pred_region
          %s263 = ssub.s32 4096, 4096
          %264 = vsyncadd [#allocation9], %s263
          %s265 = sshll.u32 [#allocation8], 4
          %s266 = int_to_ptr.vmem [resolvable:$true] %s265
          %271 = dma.hbm_to_vmem [thread:$0]  %s3, 4096, %s266, [#allocation9], 64, 64, 4
        $region24: #{tpu_custom_call.1} parent=11 // pred_fallthru
          _
        // Predicated region
        $region25: #{tpu_custom_call.1} parent=11 // pred_check
          %p272 = pneg %p169
        $region26: #{tpu_custom_call.1} parent=11 // pred_check_branch
          %274 = sbr.rel (%p272) target = $region28
        $region27: #{tpu_custom_call.1} parent=11 // pred_region
          _
        $region28: #{tpu_custom_call.1} parent=11 // pred_fallthru
          _
        // Predicated region
        $region29: #{tpu_custom_call.1} parent=11 // pred_check
          %p275 = pneg %p190
        $region30: #{tpu_custom_call.1} parent=11 // pred_check_branch
          %277 = sbr.rel (%p275) target = $region32
        $region31: #{tpu_custom_call.1} parent=11 // pred_region
          %s279 = ssub.s32 128, 128
          %280 = vsyncadd [#allocation6], %s279
          %s282 = sshll.u32 [#allocation11], 4
          %s283 = int_to_ptr.vmem [resolvable:$true] %s282
          %285 = dma.hbm_to_vmem [thread:$0]  %s6, 128, %s283, [#allocation6]
        $region32: #{tpu_custom_call.1} parent=11 // pred_fallthru
          _
      $region12: #{tpu_custom_call.1} parent=5 // pred_fallthru
        _
      %p286 = scmp.lt.s32.totalorder %s21, 4
      // Predicated region
      $region33: #{tpu_custom_call.1} parent=5 // pred_check
        %p287 = pneg %p286
      $region34: #{tpu_custom_call.1} parent=5 // pred_check_branch
        %289 = sbr.rel (%p287) target = $region36
      $region35: #{tpu_custom_call.1} parent=5 // pred_region
        // Predicated region
        $region37: #{tpu_custom_call.1} parent=35 // pred_check
          %p290 = pneg %p53
        $region38: #{tpu_custom_call.1} parent=35 // pred_check_branch
          %292 = sbr.rel (%p290) target = $region40
        $region39: #{tpu_custom_call.1} parent=35 // pred_region
          %s293 = sand.u32 %s21, 1
          %s294 = scalar_lea.sflag [#allocation3], %s293
          %s295 = sand.u32 %s43, 1
          %s296 = smul.addr %s295, 960
          %s297 = scalar_lea.vmem [#allocation2], %s296
          %s299 = ssub.s32 15360, 15360
          %300 = vsyncadd %s294, %s299
          %s301 = smul.addr %s28, 240
          %s302 = smul.addr %s301, 64
          %s303 = scalar_lea.hbm %s0, %s302
          %s304 = sshll.u32 %s297, 4
          %s305 = int_to_ptr.vmem [resolvable:$true] %s304
          %310 = dma.hbm_to_vmem [thread:$0]  %s303, 15360, %s305, %s294, 64, 64, 4
        $region40: #{tpu_custom_call.1} parent=35 // pred_fallthru
          _
        // Predicated region
        $region41: #{tpu_custom_call.1} parent=35 // pred_check
          %p311 = pneg %p142
        $region42: #{tpu_custom_call.1} parent=35 // pred_check_branch
          %313 = sbr.rel (%p311) target = $region44
        $region43: #{tpu_custom_call.1} parent=35 // pred_region
          %s314 = sand.u32 %s21, 1
          %s315 = scalar_lea.sflag [#allocation3], %s314
          %s316 = sand.u32 %s132, 1
          %s317 = scalar_lea.vmem [#allocation10], %s316
          %s319 = ssub.s32 16, 16
          %320 = vsyncadd %s315, %s319
          %s321 = smul.addr %s28, 16
          %s322 = scalar_lea.hbm %s4, %s321
          %s324 = sshll.u32 %s317, 4
          %s325 = int_to_ptr.vmem [resolvable:$true] %s324
          %327 = dma.hbm_to_vmem [thread:$0]  %s322, 16, %s325, %s315
        $region44: #{tpu_custom_call.1} parent=35 // pred_fallthru
          _
      $region36: #{tpu_custom_call.1} parent=5 // pred_fallthru
        _
      %p328 = scmp.le.s32.totalorder 1, %s21
      %p329 = scmp.lt.s32.totalorder %s21, 5
      %p330 = pnand %p328, %p329
      %p331 = pneg %p330
      // Predicated region
      $region45: #{tpu_custom_call.1} parent=5 // pred_check
        _
      $region46: #{tpu_custom_call.1} parent=5 // pred_check_branch
        %333 = sbr.rel (%p330) target = $region48
      $region47: #{tpu_custom_call.1} parent=5 // pred_region
        %s334 = ssub.s32 %s21, 1
        %s335 = sand.u32 %s26, 1
        %s336 = scalar_lea.sflag [#allocation3], %s335
        %s337 = sand.u32 %s46, 1
        %s338 = smul.addr %s337, 960
        %s339 = scalar_lea.vmem [#allocation2], %s338
        // Predicated region
        $region49: #{tpu_custom_call.1} parent=47 // pred_check
          %p340 = pneg %p59
        $region50: #{tpu_custom_call.1} parent=47 // pred_check_branch
          %342 = sbr.rel (%p340) target = $region52
        $region51: #{tpu_custom_call.1} parent=47 // pred_region
          %343 = dma.done %s336, 15360
        $region52: #{tpu_custom_call.1} parent=47 // pred_fallthru
          _
        // Predicated region
        $region53: #{tpu_custom_call.1} parent=47 // pred_check
          %p344 = pneg %p80
        $region54: #{tpu_custom_call.1} parent=47 // pred_check_branch
          %346 = sbr.rel (%p344) target = $region56
        $region55: #{tpu_custom_call.1} parent=47 // pred_region
          %347 = dma.done [#allocation6], 1024
        $region56: #{tpu_custom_call.1} parent=47 // pred_fallthru
          _
        // Predicated region
        $region57: #{tpu_custom_call.1} parent=47 // pred_check
          %p348 = pneg %p101
        $region58: #{tpu_custom_call.1} parent=47 // pred_check_branch
          %350 = sbr.rel (%p348) target = $region60
        $region59: #{tpu_custom_call.1} parent=47 // pred_region
          %351 = dma.done [#allocation6], 27648
        $region60: #{tpu_custom_call.1} parent=47 // pred_fallthru
          _
        // Predicated region
        $region61: #{tpu_custom_call.1} parent=47 // pred_check
          %p352 = pneg %p122
        $region62: #{tpu_custom_call.1} parent=47 // pred_check_branch
          %354 = sbr.rel (%p352) target = $region64
        $region63: #{tpu_custom_call.1} parent=47 // pred_region
          %355 = dma.done [#allocation9], 4096
        $region64: #{tpu_custom_call.1} parent=47 // pred_fallthru
          _
        %s356 = sand.u32 %s26, 1
        %s357 = scalar_lea.sflag [#allocation3], %s356
        %s358 = sand.u32 %s135, 1
        %s359 = scalar_lea.vmem [#allocation10], %s358
        // Predicated region
        $region65: #{tpu_custom_call.1} parent=47 // pred_check
          %p360 = pneg %p148
        $region66: #{tpu_custom_call.1} parent=47 // pred_check_branch
          %362 = sbr.rel (%p360) target = $region68
        $region67: #{tpu_custom_call.1} parent=47 // pred_region
          %363 = dma.done %s357, 16
        $region68: #{tpu_custom_call.1} parent=47 // pred_fallthru
          _
        // Predicated region
        $region69: #{tpu_custom_call.1} parent=47 // pred_check
          %p364 = pneg %p190
        $region70: #{tpu_custom_call.1} parent=47 // pred_check_branch
          %366 = sbr.rel (%p364) target = $region72
        $region71: #{tpu_custom_call.1} parent=47 // pred_region
          %367 = dma.done [#allocation6], 128
        $region72: #{tpu_custom_call.1} parent=47 // pred_fallthru
          _
        %s368 = sand.u32 %s26, 1
        %s369 = scalar_lea.sflag [#allocation3], %s368
        %s370 = sand.u32 %s46, 1
        %s371 = smul.addr %s370, 960
        %s372 = scalar_lea.vmem [#allocation2], %s371
        %p373 = pneg %p59
        %p374 = pneg %p56
        %p375 = pneg %p80
        %p376 = pneg %p77
        %p377 = pneg %p101
        %p378 = pneg %p98
        %p379 = pneg %p122
        %p380 = pneg %p119
        %s381 = sand.u32 %s26, 1
        %s382 = scalar_lea.sflag [#allocation3], %s381
        %s383 = sand.u32 %s135, 1
        %s384 = scalar_lea.vmem [#allocation10], %s383
        %p385 = pneg %p148
        %p386 = pneg %p145
        %p387 = pneg %p169
        %p388 = pneg %p166
        %p389 = pneg %p190
        %p390 = pneg %p187
        %p391 = pneg %p218
        %p392 = pneg %p215
        %s393 = sand.u32 %s205, 1
        %s394 = scalar_lea.sflag [#allocation4], %s393
        %s395 = sand.u32 %s205, 1
        %s396 = smul.addr %s395, 128
        %s397 = scalar_lea.vmem [#allocation12], %s396
        %s398 = smul.u32 8, %s31
        %s400 = smul.u32 %s31, 8
        %s401 = smul.u32 %s400, 6
        %s402 = smul.addr %s401, 4
        %s403 = scalar_lea.vmem %s339, %s402 [#allocation2]
        %v404 = vld [vmem:[%s403] sm:$0xf]
        %v405 = vld [vmem:[%s403 + $0x4] sm:$0xf]
        %v406 = vld [vmem:[%s403 + $0x8] sm:$0xf]
        %v407 = vld [vmem:[%s403 + $0xc] sm:$0xf]
        %v408 = vld [vmem:[%s403 + $0x10] sm:$0xf]
        %v409 = vld [vmem:[%s403 + $0x14] sm:$0xf]
        %v410 = vld [vmem:[%s403 + $0x18] sm:$0xf]
        %v411 = vld [vmem:[%s403 + $0x1c] sm:$0xf]
        %v412 = vld [vmem:[%s403 + $0x20] sm:$0xf]
        %v413 = vld [vmem:[%s403 + $0x24] sm:$0xf]
        %v414 = vld [vmem:[%s403 + $0x28] sm:$0xf]
        %v415 = vld [vmem:[%s403 + $0x2c] sm:$0xf]
        %v416 = vld [vmem:[%s403 + $0x30] sm:$0xf]
        %v417 = vld [vmem:[%s403 + $0x34] sm:$0xf]
        %v418 = vld [vmem:[%s403 + $0x38] sm:$0xf]
        %v419 = vld [vmem:[%s403 + $0x3c] sm:$0xf]
        %v420 = vld [vmem:[%s403 + $0x40] sm:$0xf]
        %v421 = vld [vmem:[%s403 + $0x44] sm:$0xf]
        %v422 = vld [vmem:[%s403 + $0x48] sm:$0xf]
        %v423 = vld [vmem:[%s403 + $0x4c] sm:$0xf]
        %v424 = vld [vmem:[%s403 + $0x50] sm:$0xf]
        %v425 = vld [vmem:[%s403 + $0x54] sm:$0xf]
        %v426 = vld [vmem:[%s403 + $0x58] sm:$0xf]
        %v427 = vld [vmem:[%s403 + $0x5c] sm:$0xf]
        %v428 = vld [vmem:[%s403 + $0x60] sm:$0xf]
        %v429 = vld [vmem:[%s403 + $0x64] sm:$0xf]
        %v430 = vld [vmem:[%s403 + $0x68] sm:$0xf]
        %v431 = vld [vmem:[%s403 + $0x6c] sm:$0xf]
        %v432 = vld [vmem:[%s403 + $0x70] sm:$0xf]
        %v433 = vld [vmem:[%s403 + $0x74] sm:$0xf]
        %v434 = vld [vmem:[%s403 + $0x78] sm:$0xf]
        %v435 = vld [vmem:[%s403 + $0x7c] sm:$0xf]
        %v436 = vld [vmem:[%s403 + $0x80] sm:$0xf]
        %v437 = vld [vmem:[%s403 + $0x84] sm:$0xf]
        %v438 = vld [vmem:[%s403 + $0x88] sm:$0xf]
        %v439 = vld [vmem:[%s403 + $0x8c] sm:$0xf]
        %v440 = vld [vmem:[%s403 + $0x90] sm:$0xf]
        %v441 = vld [vmem:[%s403 + $0x94] sm:$0xf]
        %v442 = vld [vmem:[%s403 + $0x98] sm:$0xf]
        %v443 = vld [vmem:[%s403 + $0x9c] sm:$0xf]
        %v444 = vld [vmem:[%s403 + $0xa0] sm:$0xf]
        %v445 = vld [vmem:[%s403 + $0xa4] sm:$0xf]
        %v446 = vld [vmem:[%s403 + $0xa8] sm:$0xf]
        %v447 = vld [vmem:[%s403 + $0xac] sm:$0xf]
        %v448 = vld [vmem:[%s403 + $0xb0] sm:$0xf]
        %v449 = vld [vmem:[%s403 + $0xb4] sm:$0xf]
        %v450 = vld [vmem:[%s403 + $0xb8] sm:$0xf]
        %v451 = vld [vmem:[%s403 + $0xbc] sm:$0xf]
        %v452 = vld [vmem:[%s403 + $0xc4] sm:$0xf]
        %v453 = vld [vmem:[%s403 + $0xc8] sm:$0xf]
        %v454 = vld [vmem:[%s403 + $0xcc] sm:$0xf]
        %v455 = vld [vmem:[%s403 + $0xd0] sm:$0xf]
        %v456 = vld [vmem:[%s403 + $0xdc] sm:$0xf]
        %v457 = vld [vmem:[%s403 + $0xe0] sm:$0xf]
        %v458 = vld [vmem:[%s403 + $0xe4] sm:$0xf]
        %v459 = vld [vmem:[%s403 + $0xe8] sm:$0xf]
        %v460 = vld [vmem:[%s403 + $0xf4] sm:$0xf]
        %v461 = vld [vmem:[%s403 + $0xf8] sm:$0xf]
        %v462 = vld [vmem:[%s403 + $0xfc] sm:$0xf]
        %v463 = vld [vmem:[%s403 + $0x100] sm:$0xf]
        %v464 = vld [vmem:[%s403 + $0x10c] sm:$0xf]
        %v465 = vld [vmem:[%s403 + $0x110] sm:$0xf]
        %v466 = vld [vmem:[%s403 + $0x114] sm:$0xf]
        %v467 = vld [vmem:[%s403 + $0x118] sm:$0xf]
        %v468 = vld [vmem:[%s403 + $0x120] sm:$0xf]
        %v469 = vld [vmem:[%s403 + $0x124] sm:$0xf]
        %v470 = vld [vmem:[%s403 + $0x128] sm:$0xf]
        %v471 = vld [vmem:[%s403 + $0x12c] sm:$0xf]
        %v472 = vld [vmem:[%s403 + $0x130] sm:$0xf]
        %v473 = vld [vmem:[%s403 + $0x134] sm:$0xf]
        %v474 = vld [vmem:[%s403 + $0x138] sm:$0xf]
        %v475 = vld [vmem:[%s403 + $0x13c] sm:$0xf]
        %v476 = vld [vmem:[%s403 + $0x140] sm:$0xf]
        %v477 = vld [vmem:[%s403 + $0x144] sm:$0xf]
        %v478 = vld [vmem:[%s403 + $0x148] sm:$0xf]
        %v479 = vld [vmem:[%s403 + $0x14c] sm:$0xf]
        %v480 = vld [vmem:[%s403 + $0x150] sm:$0xf]
        %v481 = vld [vmem:[%s403 + $0x154] sm:$0xf]
        %v482 = vld [vmem:[%s403 + $0x158] sm:$0xf]
        %v483 = vld [vmem:[%s403 + $0x15c] sm:$0xf]
        %v484 = vld [vmem:[%s403 + $0x160] sm:$0xf]
        %v485 = vld [vmem:[%s403 + $0x164] sm:$0xf]
        %v486 = vld [vmem:[%s403 + $0x168] sm:$0xf]
        %v487 = vld [vmem:[%s403 + $0x16c] sm:$0xf]
        %v488 = vld [vmem:[%s403 + $0x170] sm:$0xf]
        %v489 = vld [vmem:[%s403 + $0x174] sm:$0xf]
        %v490 = vld [vmem:[%s403 + $0x178] sm:$0xf]
        %v491 = vld [vmem:[%s403 + $0x17c] sm:$0xf]
        %v492 = vld [vmem:[%s403 + $0x180] sm:$0xf]
        %v493 = vld [vmem:[%s403 + $0x184] sm:$0xf]
        %v494 = vld [vmem:[%s403 + $0x188] sm:$0xf]
        %v495 = vld [vmem:[%s403 + $0x18c] sm:$0xf]
        %v496 = vld [vmem:[%s403 + $0x190] sm:$0xf]
        %v497 = vld [vmem:[%s403 + $0x194] sm:$0xf]
        %v498 = vld [vmem:[%s403 + $0x198] sm:$0xf]
        %v499 = vld [vmem:[%s403 + $0x19c] sm:$0xf]
        %v500 = vld [vmem:[%s403 + $0x1a0] sm:$0xf]
        %v501 = vld [vmem:[%s403 + $0x1a4] sm:$0xf]
        %v502 = vld [vmem:[%s403 + $0x1a8] sm:$0xf]
        %v503 = vld [vmem:[%s403 + $0x1ac] sm:$0xf]
        %v504 = vld [vmem:[%s403 + $0x1b0] sm:$0xf]
        %v505 = vld [vmem:[%s403 + $0x1b4] sm:$0xf]
        %v506 = vld [vmem:[%s403 + $0x1b8] sm:$0xf]
        %v507 = vld [vmem:[%s403 + $0x1bc] sm:$0xf]
        %v508 = vld [vmem:[%s403 + $0x1c0] sm:$0xf]
        %v509 = vld [vmem:[%s403 + $0x1c4] sm:$0xf]
        %v510 = vld [vmem:[%s403 + $0x1c8] sm:$0xf]
        %v511 = vld [vmem:[%s403 + $0x1cc] sm:$0xf]
        %v512 = vld [vmem:[%s403 + $0x1d0] sm:$0xf]
        %v513 = vld [vmem:[%s403 + $0x1d4] sm:$0xf]
        %v514 = vld [vmem:[%s403 + $0x1d8] sm:$0xf]
        %v515 = vld [vmem:[%s403 + $0x1dc] sm:$0xf]
        %v516 = vld [vmem:[%s403 + $0x1e4] sm:$0xf]
        %v517 = vld [vmem:[%s403 + $0x1e8] sm:$0xf]
        %v518 = vld [vmem:[%s403 + $0x1ec] sm:$0xf]
        %v519 = vld [vmem:[%s403 + $0x1f0] sm:$0xf]
        %v520 = vld [vmem:[%s403 + $0x1fc] sm:$0xf]
        %v521 = vld [vmem:[%s403 + $0x200] sm:$0xf]
        %v522 = vld [vmem:[%s403 + $0x204] sm:$0xf]
        %v523 = vld [vmem:[%s403 + $0x208] sm:$0xf]
        %v524 = vld [vmem:[%s403 + $0x214] sm:$0xf]
        %v525 = vld [vmem:[%s403 + $0x218] sm:$0xf]
        %v526 = vld [vmem:[%s403 + $0x21c] sm:$0xf]
        %v527 = vld [vmem:[%s403 + $0x220] sm:$0xf]
        %v528 = vld [vmem:[%s403 + $0x22c] sm:$0xf]
        %v529 = vld [vmem:[%s403 + $0x230] sm:$0xf]
        %v530 = vld [vmem:[%s403 + $0x234] sm:$0xf]
        %v531 = vld [vmem:[%s403 + $0x238] sm:$0xf]
        %v532 = vld [vmem:[%s403 + $0x240] sm:$0xf]
        %v533 = vld [vmem:[%s403 + $0x244] sm:$0xf]
        %v534 = vld [vmem:[%s403 + $0x248] sm:$0xf]
        %v535 = vld [vmem:[%s403 + $0x24c] sm:$0xf]
        %v536 = vld [vmem:[%s403 + $0x250] sm:$0xf]
        %v537 = vld [vmem:[%s403 + $0x254] sm:$0xf]
        %v538 = vld [vmem:[%s403 + $0x258] sm:$0xf]
        %v539 = vld [vmem:[%s403 + $0x25c] sm:$0xf]
        %v540 = vld [vmem:[%s403 + $0x260] sm:$0xf]
        %v541 = vld [vmem:[%s403 + $0x264] sm:$0xf]
        %v542 = vld [vmem:[%s403 + $0x268] sm:$0xf]
        %v543 = vld [vmem:[%s403 + $0x26c] sm:$0xf]
        %v544 = vld [vmem:[%s403 + $0x270] sm:$0xf]
        %v545 = vld [vmem:[%s403 + $0x274] sm:$0xf]
        %v546 = vld [vmem:[%s403 + $0x278] sm:$0xf]
        %v547 = vld [vmem:[%s403 + $0x27c] sm:$0xf]
        %v548 = vld [vmem:[%s403 + $0x280] sm:$0xf]
        %v549 = vld [vmem:[%s403 + $0x284] sm:$0xf]
        %v550 = vld [vmem:[%s403 + $0x288] sm:$0xf]
        %v551 = vld [vmem:[%s403 + $0x28c] sm:$0xf]
        %v552 = vld [vmem:[%s403 + $0x290] sm:$0xf]
        %v553 = vld [vmem:[%s403 + $0x294] sm:$0xf]
        %v554 = vld [vmem:[%s403 + $0x298] sm:$0xf]
        %v555 = vld [vmem:[%s403 + $0x29c] sm:$0xf]
        %v556 = vld [vmem:[%s403 + $0x2a0] sm:$0xf]
        %v557 = vld [vmem:[%s403 + $0x2a4] sm:$0xf]
        %v558 = vld [vmem:[%s403 + $0x2a8] sm:$0xf]
        %v559 = vld [vmem:[%s403 + $0x2ac] sm:$0xf]
        %v560 = vld [vmem:[%s403 + $0x2b0] sm:$0xf]
        %v561 = vld [vmem:[%s403 + $0x2b4] sm:$0xf]
        %v562 = vld [vmem:[%s403 + $0x2b8] sm:$0xf]
        %v563 = vld [vmem:[%s403 + $0x2bc] sm:$0xf]
        %v564 = vld [vmem:[%s403 + $0x2c0] sm:$0xf]
        %v565 = vld [vmem:[%s403 + $0x2c4] sm:$0xf]
        %v566 = vld [vmem:[%s403 + $0x2c8] sm:$0xf]
        %v567 = vld [vmem:[%s403 + $0x2cc] sm:$0xf]
        %v568 = vld [vmem:[%s403 + $0x2d0] sm:$0xf]
        %v569 = vld [vmem:[%s403 + $0x2d4] sm:$0xf]
        %v570 = vld [vmem:[%s403 + $0x2d8] sm:$0xf]
        %v571 = vld [vmem:[%s403 + $0x2dc] sm:$0xf]
        %v572 = vld [vmem:[%s403 + $0x2e0] sm:$0xf]
        %v573 = vld [vmem:[%s403 + $0x2e4] sm:$0xf]
        %v574 = vld [vmem:[%s403 + $0x2e8] sm:$0xf]
        %v575 = vld [vmem:[%s403 + $0x2ec] sm:$0xf]
        %v576 = vld [vmem:[%s403 + $0x2f0] sm:$0xf]
        %v577 = vld [vmem:[%s403 + $0x2f4] sm:$0xf]
        %v578 = vld [vmem:[%s403 + $0x2f8] sm:$0xf]
        %v579 = vld [vmem:[%s403 + $0x2fc] sm:$0xf]
        %v580 = vld [vmem:[#allocation5] sm:$0xf]
        %v581 = vld [vmem:[#allocation5 + $0x4] sm:$0xf]
        %v582 = vld [vmem:[#allocation5 + $0x8] sm:$0xf]
        %v583 = vld [vmem:[#allocation5 + $0xc] sm:$0xf]
        %v584 = vld [vmem:[#allocation5 + $0x10] sm:$0xf]
        %v585 = vld [vmem:[#allocation5 + $0x14] sm:$0xf]
        %v586 = vld [vmem:[#allocation5 + $0x18] sm:$0xf]
        %v587 = vld [vmem:[#allocation5 + $0x1c] sm:$0xf]
        %v588 = vld [vmem:[#allocation5 + $0x20] sm:$0xf]
        %v589 = vld [vmem:[#allocation5 + $0x24] sm:$0xf]
        %v590 = vld [vmem:[#allocation5 + $0x28] sm:$0xf]
        %v591 = vld [vmem:[#allocation5 + $0x2c] sm:$0xf]
        %v592 = vld [vmem:[#allocation5 + $0x30] sm:$0xf]
        %v593 = vld [vmem:[#allocation5 + $0x34] sm:$0xf]
        %v594 = vld [vmem:[#allocation5 + $0x38] sm:$0xf]
        %v595 = vld [vmem:[#allocation5 + $0x3c] sm:$0xf]
        %v612 = vunpack.c.l.b16 %v470
        %v613 = vunpack.c.l.b16 %v471
        %v614 = vunpack.c.l.b16 %v476
        %v615 = vunpack.c.l.b16 %v477
        %v616 = vunpack.c.l.b16 %v482
        %v617 = vunpack.c.l.b16 %v483
        %v618 = vunpack.c.l.b16 %v488
        %v619 = vunpack.c.l.b16 %v489
        %v620 = vunpack.c.l.b16 %v494
        %v621 = vunpack.c.l.b16 %v495
        %v622 = vunpack.c.l.b16 %v500
        %v623 = vunpack.c.l.b16 %v501
        %v624 = vunpack.c.l.b16 %v506
        %v625 = vunpack.c.l.b16 %v507
        %v626 = vunpack.c.l.b16 %v512
        %v627 = vunpack.c.l.b16 %v513
        %v628 = vpack.c.b16 %v613, %v612
        %v629 = vpack.c.b16 %v615, %v614
        %v630 = vpack.c.b16 %v617, %v616
        %v631 = vpack.c.b16 %v619, %v618
        %v632 = vpack.c.b16 %v621, %v620
        %v633 = vpack.c.b16 %v623, %v622
        %v634 = vpack.c.b16 %v625, %v624
        %v635 = vpack.c.b16 %v627, %v626
        %v660 = vunpack.c.l.b16 %v580
        %v661 = vunpack.c.l.b16 %v581
        %v662 = vunpack.c.l.b16 %v582
        %v663 = vunpack.c.l.b16 %v583
        %v664 = vunpack.c.l.b16 %v584
        %v665 = vunpack.c.l.b16 %v585
        %v666 = vunpack.c.l.b16 %v586
        %v667 = vunpack.c.l.b16 %v587
        %v668 = vunpack.c.l.b16 %v588
        %v669 = vunpack.c.l.b16 %v589
        %v670 = vunpack.c.l.b16 %v590
        %v671 = vunpack.c.l.b16 %v591
        %v672 = vunpack.c.l.b16 %v592
        %v673 = vunpack.c.l.b16 %v593
        %v674 = vunpack.c.l.b16 %v594
        %v675 = vunpack.c.l.b16 %v595
        %v676 = vpack.c.b16 %v661, %v660
        %v677 = vpack.c.b16 %v663, %v662
        %v678 = vpack.c.b16 %v665, %v664
        %v679 = vpack.c.b16 %v667, %v666
        %v680 = vpack.c.b16 %v669, %v668
        %v681 = vpack.c.b16 %v671, %v670
        %v682 = vpack.c.b16 %v673, %v672
        %v683 = vpack.c.b16 %v675, %v674
        %692 = vmatprep.subr.bf16.mxu0 0
        %693 = vmatpush1.bf16.msra.mxu0 %v683
        %694 = vmatprep.subr.bf16.mxu0 0
        %695 = vmatpush1.bf16.msra.mxu0 %v682
        %696 = vmatprep.subr.bf16.mxu0 0
        %697 = vmatpush1.bf16.msra.mxu0 %v681
        %698 = vmatprep.subr.bf16.mxu0 0
        %699 = vmatpush1.bf16.msra.mxu0 %v680
        %700 = vmatprep.subr.bf16.mxu0 0
        %701 = vmatpush1.bf16.msra.mxu0 %v679
        %702 = vmatprep.subr.bf16.mxu0 0
        %703 = vmatpush1.bf16.msra.mxu0 %v678
        %704 = vmatprep.subr.bf16.mxu0 0
        %705 = vmatpush1.bf16.msra.mxu0 %v677
        %706 = vmatprep.subr.bf16.mxu0 0
        %707 = vmatpush1.bf16.msra.mxu0 %v676
        %708 = vmatprep.subr.bf16.mxu0 0
        %709 = vmatpush2.bf16.msra.mxu0 0
        %710 = vmatprep.subr.bf16.mxu0 0
        %711 = vmatpush2.bf16.msra.mxu0 0
        %712 = vmatprep.subr.bf16.mxu0 0
        %713 = vmatpush2.bf16.msra.mxu0 0
        %714 = vmatprep.subr.bf16.mxu0 0
        %715 = vmatpush2.bf16.msra.mxu0 0
        %716 = vmatprep.subr.bf16.mxu0 0
        %717 = vmatpush2.bf16.msra.mxu0 0
        %718 = vmatprep.subr.bf16.mxu0 0
        %719 = vmatpush2.bf16.msra.mxu0 0
        %720 = vmatprep.subr.bf16.mxu0 0
        %721 = vmatpush2.bf16.msra.mxu0 0
        %722 = vmatprep.subr.bf16.mxu0 0
        %723 = vmatpush2.bf16.msra.mxu0 0
        %724 = vmatprep.mubr.bf16.mxu0 0
        %725 = vmatmul.mubr.bf16.gmra.mxu0 %v628
        %v726 = vpop.f32.mrf.mxu0
        %v727 = vadd.f32 0.0, %v726
        %v728 = vpop.f32.mrf.mxu0
        %v729 = vpop.f32.mrf.mxu0
        %v730 = vadd.f32 0.0, %v729
        %v731 = vpop.f32.mrf.mxu0
        %732 = vmatprep.mubr.bf16.mxu0 0
        %733 = vmatmul.mubr.bf16.gmra.mxu0 %v629
        %v734 = vpop.f32.mrf.mxu0
        %v735 = vadd.f32 0.0, %v734
        %v736 = vpop.f32.mrf.mxu0
        %v737 = vpop.f32.mrf.mxu0
        %v738 = vadd.f32 0.0, %v737
        %v739 = vpop.f32.mrf.mxu0
        %740 = vmatprep.mubr.bf16.mxu0 0
        %741 = vmatmul.mubr.bf16.gmra.mxu0 %v630
        %v742 = vpop.f32.mrf.mxu0
        %v743 = vadd.f32 0.0, %v742
        %v744 = vpop.f32.mrf.mxu0
        %v745 = vpop.f32.mrf.mxu0
        %v746 = vadd.f32 0.0, %v745
        %v747 = vpop.f32.mrf.mxu0
        %748 = vmatprep.mubr.bf16.mxu0 0
        %749 = vmatmul.mubr.bf16.gmra.mxu0 %v631
        %v750 = vpop.f32.mrf.mxu0
        %v751 = vadd.f32 0.0, %v750
        %v752 = vpop.f32.mrf.mxu0
        %v753 = vpop.f32.mrf.mxu0
        %v754 = vadd.f32 0.0, %v753
        %v755 = vpop.f32.mrf.mxu0
        %756 = vmatprep.mubr.bf16.mxu0 0
        %757 = vmatmul.mubr.bf16.gmra.mxu0 %v632
        %v758 = vpop.f32.mrf.mxu0
        %v759 = vadd.f32 0.0, %v758
        %v760 = vpop.f32.mrf.mxu0
        %v761 = vpop.f32.mrf.mxu0
        %v762 = vadd.f32 0.0, %v761
        %v763 = vpop.f32.mrf.mxu0
        %764 = vmatprep.mubr.bf16.mxu0 0
        %765 = vmatmul.mubr.bf16.gmra.mxu0 %v633
        %v766 = vpop.f32.mrf.mxu0
        %v767 = vadd.f32 0.0, %v766
        %v768 = vpop.f32.mrf.mxu0
        %v769 = vpop.f32.mrf.mxu0
        %v770 = vadd.f32 0.0, %v769
        %v771 = vpop.f32.mrf.mxu0
        %772 = vmatprep.mubr.bf16.mxu0 0
        %773 = vmatmul.mubr.bf16.gmra.mxu0 %v634
        %v774 = vpop.f32.mrf.mxu0
        %v775 = vadd.f32 0.0, %v774
        %v776 = vpop.f32.mrf.mxu0
        %v777 = vpop.f32.mrf.mxu0
        %v778 = vadd.f32 0.0, %v777
        %v779 = vpop.f32.mrf.mxu0
        %780 = vmatprep.mubr.bf16.mxu0 0
        %781 = vmatmul.mubr.bf16.gmra.mxu0 %v635
        %v782 = vpop.f32.mrf.mxu0
        %v783 = vadd.f32 0.0, %v782
        %v784 = vpop.f32.mrf.mxu0
        %v785 = vpop.f32.mrf.mxu0
        %v786 = vadd.f32 0.0, %v785
        %v787 = vpop.f32.mrf.mxu0
        %788 = vdwg.mxu0
        %v789 = vld [vmem:[%s5] sm:$0x1]
        %v790 = vlaneseq
        %v791 = vshrl.u32 %v790, 7
        %v792 = vsub.s32 0, %v791
        %v793 = vrot.slane %v789, %v792
        %v794 = vmul.f32 %v727, %v793
        %v795 = vmul.f32 %v730, %v793
        %v796 = vmul.f32 %v735, %v793
        %v797 = vmul.f32 %v738, %v793
        %v798 = vmul.f32 %v743, %v793
        %v799 = vmul.f32 %v746, %v793
        %v800 = vmul.f32 %v751, %v793
        %v801 = vmul.f32 %v754, %v793
        %v802 = vmul.f32 %v759, %v793
        %v803 = vmul.f32 %v762, %v793
        %v804 = vmul.f32 %v767, %v793
        %v805 = vmul.f32 %v770, %v793
        %v806 = vmul.f32 %v775, %v793
        %v807 = vmul.f32 %v778, %v793
        %v808 = vmul.f32 %v783, %v793
        %v809 = vmul.f32 %v786, %v793
        %v810 = vld [vmem:[#allocation11] sm:$0x1]
        %v811 = vlaneseq
        %v812 = vshrl.u32 %v811, 7
        %v813 = vsub.s32 0, %v812
        %v814 = vrot.slane %v810, %v813
        %v815 = vadd.f32 %v794, %v814
        %v816 = vadd.f32 %v795, %v814
        %v817 = vadd.f32 %v796, %v814
        %v818 = vadd.f32 %v797, %v814
        %v819 = vadd.f32 %v798, %v814
        %v820 = vadd.f32 %v799, %v814
        %v821 = vadd.f32 %v800, %v814
        %v822 = vadd.f32 %v801, %v814
        %v823 = vadd.f32 %v802, %v814
        %v824 = vadd.f32 %v803, %v814
        %v825 = vadd.f32 %v804, %v814
        %v826 = vadd.f32 %v805, %v814
        %v827 = vadd.f32 %v806, %v814
        %v828 = vadd.f32 %v807, %v814
        %v829 = vadd.f32 %v808, %v814
        %v830 = vadd.f32 %v809, %v814
        %v831 = vmax.f32 %v815, 0.0
        %v832 = vmax.f32 %v816, 0.0
        %v833 = vmax.f32 %v817, 0.0
        %v834 = vmax.f32 %v818, 0.0
        %v835 = vmax.f32 %v819, 0.0
        %v836 = vmax.f32 %v820, 0.0
        %v837 = vmax.f32 %v821, 0.0
        %v838 = vmax.f32 %v822, 0.0
        %v839 = vmax.f32 %v823, 0.0
        %v840 = vmax.f32 %v824, 0.0
        %v841 = vmax.f32 %v825, 0.0
        %v842 = vmax.f32 %v826, 0.0
        %v843 = vmax.f32 %v827, 0.0
        %v844 = vmax.f32 %v828, 0.0
        %v845 = vmax.f32 %v829, 0.0
        %v846 = vmax.f32 %v830, 0.0
        %s847 = scalar_lea.vmem [#allocation7], 256
        %v848 = vld [vmem:[%s847] sm:$0xf]
        %v849 = vld [vmem:[%s847 + $0x4] sm:$0xf]
        %v850 = vld [vmem:[%s847 + $0x8] sm:$0xf]
        %v851 = vld [vmem:[%s847 + $0xc] sm:$0xf]
        %v852 = vld [vmem:[%s847 + $0x10] sm:$0xf]
        %v853 = vld [vmem:[%s847 + $0x14] sm:$0xf]
        %v854 = vld [vmem:[%s847 + $0x18] sm:$0xf]
        %v855 = vld [vmem:[%s847 + $0x1c] sm:$0xf]
        %v856 = vld [vmem:[%s847 + $0x20] sm:$0xf]
        %v857 = vld [vmem:[%s847 + $0x24] sm:$0xf]
        %v858 = vld [vmem:[%s847 + $0x28] sm:$0xf]
        %v859 = vld [vmem:[%s847 + $0x2c] sm:$0xf]
        %v860 = vld [vmem:[%s847 + $0x30] sm:$0xf]
        %v861 = vld [vmem:[%s847 + $0x34] sm:$0xf]
        %v862 = vld [vmem:[%s847 + $0x38] sm:$0xf]
        %v863 = vld [vmem:[%s847 + $0x3c] sm:$0xf]
        %vm884 = vcmask 1042432
        %vm885 = vcmask 1046532
        %vm886 = vmor %vm884, %vm885
        %v887 = vrot.slane %v441, 5
        %v888 = vrot.slane %v887, 4
        %v889 = vrot.slane %v442, 5
        %v890 = vsel %vm886, %v888, %v889
        %v891 = vrot.slane %v889, 4
        %v892 = vrot.slane %v443, 5
        %v893 = vsel %vm886, %v891, %v892
        %v894 = vrot.slane %v447, 5
        %v895 = vrot.slane %v894, 4
        %v896 = vrot.slane %v448, 5
        %v897 = vsel %vm886, %v895, %v896
        %v898 = vrot.slane %v896, 4
        %v899 = vrot.slane %v449, 5
        %v900 = vsel %vm886, %v898, %v899
        %v901 = vrot.slane %v452, 5
        %v902 = vrot.slane %v901, 4
        %v903 = vrot.slane %v453, 5
        %v904 = vsel %vm886, %v902, %v903
        %v905 = vrot.slane %v903, 4
        %v906 = vrot.slane %v454, 5
        %v907 = vsel %vm886, %v905, %v906
        %v908 = vrot.slane %v456, 5
        %v909 = vrot.slane %v908, 4
        %v910 = vrot.slane %v457, 5
        %v911 = vsel %vm886, %v909, %v910
        %v912 = vrot.slane %v910, 4
        %v913 = vrot.slane %v458, 5
        %v914 = vsel %vm886, %v912, %v913
        %v915 = vrot.slane %v460, 5
        %v916 = vrot.slane %v915, 4
        %v917 = vrot.slane %v461, 5
        %v918 = vsel %vm886, %v916, %v917
        %v919 = vrot.slane %v917, 4
        %v920 = vrot.slane %v462, 5
        %v921 = vsel %vm886, %v919, %v920
        %v922 = vrot.slane %v464, 5
        %v923 = vrot.slane %v922, 4
        %v924 = vrot.slane %v465, 5
        %v925 = vsel %vm886, %v923, %v924
        %v926 = vrot.slane %v924, 4
        %v927 = vrot.slane %v466, 5
        %v928 = vsel %vm886, %v926, %v927
        %v929 = vrot.slane %v469, 5
        %v930 = vrot.slane %v929, 4
        %v931 = vrot.slane %v470, 5
        %v932 = vsel %vm886, %v930, %v931
        %v933 = vrot.slane %v931, 4
        %v934 = vrot.slane %v471, 5
        %v935 = vsel %vm886, %v933, %v934
        %v936 = vrot.slane %v475, 5
        %v937 = vrot.slane %v936, 4
        %v938 = vrot.slane %v476, 5
        %v939 = vsel %vm886, %v937, %v938
        %v940 = vrot.slane %v938, 4
        %v941 = vrot.slane %v477, 5
        %v942 = vsel %vm886, %v940, %v941
        %v943 = vld [vmem:[#allocation7] sm:$0xf]
        %v944 = vld [vmem:[#allocation7 + $0x4] sm:$0xf]
        %v945 = vld [vmem:[#allocation7 + $0x8] sm:$0xf]
        %v946 = vld [vmem:[#allocation7 + $0xc] sm:$0xf]
        %v947 = vld [vmem:[#allocation7 + $0x10] sm:$0xf]
        %v948 = vld [vmem:[#allocation7 + $0x14] sm:$0xf]
        %v949 = vld [vmem:[#allocation7 + $0x18] sm:$0xf]
        %v950 = vld [vmem:[#allocation7 + $0x1c] sm:$0xf]
        %v951 = vld [vmem:[#allocation7 + $0x20] sm:$0xf]
        %v952 = vld [vmem:[#allocation7 + $0x24] sm:$0xf]
        %v953 = vld [vmem:[#allocation7 + $0x28] sm:$0xf]
        %v954 = vld [vmem:[#allocation7 + $0x2c] sm:$0xf]
        %v955 = vld [vmem:[#allocation7 + $0x30] sm:$0xf]
        %v956 = vld [vmem:[#allocation7 + $0x34] sm:$0xf]
        %v957 = vld [vmem:[#allocation7 + $0x38] sm:$0xf]
        %v958 = vld [vmem:[#allocation7 + $0x3c] sm:$0xf]
        %v959 = vunpack.c.l.b16 %v890
        %v960 = vunpack.c.l.b16 %v893
        %v961 = vunpack.c.l.b16 %v897
        %v962 = vunpack.c.l.b16 %v900
        %v963 = vunpack.c.l.b16 %v904
        %v964 = vunpack.c.l.b16 %v907
        %v965 = vunpack.c.l.b16 %v911
        %v966 = vunpack.c.l.b16 %v914
        %v967 = vunpack.c.l.b16 %v918
        %v968 = vunpack.c.l.b16 %v921
        %v969 = vunpack.c.l.b16 %v925
        %v970 = vunpack.c.l.b16 %v928
        %v971 = vunpack.c.l.b16 %v932
        %v972 = vunpack.c.l.b16 %v935
        %v973 = vunpack.c.l.b16 %v939
        %v974 = vunpack.c.l.b16 %v942
        %v975 = vpack.c.b16 %v960, %v959
        %v976 = vpack.c.b16 %v962, %v961
        %v977 = vpack.c.b16 %v964, %v963
        %v978 = vpack.c.b16 %v966, %v965
        %v979 = vpack.c.b16 %v968, %v967
        %v980 = vpack.c.b16 %v970, %v969
        %v981 = vpack.c.b16 %v972, %v971
        %v982 = vpack.c.b16 %v974, %v973
        %v1007 = vunpack.c.l.b16 %v943
        %v1008 = vunpack.c.l.b16 %v944
        %v1009 = vunpack.c.l.b16 %v945
        %v1010 = vunpack.c.l.b16 %v946
        %v1011 = vunpack.c.l.b16 %v947
        %v1012 = vunpack.c.l.b16 %v948
        %v1013 = vunpack.c.l.b16 %v949
        %v1014 = vunpack.c.l.b16 %v950
        %v1015 = vunpack.c.l.b16 %v951
        %v1016 = vunpack.c.l.b16 %v952
        %v1017 = vunpack.c.l.b16 %v953
        %v1018 = vunpack.c.l.b16 %v954
        %v1019 = vunpack.c.l.b16 %v955
        %v1020 = vunpack.c.l.b16 %v956
        %v1021 = vunpack.c.l.b16 %v957
        %v1022 = vunpack.c.l.b16 %v958
        %v1023 = vpack.c.b16 %v1008, %v1007
        %v1024 = vpack.c.b16 %v1010, %v1009
        %v1025 = vpack.c.b16 %v1012, %v1011
        %v1026 = vpack.c.b16 %v1014, %v1013
        %v1027 = vpack.c.b16 %v1016, %v1015
        %v1028 = vpack.c.b16 %v1018, %v1017
        %v1029 = vpack.c.b16 %v1020, %v1019
        %v1030 = vpack.c.b16 %v1022, %v1021
        %1039 = vmatprep.subr.bf16.mxu0 0
        %1040 = vmatpush1.bf16.msra.mxu0 %v1030
        %1041 = vmatprep.subr.bf16.mxu0 0
        %1042 = vmatpush1.bf16.msra.mxu0 %v1029
        %1043 = vmatprep.subr.bf16.mxu0 0
        %1044 = vmatpush1.bf16.msra.mxu0 %v1028
        %1045 = vmatprep.subr.bf16.mxu0 0
        %1046 = vmatpush1.bf16.msra.mxu0 %v1027
        %1047 = vmatprep.subr.bf16.mxu0 0
        %1048 = vmatpush1.bf16.msra.mxu0 %v1026
        %1049 = vmatprep.subr.bf16.mxu0 0
        %1050 = vmatpush1.bf16.msra.mxu0 %v1025
        %1051 = vmatprep.subr.bf16.mxu0 0
        %1052 = vmatpush1.bf16.msra.mxu0 %v1024
        %1053 = vmatprep.subr.bf16.mxu0 0
        %1054 = vmatpush1.bf16.msra.mxu0 %v1023
        %1055 = vmatprep.subr.bf16.mxu0 0
        %1056 = vmatpush2.bf16.msra.mxu0 0
        %1057 = vmatprep.subr.bf16.mxu0 0
        %1058 = vmatpush2.bf16.msra.mxu0 0
        %1059 = vmatprep.subr.bf16.mxu0 0
        %1060 = vmatpush2.bf16.msra.mxu0 0
        %1061 = vmatprep.subr.bf16.mxu0 0
        %1062 = vmatpush2.bf16.msra.mxu0 0
        %1063 = vmatprep.subr.bf16.mxu0 0
        %1064 = vmatpush2.bf16.msra.mxu0 0
        %1065 = vmatprep.subr.bf16.mxu0 0
        %1066 = vmatpush2.bf16.msra.mxu0 0
        %1067 = vmatprep.subr.bf16.mxu0 0
        %1068 = vmatpush2.bf16.msra.mxu0 0
        %1069 = vmatprep.subr.bf16.mxu0 0
        %1070 = vmatpush2.bf16.msra.mxu0 0
        %1071 = vmatprep.mubr.bf16.mxu0 0
        %1072 = vmatmul.mubr.bf16.gmra.mxu0 %v975
        %v1073 = vpop.f32.mrf.mxu0
        %v1074 = vadd.f32 0.0, %v1073
        %v1075 = vpop.f32.mrf.mxu0
        %v1076 = vpop.f32.mrf.mxu0
        %v1077 = vadd.f32 0.0, %v1076
        %v1078 = vpop.f32.mrf.mxu0
        %1079 = vmatprep.mubr.bf16.mxu0 0
        %1080 = vmatmul.mubr.bf16.gmra.mxu0 %v976
        %v1081 = vpop.f32.mrf.mxu0
        %v1082 = vadd.f32 0.0, %v1081
        %v1083 = vpop.f32.mrf.mxu0
        %v1084 = vpop.f32.mrf.mxu0
        %v1085 = vadd.f32 0.0, %v1084
        %v1086 = vpop.f32.mrf.mxu0
        %1087 = vmatprep.mubr.bf16.mxu0 0
        %1088 = vmatmul.mubr.bf16.gmra.mxu0 %v977
        %v1089 = vpop.f32.mrf.mxu0
        %v1090 = vadd.f32 0.0, %v1089
        %v1091 = vpop.f32.mrf.mxu0
        %v1092 = vpop.f32.mrf.mxu0
        %v1093 = vadd.f32 0.0, %v1092
        %v1094 = vpop.f32.mrf.mxu0
        %1095 = vmatprep.mubr.bf16.mxu0 0
        %1096 = vmatmul.mubr.bf16.gmra.mxu0 %v978
        %v1097 = vpop.f32.mrf.mxu0
        %v1098 = vadd.f32 0.0, %v1097
        %v1099 = vpop.f32.mrf.mxu0
        %v1100 = vpop.f32.mrf.mxu0
        %v1101 = vadd.f32 0.0, %v1100
        %v1102 = vpop.f32.mrf.mxu0
        %1103 = vmatprep.mubr.bf16.mxu0 0
        %1104 = vmatmul.mubr.bf16.gmra.mxu0 %v979
        %v1105 = vpop.f32.mrf.mxu0
        %v1106 = vadd.f32 0.0, %v1105
        %v1107 = vpop.f32.mrf.mxu0
        %v1108 = vpop.f32.mrf.mxu0
        %v1109 = vadd.f32 0.0, %v1108
        %v1110 = vpop.f32.mrf.mxu0
        %1111 = vmatprep.mubr.bf16.mxu0 0
        %1112 = vmatmul.mubr.bf16.gmra.mxu0 %v980
        %v1113 = vpop.f32.mrf.mxu0
        %v1114 = vadd.f32 0.0, %v1113
        %v1115 = vpop.f32.mrf.mxu0
        %v1116 = vpop.f32.mrf.mxu0
        %v1117 = vadd.f32 0.0, %v1116
        %v1118 = vpop.f32.mrf.mxu0
        %1119 = vmatprep.mubr.bf16.mxu0 0
        %1120 = vmatmul.mubr.bf16.gmra.mxu0 %v981
        %v1121 = vpop.f32.mrf.mxu0
        %v1122 = vadd.f32 0.0, %v1121
        %v1123 = vpop.f32.mrf.mxu0
        %v1124 = vpop.f32.mrf.mxu0
        %v1125 = vadd.f32 0.0, %v1124
        %v1126 = vpop.f32.mrf.mxu0
        %1127 = vmatprep.mubr.bf16.mxu0 0
        %1128 = vmatmul.mubr.bf16.gmra.mxu0 %v982
        %v1129 = vpop.f32.mrf.mxu0
        %v1130 = vadd.f32 0.0, %v1129
        %v1131 = vpop.f32.mrf.mxu0
        %v1132 = vpop.f32.mrf.mxu0
        %v1133 = vadd.f32 0.0, %v1132
        %v1134 = vpop.f32.mrf.mxu0
        %1135 = vdwg.mxu0
        %v1152 = vunpack.c.l.b16 %v848
        %v1153 = vunpack.c.l.b16 %v849
        %v1154 = vunpack.c.l.b16 %v850
        %v1155 = vunpack.c.l.b16 %v851
        %v1156 = vunpack.c.l.b16 %v852
        %v1157 = vunpack.c.l.b16 %v853
        %v1158 = vunpack.c.l.b16 %v854
        %v1159 = vunpack.c.l.b16 %v855
        %v1160 = vunpack.c.l.b16 %v856
        %v1161 = vunpack.c.l.b16 %v857
        %v1162 = vunpack.c.l.b16 %v858
        %v1163 = vunpack.c.l.b16 %v859
        %v1164 = vunpack.c.l.b16 %v860
        %v1165 = vunpack.c.l.b16 %v861
        %v1166 = vunpack.c.l.b16 %v862
        %v1167 = vunpack.c.l.b16 %v863
        %v1168 = vpack.c.b16 %v1153, %v1152
        %v1169 = vpack.c.b16 %v1155, %v1154
        %v1170 = vpack.c.b16 %v1157, %v1156
        %v1171 = vpack.c.b16 %v1159, %v1158
        %v1172 = vpack.c.b16 %v1161, %v1160
        %v1173 = vpack.c.b16 %v1163, %v1162
        %v1174 = vpack.c.b16 %v1165, %v1164
        %v1175 = vpack.c.b16 %v1167, %v1166
        %1184 = vmatprep.subr.bf16.mxu0 0
        %1185 = vmatpush1.bf16.msra.mxu0 %v1175
        %1186 = vmatprep.subr.bf16.mxu0 0
        %1187 = vmatpush1.bf16.msra.mxu0 %v1174
        %1188 = vmatprep.subr.bf16.mxu0 0
        %1189 = vmatpush1.bf16.msra.mxu0 %v1173
        %1190 = vmatprep.subr.bf16.mxu0 0
        %1191 = vmatpush1.bf16.msra.mxu0 %v1172
        %1192 = vmatprep.subr.bf16.mxu0 0
        %1193 = vmatpush1.bf16.msra.mxu0 %v1171
        %1194 = vmatprep.subr.bf16.mxu0 0
        %1195 = vmatpush1.bf16.msra.mxu0 %v1170
        %1196 = vmatprep.subr.bf16.mxu0 0
        %1197 = vmatpush1.bf16.msra.mxu0 %v1169
        %1198 = vmatprep.subr.bf16.mxu0 0
        %1199 = vmatpush1.bf16.msra.mxu0 %v1168
        %1200 = vmatprep.subr.bf16.mxu0 0
        %1201 = vmatpush2.bf16.msra.mxu0 0
        %1202 = vmatprep.subr.bf16.mxu0 0
        %1203 = vmatpush2.bf16.msra.mxu0 0
        %1204 = vmatprep.subr.bf16.mxu0 0
        %1205 = vmatpush2.bf16.msra.mxu0 0
        %1206 = vmatprep.subr.bf16.mxu0 0
        %1207 = vmatpush2.bf16.msra.mxu0 0
        %1208 = vmatprep.subr.bf16.mxu0 0
        %1209 = vmatpush2.bf16.msra.mxu0 0
        %1210 = vmatprep.subr.bf16.mxu0 0
        %1211 = vmatpush2.bf16.msra.mxu0 0
        %1212 = vmatprep.subr.bf16.mxu0 0
        %1213 = vmatpush2.bf16.msra.mxu0 0
        %1214 = vmatprep.subr.bf16.mxu0 0
        %1215 = vmatpush2.bf16.msra.mxu0 0
        %1216 = vmatprep.mubr.bf16.mxu0 0
        %1217 = vmatmul.mubr.bf16.gmra.mxu0 %v628
        %v1218 = vpop.f32.mrf.mxu0
        %v1219 = vadd.f32 %v1074, %v1218
        %v1220 = vpop.f32.mrf.mxu0
        %v1221 = vpop.f32.mrf.mxu0
        %v1222 = vadd.f32 %v1077, %v1221
        %v1223 = vpop.f32.mrf.mxu0
        %1224 = vmatprep.mubr.bf16.mxu0 0
        %1225 = vmatmul.mubr.bf16.gmra.mxu0 %v629
        %v1226 = vpop.f32.mrf.mxu0
        %v1227 = vadd.f32 %v1082, %v1226
        %v1228 = vpop.f32.mrf.mxu0
        %v1229 = vpop.f32.mrf.mxu0
        %v1230 = vadd.f32 %v1085, %v1229
        %v1231 = vpop.f32.mrf.mxu0
        %1232 = vmatprep.mubr.bf16.mxu0 0
        %1233 = vmatmul.mubr.bf16.gmra.mxu0 %v630
        %v1234 = vpop.f32.mrf.mxu0
        %v1235 = vadd.f32 %v1090, %v1234
        %v1236 = vpop.f32.mrf.mxu0
        %v1237 = vpop.f32.mrf.mxu0
        %v1238 = vadd.f32 %v1093, %v1237
        %v1239 = vpop.f32.mrf.mxu0
        %1240 = vmatprep.mubr.bf16.mxu0 0
        %1241 = vmatmul.mubr.bf16.gmra.mxu0 %v631
        %v1242 = vpop.f32.mrf.mxu0
        %v1243 = vadd.f32 %v1098, %v1242
        %v1244 = vpop.f32.mrf.mxu0
        %v1245 = vpop.f32.mrf.mxu0
        %v1246 = vadd.f32 %v1101, %v1245
        %v1247 = vpop.f32.mrf.mxu0
        %1248 = vmatprep.mubr.bf16.mxu0 0
        %1249 = vmatmul.mubr.bf16.gmra.mxu0 %v632
        %v1250 = vpop.f32.mrf.mxu0
        %v1251 = vadd.f32 %v1106, %v1250
        %v1252 = vpop.f32.mrf.mxu0
        %v1253 = vpop.f32.mrf.mxu0
        %v1254 = vadd.f32 %v1109, %v1253
        %v1255 = vpop.f32.mrf.mxu0
        %1256 = vmatprep.mubr.bf16.mxu0 0
        %1257 = vmatmul.mubr.bf16.gmra.mxu0 %v633
        %v1258 = vpop.f32.mrf.mxu0
        %v1259 = vadd.f32 %v1114, %v1258
        %v1260 = vpop.f32.mrf.mxu0
        %v1261 = vpop.f32.mrf.mxu0
        %v1262 = vadd.f32 %v1117, %v1261
        %v1263 = vpop.f32.mrf.mxu0
        %1264 = vmatprep.mubr.bf16.mxu0 0
        %1265 = vmatmul.mubr.bf16.gmra.mxu0 %v634
        %v1266 = vpop.f32.mrf.mxu0
        %v1267 = vadd.f32 %v1122, %v1266
        %v1268 = vpop.f32.mrf.mxu0
        %v1269 = vpop.f32.mrf.mxu0
        %v1270 = vadd.f32 %v1125, %v1269
        %v1271 = vpop.f32.mrf.mxu0
        %1272 = vmatprep.mubr.bf16.mxu0 0
        %1273 = vmatmul.mubr.bf16.gmra.mxu0 %v635
        %v1274 = vpop.f32.mrf.mxu0
        %v1275 = vadd.f32 %v1130, %v1274
        %v1276 = vpop.f32.mrf.mxu0
        %v1277 = vpop.f32.mrf.mxu0
        %v1278 = vadd.f32 %v1133, %v1277
        %v1279 = vpop.f32.mrf.mxu0
        %1280 = vdwg.mxu0
        %s1281 = scalar_lea.vmem [#allocation7], 64
        %v1282 = vld [vmem:[%s1281] sm:$0xf]
        %v1283 = vld [vmem:[%s1281 + $0x4] sm:$0xf]
        %v1284 = vld [vmem:[%s1281 + $0x8] sm:$0xf]
        %v1285 = vld [vmem:[%s1281 + $0xc] sm:$0xf]
        %v1286 = vld [vmem:[%s1281 + $0x10] sm:$0xf]
        %v1287 = vld [vmem:[%s1281 + $0x14] sm:$0xf]
        %v1288 = vld [vmem:[%s1281 + $0x18] sm:$0xf]
        %v1289 = vld [vmem:[%s1281 + $0x1c] sm:$0xf]
        %v1290 = vld [vmem:[%s1281 + $0x20] sm:$0xf]
        %v1291 = vld [vmem:[%s1281 + $0x24] sm:$0xf]
        %v1292 = vld [vmem:[%s1281 + $0x28] sm:$0xf]
        %v1293 = vld [vmem:[%s1281 + $0x2c] sm:$0xf]
        %v1294 = vld [vmem:[%s1281 + $0x30] sm:$0xf]
        %v1295 = vld [vmem:[%s1281 + $0x34] sm:$0xf]
        %v1296 = vld [vmem:[%s1281 + $0x38] sm:$0xf]
        %v1297 = vld [vmem:[%s1281 + $0x3c] sm:$0xf]
        %v1298 = vunpack.c.l.b16 %v442
        %v1299 = vunpack.c.l.b16 %v443
        %v1300 = vunpack.c.l.b16 %v448
        %v1301 = vunpack.c.l.b16 %v449
        %v1302 = vunpack.c.l.b16 %v453
        %v1303 = vunpack.c.l.b16 %v454
        %v1304 = vunpack.c.l.b16 %v457
        %v1305 = vunpack.c.l.b16 %v458
        %v1306 = vunpack.c.l.b16 %v461
        %v1307 = vunpack.c.l.b16 %v462
        %v1308 = vunpack.c.l.b16 %v465
        %v1309 = vunpack.c.l.b16 %v466
        %v1310 = vpack.c.b16 %v1299, %v1298
        %v1311 = vpack.c.b16 %v1301, %v1300
        %v1312 = vpack.c.b16 %v1303, %v1302
        %v1313 = vpack.c.b16 %v1305, %v1304
        %v1314 = vpack.c.b16 %v1307, %v1306
        %v1315 = vpack.c.b16 %v1309, %v1308
        %v1338 = vunpack.c.l.b16 %v1282
        %v1339 = vunpack.c.l.b16 %v1283
        %v1340 = vunpack.c.l.b16 %v1284
        %v1341 = vunpack.c.l.b16 %v1285
        %v1342 = vunpack.c.l.b16 %v1286
        %v1343 = vunpack.c.l.b16 %v1287
        %v1344 = vunpack.c.l.b16 %v1288
        %v1345 = vunpack.c.l.b16 %v1289
        %v1346 = vunpack.c.l.b16 %v1290
        %v1347 = vunpack.c.l.b16 %v1291
        %v1348 = vunpack.c.l.b16 %v1292
        %v1349 = vunpack.c.l.b16 %v1293
        %v1350 = vunpack.c.l.b16 %v1294
        %v1351 = vunpack.c.l.b16 %v1295
        %v1352 = vunpack.c.l.b16 %v1296
        %v1353 = vunpack.c.l.b16 %v1297
        %v1354 = vpack.c.b16 %v1339, %v1338
        %v1355 = vpack.c.b16 %v1341, %v1340
        %v1356 = vpack.c.b16 %v1343, %v1342
        %v1357 = vpack.c.b16 %v1345, %v1344
        %v1358 = vpack.c.b16 %v1347, %v1346
        %v1359 = vpack.c.b16 %v1349, %v1348
        %v1360 = vpack.c.b16 %v1351, %v1350
        %v1361 = vpack.c.b16 %v1353, %v1352
        %1370 = vmatprep.subr.bf16.mxu0 0
        %1371 = vmatpush1.bf16.msra.mxu0 %v1361
        %1372 = vmatprep.subr.bf16.mxu0 0
        %1373 = vmatpush1.bf16.msra.mxu0 %v1360
        %1374 = vmatprep.subr.bf16.mxu0 0
        %1375 = vmatpush1.bf16.msra.mxu0 %v1359
        %1376 = vmatprep.subr.bf16.mxu0 0
        %1377 = vmatpush1.bf16.msra.mxu0 %v1358
        %1378 = vmatprep.subr.bf16.mxu0 0
        %1379 = vmatpush1.bf16.msra.mxu0 %v1357
        %1380 = vmatprep.subr.bf16.mxu0 0
        %1381 = vmatpush1.bf16.msra.mxu0 %v1356
        %1382 = vmatprep.subr.bf16.mxu0 0
        %1383 = vmatpush1.bf16.msra.mxu0 %v1355
        %1384 = vmatprep.subr.bf16.mxu0 0
        %1385 = vmatpush1.bf16.msra.mxu0 %v1354
        %1386 = vmatprep.subr.bf16.mxu0 0
        %1387 = vmatpush2.bf16.msra.mxu0 0
        %1388 = vmatprep.subr.bf16.mxu0 0
        %1389 = vmatpush2.bf16.msra.mxu0 0
        %1390 = vmatprep.subr.bf16.mxu0 0
        %1391 = vmatpush2.bf16.msra.mxu0 0
        %1392 = vmatprep.subr.bf16.mxu0 0
        %1393 = vmatpush2.bf16.msra.mxu0 0
        %1394 = vmatprep.subr.bf16.mxu0 0
        %1395 = vmatpush2.bf16.msra.mxu0 0
        %1396 = vmatprep.subr.bf16.mxu0 0
        %1397 = vmatpush2.bf16.msra.mxu0 0
        %1398 = vmatprep.subr.bf16.mxu0 0
        %1399 = vmatpush2.bf16.msra.mxu0 0
        %1400 = vmatprep.subr.bf16.mxu0 0
        %1401 = vmatpush2.bf16.msra.mxu0 0
        %1402 = vmatprep.mubr.bf16.mxu0 0
        %1403 = vmatmul.mubr.bf16.gmra.mxu0 %v1310
        %v1404 = vpop.f32.mrf.mxu0
        %v1405 = vadd.f32 0.0, %v1404
        %v1406 = vpop.f32.mrf.mxu0
        %v1407 = vpop.f32.mrf.mxu0
        %v1408 = vadd.f32 0.0, %v1407
        %v1409 = vpop.f32.mrf.mxu0
        %1410 = vmatprep.mubr.bf16.mxu0 0
        %1411 = vmatmul.mubr.bf16.gmra.mxu0 %v1311
        %v1412 = vpop.f32.mrf.mxu0
        %v1413 = vadd.f32 0.0, %v1412
        %v1414 = vpop.f32.mrf.mxu0
        %v1415 = vpop.f32.mrf.mxu0
        %v1416 = vadd.f32 0.0, %v1415
        %v1417 = vpop.f32.mrf.mxu0
        %1418 = vmatprep.mubr.bf16.mxu0 0
        %1419 = vmatmul.mubr.bf16.gmra.mxu0 %v1312
        %v1420 = vpop.f32.mrf.mxu0
        %v1421 = vadd.f32 0.0, %v1420
        %v1422 = vpop.f32.mrf.mxu0
        %v1423 = vpop.f32.mrf.mxu0
        %v1424 = vadd.f32 0.0, %v1423
        %v1425 = vpop.f32.mrf.mxu0
        %1426 = vmatprep.mubr.bf16.mxu0 0
        %1427 = vmatmul.mubr.bf16.gmra.mxu0 %v1313
        %v1428 = vpop.f32.mrf.mxu0
        %v1429 = vadd.f32 0.0, %v1428
        %v1430 = vpop.f32.mrf.mxu0
        %v1431 = vpop.f32.mrf.mxu0
        %v1432 = vadd.f32 0.0, %v1431
        %v1433 = vpop.f32.mrf.mxu0
        %1434 = vmatprep.mubr.bf16.mxu0 0
        %1435 = vmatmul.mubr.bf16.gmra.mxu0 %v1314
        %v1436 = vpop.f32.mrf.mxu0
        %v1437 = vadd.f32 0.0, %v1436
        %v1438 = vpop.f32.mrf.mxu0
        %v1439 = vpop.f32.mrf.mxu0
        %v1440 = vadd.f32 0.0, %v1439
        %v1441 = vpop.f32.mrf.mxu0
        %1442 = vmatprep.mubr.bf16.mxu0 0
        %1443 = vmatmul.mubr.bf16.gmra.mxu0 %v1315
        %v1444 = vpop.f32.mrf.mxu0
        %v1445 = vadd.f32 0.0, %v1444
        %v1446 = vpop.f32.mrf.mxu0
        %v1447 = vpop.f32.mrf.mxu0
        %v1448 = vadd.f32 0.0, %v1447
        %v1449 = vpop.f32.mrf.mxu0
        %1450 = vmatprep.mubr.bf16.mxu0 0
        %1451 = vmatmul.mubr.bf16.gmra.mxu0 %v628
        %v1452 = vpop.f32.mrf.mxu0
        %v1453 = vadd.f32 0.0, %v1452
        %v1454 = vpop.f32.mrf.mxu0
        %v1455 = vpop.f32.mrf.mxu0
        %v1456 = vadd.f32 0.0, %v1455
        %v1457 = vpop.f32.mrf.mxu0
        %1458 = vmatprep.mubr.bf16.mxu0 0
        %1459 = vmatmul.mubr.bf16.gmra.mxu0 %v629
        %v1460 = vpop.f32.mrf.mxu0
        %v1461 = vadd.f32 0.0, %v1460
        %v1462 = vpop.f32.mrf.mxu0
        %v1463 = vpop.f32.mrf.mxu0
        %v1464 = vadd.f32 0.0, %v1463
        %v1465 = vpop.f32.mrf.mxu0
        %1466 = vdwg.mxu0
        %v1467 = vadd.f32 %v1219, %v1405
        %v1468 = vadd.f32 %v1222, %v1408
        %v1469 = vadd.f32 %v1227, %v1413
        %v1470 = vadd.f32 %v1230, %v1416
        %v1471 = vadd.f32 %v1235, %v1421
        %v1472 = vadd.f32 %v1238, %v1424
        %v1473 = vadd.f32 %v1243, %v1429
        %v1474 = vadd.f32 %v1246, %v1432
        %v1475 = vadd.f32 %v1251, %v1437
        %v1476 = vadd.f32 %v1254, %v1440
        %v1477 = vadd.f32 %v1259, %v1445
        %v1478 = vadd.f32 %v1262, %v1448
        %v1479 = vadd.f32 %v1267, %v1453
        %v1480 = vadd.f32 %v1270, %v1456
        %v1481 = vadd.f32 %v1275, %v1461
        %v1482 = vadd.f32 %v1278, %v1464
        %vm1491 = vcmask 1040384
        %vm1492 = vcmask 1044484
        %vm1493 = vmor %vm1491, %vm1492
        %v1494 = vrot.slane %v442, 7
        %v1495 = vrot.slane %v1494, 4
        %v1496 = vrot.slane %v443, 7
        %v1497 = vsel %vm1493, %v1495, %v1496
        %v1498 = vrot.slane %v1496, 4
        %v1499 = vrot.slane %v444, 7
        %v1500 = vsel %vm1493, %v1498, %v1499
        %v1501 = vrot.slane %v448, 7
        %v1502 = vrot.slane %v1501, 4
        %v1503 = vrot.slane %v449, 7
        %v1504 = vsel %vm1493, %v1502, %v1503
        %v1505 = vrot.slane %v1503, 4
        %v1506 = vrot.slane %v450, 7
        %v1507 = vsel %vm1493, %v1505, %v1506
        %v1508 = vrot.slane %v453, 7
        %v1509 = vrot.slane %v1508, 4
        %v1510 = vrot.slane %v454, 7
        %v1511 = vsel %vm1493, %v1509, %v1510
        %v1512 = vrot.slane %v1510, 4
        %v1513 = vrot.slane %v455, 7
        %v1514 = vsel %vm1493, %v1512, %v1513
        %v1515 = vrot.slane %v457, 7
        %v1516 = vrot.slane %v1515, 4
        %v1517 = vrot.slane %v458, 7
        %v1518 = vsel %vm1493, %v1516, %v1517
        %v1519 = vrot.slane %v1517, 4
        %v1520 = vrot.slane %v459, 7
        %v1521 = vsel %vm1493, %v1519, %v1520
        %v1522 = vrot.slane %v461, 7
        %v1523 = vrot.slane %v1522, 4
        %v1524 = vrot.slane %v462, 7
        %v1525 = vsel %vm1493, %v1523, %v1524
        %v1526 = vrot.slane %v1524, 4
        %v1527 = vrot.slane %v463, 7
        %v1528 = vsel %vm1493, %v1526, %v1527
        %v1529 = vrot.slane %v465, 7
        %v1530 = vrot.slane %v1529, 4
        %v1531 = vrot.slane %v466, 7
        %v1532 = vsel %vm1493, %v1530, %v1531
        %v1533 = vrot.slane %v1531, 4
        %v1534 = vrot.slane %v467, 7
        %v1535 = vsel %vm1493, %v1533, %v1534
        %v1536 = vrot.slane %v470, 7
        %v1537 = vrot.slane %v1536, 4
        %v1538 = vrot.slane %v471, 7
        %v1539 = vsel %vm1493, %v1537, %v1538
        %v1540 = vrot.slane %v1538, 4
        %v1541 = vrot.slane %v472, 7
        %v1542 = vsel %vm1493, %v1540, %v1541
        %v1543 = vrot.slane %v476, 7
        %v1544 = vrot.slane %v1543, 4
        %v1545 = vrot.slane %v477, 7
        %v1546 = vsel %vm1493, %v1544, %v1545
        %v1547 = vrot.slane %v1545, 4
        %v1548 = vrot.slane %v478, 7
        %v1549 = vsel %vm1493, %v1547, %v1548
        %s1550 = scalar_lea.vmem [#allocation7], 128
        %v1551 = vld [vmem:[%s1550] sm:$0xf]
        %v1552 = vld [vmem:[%s1550 + $0x4] sm:$0xf]
        %v1553 = vld [vmem:[%s1550 + $0x8] sm:$0xf]
        %v1554 = vld [vmem:[%s1550 + $0xc] sm:$0xf]
        %v1555 = vld [vmem:[%s1550 + $0x10] sm:$0xf]
        %v1556 = vld [vmem:[%s1550 + $0x14] sm:$0xf]
        %v1557 = vld [vmem:[%s1550 + $0x18] sm:$0xf]
        %v1558 = vld [vmem:[%s1550 + $0x1c] sm:$0xf]
        %v1559 = vld [vmem:[%s1550 + $0x20] sm:$0xf]
        %v1560 = vld [vmem:[%s1550 + $0x24] sm:$0xf]
        %v1561 = vld [vmem:[%s1550 + $0x28] sm:$0xf]
        %v1562 = vld [vmem:[%s1550 + $0x2c] sm:$0xf]
        %v1563 = vld [vmem:[%s1550 + $0x30] sm:$0xf]
        %v1564 = vld [vmem:[%s1550 + $0x34] sm:$0xf]
        %v1565 = vld [vmem:[%s1550 + $0x38] sm:$0xf]
        %v1566 = vld [vmem:[%s1550 + $0x3c] sm:$0xf]
        %v1567 = vunpack.c.l.b16 %v1497
        %v1568 = vunpack.c.l.b16 %v1500
        %v1569 = vunpack.c.l.b16 %v1504
        %v1570 = vunpack.c.l.b16 %v1507
        %v1571 = vunpack.c.l.b16 %v1511
        %v1572 = vunpack.c.l.b16 %v1514
        %v1573 = vunpack.c.l.b16 %v1518
        %v1574 = vunpack.c.l.b16 %v1521
        %v1575 = vunpack.c.l.b16 %v1525
        %v1576 = vunpack.c.l.b16 %v1528
        %v1577 = vunpack.c.l.b16 %v1532
        %v1578 = vunpack.c.l.b16 %v1535
        %v1579 = vunpack.c.l.b16 %v1539
        %v1580 = vunpack.c.l.b16 %v1542
        %v1581 = vunpack.c.l.b16 %v1546
        %v1582 = vunpack.c.l.b16 %v1549
        %v1583 = vpack.c.b16 %v1568, %v1567
        %v1584 = vpack.c.b16 %v1570, %v1569
        %v1585 = vpack.c.b16 %v1572, %v1571
        %v1586 = vpack.c.b16 %v1574, %v1573
        %v1587 = vpack.c.b16 %v1576, %v1575
        %v1588 = vpack.c.b16 %v1578, %v1577
        %v1589 = vpack.c.b16 %v1580, %v1579
        %v1590 = vpack.c.b16 %v1582, %v1581
        %v1615 = vunpack.c.l.b16 %v1551
        %v1616 = vunpack.c.l.b16 %v1552
        %v1617 = vunpack.c.l.b16 %v1553
        %v1618 = vunpack.c.l.b16 %v1554
        %v1619 = vunpack.c.l.b16 %v1555
        %v1620 = vunpack.c.l.b16 %v1556
        %v1621 = vunpack.c.l.b16 %v1557
        %v1622 = vunpack.c.l.b16 %v1558
        %v1623 = vunpack.c.l.b16 %v1559
        %v1624 = vunpack.c.l.b16 %v1560
        %v1625 = vunpack.c.l.b16 %v1561
        %v1626 = vunpack.c.l.b16 %v1562
        %v1627 = vunpack.c.l.b16 %v1563
        %v1628 = vunpack.c.l.b16 %v1564
        %v1629 = vunpack.c.l.b16 %v1565
        %v1630 = vunpack.c.l.b16 %v1566
        %v1631 = vpack.c.b16 %v1616, %v1615
        %v1632 = vpack.c.b16 %v1618, %v1617
        %v1633 = vpack.c.b16 %v1620, %v1619
        %v1634 = vpack.c.b16 %v1622, %v1621
        %v1635 = vpack.c.b16 %v1624, %v1623
        %v1636 = vpack.c.b16 %v1626, %v1625
        %v1637 = vpack.c.b16 %v1628, %v1627
        %v1638 = vpack.c.b16 %v1630, %v1629
        %1647 = vmatprep.subr.bf16.mxu0 0
        %1648 = vmatpush1.bf16.msra.mxu0 %v1638
        %1649 = vmatprep.subr.bf16.mxu0 0
        %1650 = vmatpush1.bf16.msra.mxu0 %v1637
        %1651 = vmatprep.subr.bf16.mxu0 0
        %1652 = vmatpush1.bf16.msra.mxu0 %v1636
        %1653 = vmatprep.subr.bf16.mxu0 0
        %1654 = vmatpush1.bf16.msra.mxu0 %v1635
        %1655 = vmatprep.subr.bf16.mxu0 0
        %1656 = vmatpush1.bf16.msra.mxu0 %v1634
        %1657 = vmatprep.subr.bf16.mxu0 0
        %1658 = vmatpush1.bf16.msra.mxu0 %v1633
        %1659 = vmatprep.subr.bf16.mxu0 0
        %1660 = vmatpush1.bf16.msra.mxu0 %v1632
        %1661 = vmatprep.subr.bf16.mxu0 0
        %1662 = vmatpush1.bf16.msra.mxu0 %v1631
        %1663 = vmatprep.subr.bf16.mxu0 0
        %1664 = vmatpush2.bf16.msra.mxu0 0
        %1665 = vmatprep.subr.bf16.mxu0 0
        %1666 = vmatpush2.bf16.msra.mxu0 0
        %1667 = vmatprep.subr.bf16.mxu0 0
        %1668 = vmatpush2.bf16.msra.mxu0 0
        %1669 = vmatprep.subr.bf16.mxu0 0
        %1670 = vmatpush2.bf16.msra.mxu0 0
        %1671 = vmatprep.subr.bf16.mxu0 0
        %1672 = vmatpush2.bf16.msra.mxu0 0
        %1673 = vmatprep.subr.bf16.mxu0 0
        %1674 = vmatpush2.bf16.msra.mxu0 0
        %1675 = vmatprep.subr.bf16.mxu0 0
        %1676 = vmatpush2.bf16.msra.mxu0 0
        %1677 = vmatprep.subr.bf16.mxu0 0
        %1678 = vmatpush2.bf16.msra.mxu0 0
        %1679 = vmatprep.mubr.bf16.mxu0 0
        %1680 = vmatmul.mubr.bf16.gmra.mxu0 %v1583
        %v1681 = vpop.f32.mrf.mxu0
        %v1682 = vadd.f32 0.0, %v1681
        %v1683 = vpop.f32.mrf.mxu0
        %v1684 = vpop.f32.mrf.mxu0
        %v1685 = vadd.f32 0.0, %v1684
        %v1686 = vpop.f32.mrf.mxu0
        %1687 = vmatprep.mubr.bf16.mxu0 0
        %1688 = vmatmul.mubr.bf16.gmra.mxu0 %v1584
        %v1689 = vpop.f32.mrf.mxu0
        %v1690 = vadd.f32 0.0, %v1689
        %v1691 = vpop.f32.mrf.mxu0
        %v1692 = vpop.f32.mrf.mxu0
        %v1693 = vadd.f32 0.0, %v1692
        %v1694 = vpop.f32.mrf.mxu0
        %1695 = vmatprep.mubr.bf16.mxu0 0
        %1696 = vmatmul.mubr.bf16.gmra.mxu0 %v1585
        %v1697 = vpop.f32.mrf.mxu0
        %v1698 = vadd.f32 0.0, %v1697
        %v1699 = vpop.f32.mrf.mxu0
        %v1700 = vpop.f32.mrf.mxu0
        %v1701 = vadd.f32 0.0, %v1700
        %v1702 = vpop.f32.mrf.mxu0
        %1703 = vmatprep.mubr.bf16.mxu0 0
        %1704 = vmatmul.mubr.bf16.gmra.mxu0 %v1586
        %v1705 = vpop.f32.mrf.mxu0
        %v1706 = vadd.f32 0.0, %v1705
        %v1707 = vpop.f32.mrf.mxu0
        %v1708 = vpop.f32.mrf.mxu0
        %v1709 = vadd.f32 0.0, %v1708
        %v1710 = vpop.f32.mrf.mxu0
        %1711 = vmatprep.mubr.bf16.mxu0 0
        %1712 = vmatmul.mubr.bf16.gmra.mxu0 %v1587
        %v1713 = vpop.f32.mrf.mxu0
        %v1714 = vadd.f32 0.0, %v1713
        %v1715 = vpop.f32.mrf.mxu0
        %v1716 = vpop.f32.mrf.mxu0
        %v1717 = vadd.f32 0.0, %v1716
        %v1718 = vpop.f32.mrf.mxu0
        %1719 = vmatprep.mubr.bf16.mxu0 0
        %1720 = vmatmul.mubr.bf16.gmra.mxu0 %v1588
        %v1721 = vpop.f32.mrf.mxu0
        %v1722 = vadd.f32 0.0, %v1721
        %v1723 = vpop.f32.mrf.mxu0
        %v1724 = vpop.f32.mrf.mxu0
        %v1725 = vadd.f32 0.0, %v1724
        %v1726 = vpop.f32.mrf.mxu0
        %1727 = vmatprep.mubr.bf16.mxu0 0
        %1728 = vmatmul.mubr.bf16.gmra.mxu0 %v1589
        %v1729 = vpop.f32.mrf.mxu0
        %v1730 = vadd.f32 0.0, %v1729
        %v1731 = vpop.f32.mrf.mxu0
        %v1732 = vpop.f32.mrf.mxu0
        %v1733 = vadd.f32 0.0, %v1732
        %v1734 = vpop.f32.mrf.mxu0
        %1735 = vmatprep.mubr.bf16.mxu0 0
        %1736 = vmatmul.mubr.bf16.gmra.mxu0 %v1590
        %v1737 = vpop.f32.mrf.mxu0
        %v1738 = vadd.f32 0.0, %v1737
        %v1739 = vpop.f32.mrf.mxu0
        %v1740 = vpop.f32.mrf.mxu0
        %v1741 = vadd.f32 0.0, %v1740
        %v1742 = vpop.f32.mrf.mxu0
        %1743 = vdwg.mxu0
        %v1744 = vadd.f32 %v1467, %v1682
        %v1745 = vadd.f32 %v1468, %v1685
        %v1746 = vadd.f32 %v1469, %v1690
        %v1747 = vadd.f32 %v1470, %v1693
        %v1748 = vadd.f32 %v1471, %v1698
        %v1749 = vadd.f32 %v1472, %v1701
        %v1750 = vadd.f32 %v1473, %v1706
        %v1751 = vadd.f32 %v1474, %v1709
        %v1752 = vadd.f32 %v1475, %v1714
        %v1753 = vadd.f32 %v1476, %v1717
        %v1754 = vadd.f32 %v1477, %v1722
        %v1755 = vadd.f32 %v1478, %v1725
        %v1756 = vadd.f32 %v1479, %v1730
        %v1757 = vadd.f32 %v1480, %v1733
        %v1758 = vadd.f32 %v1481, %v1738
        %v1759 = vadd.f32 %v1482, %v1741
        %v1766 = vrot.slane %v481, 5
        %v1767 = vrot.slane %v1766, 4
        %v1768 = vrot.slane %v482, 5
        %v1769 = vsel %vm886, %v1767, %v1768
        %v1770 = vrot.slane %v1768, 4
        %v1771 = vrot.slane %v483, 5
        %v1772 = vsel %vm886, %v1770, %v1771
        %v1773 = vrot.slane %v487, 5
        %v1774 = vrot.slane %v1773, 4
        %v1775 = vrot.slane %v488, 5
        %v1776 = vsel %vm886, %v1774, %v1775
        %v1777 = vrot.slane %v1775, 4
        %v1778 = vrot.slane %v489, 5
        %v1779 = vsel %vm886, %v1777, %v1778
        %v1780 = vrot.slane %v493, 5
        %v1781 = vrot.slane %v1780, 4
        %v1782 = vrot.slane %v494, 5
        %v1783 = vsel %vm886, %v1781, %v1782
        %v1784 = vrot.slane %v1782, 4
        %v1785 = vrot.slane %v495, 5
        %v1786 = vsel %vm886, %v1784, %v1785
        %v1787 = vrot.slane %v499, 5
        %v1788 = vrot.slane %v1787, 4
        %v1789 = vrot.slane %v500, 5
        %v1790 = vsel %vm886, %v1788, %v1789
        %v1791 = vrot.slane %v1789, 4
        %v1792 = vrot.slane %v501, 5
        %v1793 = vsel %vm886, %v1791, %v1792
        %v1794 = vrot.slane %v505, 5
        %v1795 = vrot.slane %v1794, 4
        %v1796 = vrot.slane %v506, 5
        %v1797 = vsel %vm886, %v1795, %v1796
        %v1798 = vrot.slane %v1796, 4
        %v1799 = vrot.slane %v507, 5
        %v1800 = vsel %vm886, %v1798, %v1799
        %v1801 = vrot.slane %v511, 5
        %v1802 = vrot.slane %v1801, 4
        %v1803 = vrot.slane %v512, 5
        %v1804 = vsel %vm886, %v1802, %v1803
        %v1805 = vrot.slane %v1803, 4
        %v1806 = vrot.slane %v513, 5
        %v1807 = vsel %vm886, %v1805, %v1806
        %s1808 = scalar_lea.vmem [#allocation7], 192
        %v1809 = vld [vmem:[%s1808] sm:$0xf]
        %v1810 = vld [vmem:[%s1808 + $0x4] sm:$0xf]
        %v1811 = vld [vmem:[%s1808 + $0x8] sm:$0xf]
        %v1812 = vld [vmem:[%s1808 + $0xc] sm:$0xf]
        %v1813 = vld [vmem:[%s1808 + $0x10] sm:$0xf]
        %v1814 = vld [vmem:[%s1808 + $0x14] sm:$0xf]
        %v1815 = vld [vmem:[%s1808 + $0x18] sm:$0xf]
        %v1816 = vld [vmem:[%s1808 + $0x1c] sm:$0xf]
        %v1817 = vld [vmem:[%s1808 + $0x20] sm:$0xf]
        %v1818 = vld [vmem:[%s1808 + $0x24] sm:$0xf]
        %v1819 = vld [vmem:[%s1808 + $0x28] sm:$0xf]
        %v1820 = vld [vmem:[%s1808 + $0x2c] sm:$0xf]
        %v1821 = vld [vmem:[%s1808 + $0x30] sm:$0xf]
        %v1822 = vld [vmem:[%s1808 + $0x34] sm:$0xf]
        %v1823 = vld [vmem:[%s1808 + $0x38] sm:$0xf]
        %v1824 = vld [vmem:[%s1808 + $0x3c] sm:$0xf]
        %v1825 = vunpack.c.l.b16 %v1769
        %v1826 = vunpack.c.l.b16 %v1772
        %v1827 = vunpack.c.l.b16 %v1776
        %v1828 = vunpack.c.l.b16 %v1779
        %v1829 = vunpack.c.l.b16 %v1783
        %v1830 = vunpack.c.l.b16 %v1786
        %v1831 = vunpack.c.l.b16 %v1790
        %v1832 = vunpack.c.l.b16 %v1793
        %v1833 = vunpack.c.l.b16 %v1797
        %v1834 = vunpack.c.l.b16 %v1800
        %v1835 = vunpack.c.l.b16 %v1804
        %v1836 = vunpack.c.l.b16 %v1807
        %v1837 = vpack.c.b16 %v1826, %v1825
        %v1838 = vpack.c.b16 %v1828, %v1827
        %v1839 = vpack.c.b16 %v1830, %v1829
        %v1840 = vpack.c.b16 %v1832, %v1831
        %v1841 = vpack.c.b16 %v1834, %v1833
        %v1842 = vpack.c.b16 %v1836, %v1835
        %v1865 = vunpack.c.l.b16 %v1809
        %v1866 = vunpack.c.l.b16 %v1810
        %v1867 = vunpack.c.l.b16 %v1811
        %v1868 = vunpack.c.l.b16 %v1812
        %v1869 = vunpack.c.l.b16 %v1813
        %v1870 = vunpack.c.l.b16 %v1814
        %v1871 = vunpack.c.l.b16 %v1815
        %v1872 = vunpack.c.l.b16 %v1816
        %v1873 = vunpack.c.l.b16 %v1817
        %v1874 = vunpack.c.l.b16 %v1818
        %v1875 = vunpack.c.l.b16 %v1819
        %v1876 = vunpack.c.l.b16 %v1820
        %v1877 = vunpack.c.l.b16 %v1821
        %v1878 = vunpack.c.l.b16 %v1822
        %v1879 = vunpack.c.l.b16 %v1823
        %v1880 = vunpack.c.l.b16 %v1824
        %v1881 = vpack.c.b16 %v1866, %v1865
        %v1882 = vpack.c.b16 %v1868, %v1867
        %v1883 = vpack.c.b16 %v1870, %v1869
        %v1884 = vpack.c.b16 %v1872, %v1871
        %v1885 = vpack.c.b16 %v1874, %v1873
        %v1886 = vpack.c.b16 %v1876, %v1875
        %v1887 = vpack.c.b16 %v1878, %v1877
        %v1888 = vpack.c.b16 %v1880, %v1879
        %1897 = vmatprep.subr.bf16.mxu0 0
        %1898 = vmatpush1.bf16.msra.mxu0 %v1888
        %1899 = vmatprep.subr.bf16.mxu0 0
        %1900 = vmatpush1.bf16.msra.mxu0 %v1887
        %1901 = vmatprep.subr.bf16.mxu0 0
        %1902 = vmatpush1.bf16.msra.mxu0 %v1886
        %1903 = vmatprep.subr.bf16.mxu0 0
        %1904 = vmatpush1.bf16.msra.mxu0 %v1885
        %1905 = vmatprep.subr.bf16.mxu0 0
        %1906 = vmatpush1.bf16.msra.mxu0 %v1884
        %1907 = vmatprep.subr.bf16.mxu0 0
        %1908 = vmatpush1.bf16.msra.mxu0 %v1883
        %1909 = vmatprep.subr.bf16.mxu0 0
        %1910 = vmatpush1.bf16.msra.mxu0 %v1882
        %1911 = vmatprep.subr.bf16.mxu0 0
        %1912 = vmatpush1.bf16.msra.mxu0 %v1881
        %1913 = vmatprep.subr.bf16.mxu0 0
        %1914 = vmatpush2.bf16.msra.mxu0 0
        %1915 = vmatprep.subr.bf16.mxu0 0
        %1916 = vmatpush2.bf16.msra.mxu0 0
        %1917 = vmatprep.subr.bf16.mxu0 0
        %1918 = vmatpush2.bf16.msra.mxu0 0
        %1919 = vmatprep.subr.bf16.mxu0 0
        %1920 = vmatpush2.bf16.msra.mxu0 0
        %1921 = vmatprep.subr.bf16.mxu0 0
        %1922 = vmatpush2.bf16.msra.mxu0 0
        %1923 = vmatprep.subr.bf16.mxu0 0
        %1924 = vmatpush2.bf16.msra.mxu0 0
        %1925 = vmatprep.subr.bf16.mxu0 0
        %1926 = vmatpush2.bf16.msra.mxu0 0
        %1927 = vmatprep.subr.bf16.mxu0 0
        %1928 = vmatpush2.bf16.msra.mxu0 0
        %1929 = vmatprep.mubr.bf16.mxu0 0
        %1930 = vmatmul.mubr.bf16.gmra.mxu0 %v981
        %v1931 = vpop.f32.mrf.mxu0
        %v1932 = vadd.f32 0.0, %v1931
        %v1933 = vpop.f32.mrf.mxu0
        %v1934 = vpop.f32.mrf.mxu0
        %v1935 = vadd.f32 0.0, %v1934
        %v1936 = vpop.f32.mrf.mxu0
        %1937 = vmatprep.mubr.bf16.mxu0 0
        %1938 = vmatmul.mubr.bf16.gmra.mxu0 %v982
        %v1939 = vpop.f32.mrf.mxu0
        %v1940 = vadd.f32 0.0, %v1939
        %v1941 = vpop.f32.mrf.mxu0
        %v1942 = vpop.f32.mrf.mxu0
        %v1943 = vadd.f32 0.0, %v1942
        %v1944 = vpop.f32.mrf.mxu0
        %1945 = vmatprep.mubr.bf16.mxu0 0
        %1946 = vmatmul.mubr.bf16.gmra.mxu0 %v1837
        %v1947 = vpop.f32.mrf.mxu0
        %v1948 = vadd.f32 0.0, %v1947
        %v1949 = vpop.f32.mrf.mxu0
        %v1950 = vpop.f32.mrf.mxu0
        %v1951 = vadd.f32 0.0, %v1950
        %v1952 = vpop.f32.mrf.mxu0
        %1953 = vmatprep.mubr.bf16.mxu0 0
        %1954 = vmatmul.mubr.bf16.gmra.mxu0 %v1838
        %v1955 = vpop.f32.mrf.mxu0
        %v1956 = vadd.f32 0.0, %v1955
        %v1957 = vpop.f32.mrf.mxu0
        %v1958 = vpop.f32.mrf.mxu0
        %v1959 = vadd.f32 0.0, %v1958
        %v1960 = vpop.f32.mrf.mxu0
        %1961 = vmatprep.mubr.bf16.mxu0 0
        %1962 = vmatmul.mubr.bf16.gmra.mxu0 %v1839
        %v1963 = vpop.f32.mrf.mxu0
        %v1964 = vadd.f32 0.0, %v1963
        %v1965 = vpop.f32.mrf.mxu0
        %v1966 = vpop.f32.mrf.mxu0
        %v1967 = vadd.f32 0.0, %v1966
        %v1968 = vpop.f32.mrf.mxu0
        %1969 = vmatprep.mubr.bf16.mxu0 0
        %1970 = vmatmul.mubr.bf16.gmra.mxu0 %v1840
        %v1971 = vpop.f32.mrf.mxu0
        %v1972 = vadd.f32 0.0, %v1971
        %v1973 = vpop.f32.mrf.mxu0
        %v1974 = vpop.f32.mrf.mxu0
        %v1975 = vadd.f32 0.0, %v1974
        %v1976 = vpop.f32.mrf.mxu0
        %1977 = vmatprep.mubr.bf16.mxu0 0
        %1978 = vmatmul.mubr.bf16.gmra.mxu0 %v1841
        %v1979 = vpop.f32.mrf.mxu0
        %v1980 = vadd.f32 0.0, %v1979
        %v1981 = vpop.f32.mrf.mxu0
        %v1982 = vpop.f32.mrf.mxu0
        %v1983 = vadd.f32 0.0, %v1982
        %v1984 = vpop.f32.mrf.mxu0
        %1985 = vmatprep.mubr.bf16.mxu0 0
        %1986 = vmatmul.mubr.bf16.gmra.mxu0 %v1842
        %v1987 = vpop.f32.mrf.mxu0
        %v1988 = vadd.f32 0.0, %v1987
        %v1989 = vpop.f32.mrf.mxu0
        %v1990 = vpop.f32.mrf.mxu0
        %v1991 = vadd.f32 0.0, %v1990
        %v1992 = vpop.f32.mrf.mxu0
        %1993 = vdwg.mxu0
        %v1994 = vadd.f32 %v1744, %v1932
        %v1995 = vadd.f32 %v1745, %v1935
        %v1996 = vadd.f32 %v1746, %v1940
        %v1997 = vadd.f32 %v1747, %v1943
        %v1998 = vadd.f32 %v1748, %v1948
        %v1999 = vadd.f32 %v1749, %v1951
        %v2000 = vadd.f32 %v1750, %v1956
        %v2001 = vadd.f32 %v1751, %v1959
        %v2002 = vadd.f32 %v1752, %v1964
        %v2003 = vadd.f32 %v1753, %v1967
        %v2004 = vadd.f32 %v1754, %v1972
        %v2005 = vadd.f32 %v1755, %v1975
        %v2006 = vadd.f32 %v1756, %v1980
        %v2007 = vadd.f32 %v1757, %v1983
        %v2008 = vadd.f32 %v1758, %v1988
        %v2009 = vadd.f32 %v1759, %v1991
        %v2016 = vrot.slane %v482, 7
        %v2017 = vrot.slane %v2016, 4
        %v2018 = vrot.slane %v483, 7
        %v2019 = vsel %vm1493, %v2017, %v2018
        %v2020 = vrot.slane %v2018, 4
        %v2021 = vrot.slane %v484, 7
        %v2022 = vsel %vm1493, %v2020, %v2021
        %v2023 = vrot.slane %v488, 7
        %v2024 = vrot.slane %v2023, 4
        %v2025 = vrot.slane %v489, 7
        %v2026 = vsel %vm1493, %v2024, %v2025
        %v2027 = vrot.slane %v2025, 4
        %v2028 = vrot.slane %v490, 7
        %v2029 = vsel %vm1493, %v2027, %v2028
        %v2030 = vrot.slane %v494, 7
        %v2031 = vrot.slane %v2030, 4
        %v2032 = vrot.slane %v495, 7
        %v2033 = vsel %vm1493, %v2031, %v2032
        %v2034 = vrot.slane %v2032, 4
        %v2035 = vrot.slane %v496, 7
        %v2036 = vsel %vm1493, %v2034, %v2035
        %v2037 = vrot.slane %v500, 7
        %v2038 = vrot.slane %v2037, 4
        %v2039 = vrot.slane %v501, 7
        %v2040 = vsel %vm1493, %v2038, %v2039
        %v2041 = vrot.slane %v2039, 4
        %v2042 = vrot.slane %v502, 7
        %v2043 = vsel %vm1493, %v2041, %v2042
        %v2044 = vrot.slane %v506, 7
        %v2045 = vrot.slane %v2044, 4
        %v2046 = vrot.slane %v507, 7
        %v2047 = vsel %vm1493, %v2045, %v2046
        %v2048 = vrot.slane %v2046, 4
        %v2049 = vrot.slane %v508, 7
        %v2050 = vsel %vm1493, %v2048, %v2049
        %v2051 = vrot.slane %v512, 7
        %v2052 = vrot.slane %v2051, 4
        %v2053 = vrot.slane %v513, 7
        %v2054 = vsel %vm1493, %v2052, %v2053
        %v2055 = vrot.slane %v2053, 4
        %v2056 = vrot.slane %v514, 7
        %v2057 = vsel %vm1493, %v2055, %v2056
        %s2058 = scalar_lea.vmem [#allocation7], 320
        %v2059 = vld [vmem:[%s2058] sm:$0xf]
        %v2060 = vld [vmem:[%s2058 + $0x4] sm:$0xf]
        %v2061 = vld [vmem:[%s2058 + $0x8] sm:$0xf]
        %v2062 = vld [vmem:[%s2058 + $0xc] sm:$0xf]
        %v2063 = vld [vmem:[%s2058 + $0x10] sm:$0xf]
        %v2064 = vld [vmem:[%s2058 + $0x14] sm:$0xf]
        %v2065 = vld [vmem:[%s2058 + $0x18] sm:$0xf]
        %v2066 = vld [vmem:[%s2058 + $0x1c] sm:$0xf]
        %v2067 = vld [vmem:[%s2058 + $0x20] sm:$0xf]
        %v2068 = vld [vmem:[%s2058 + $0x24] sm:$0xf]
        %v2069 = vld [vmem:[%s2058 + $0x28] sm:$0xf]
        %v2070 = vld [vmem:[%s2058 + $0x2c] sm:$0xf]
        %v2071 = vld [vmem:[%s2058 + $0x30] sm:$0xf]
        %v2072 = vld [vmem:[%s2058 + $0x34] sm:$0xf]
        %v2073 = vld [vmem:[%s2058 + $0x38] sm:$0xf]
        %v2074 = vld [vmem:[%s2058 + $0x3c] sm:$0xf]
        %v2075 = vunpack.c.l.b16 %v2019
        %v2076 = vunpack.c.l.b16 %v2022
        %v2077 = vunpack.c.l.b16 %v2026
        %v2078 = vunpack.c.l.b16 %v2029
        %v2079 = vunpack.c.l.b16 %v2033
        %v2080 = vunpack.c.l.b16 %v2036
        %v2081 = vunpack.c.l.b16 %v2040
        %v2082 = vunpack.c.l.b16 %v2043
        %v2083 = vunpack.c.l.b16 %v2047
        %v2084 = vunpack.c.l.b16 %v2050
        %v2085 = vunpack.c.l.b16 %v2054
        %v2086 = vunpack.c.l.b16 %v2057
        %v2087 = vpack.c.b16 %v2076, %v2075
        %v2088 = vpack.c.b16 %v2078, %v2077
        %v2089 = vpack.c.b16 %v2080, %v2079
        %v2090 = vpack.c.b16 %v2082, %v2081
        %v2091 = vpack.c.b16 %v2084, %v2083
        %v2092 = vpack.c.b16 %v2086, %v2085
        %v2115 = vunpack.c.l.b16 %v2059
        %v2116 = vunpack.c.l.b16 %v2060
        %v2117 = vunpack.c.l.b16 %v2061
        %v2118 = vunpack.c.l.b16 %v2062
        %v2119 = vunpack.c.l.b16 %v2063
        %v2120 = vunpack.c.l.b16 %v2064
        %v2121 = vunpack.c.l.b16 %v2065
        %v2122 = vunpack.c.l.b16 %v2066
        %v2123 = vunpack.c.l.b16 %v2067
        %v2124 = vunpack.c.l.b16 %v2068
        %v2125 = vunpack.c.l.b16 %v2069
        %v2126 = vunpack.c.l.b16 %v2070
        %v2127 = vunpack.c.l.b16 %v2071
        %v2128 = vunpack.c.l.b16 %v2072
        %v2129 = vunpack.c.l.b16 %v2073
        %v2130 = vunpack.c.l.b16 %v2074
        %v2131 = vpack.c.b16 %v2116, %v2115
        %v2132 = vpack.c.b16 %v2118, %v2117
        %v2133 = vpack.c.b16 %v2120, %v2119
        %v2134 = vpack.c.b16 %v2122, %v2121
        %v2135 = vpack.c.b16 %v2124, %v2123
        %v2136 = vpack.c.b16 %v2126, %v2125
        %v2137 = vpack.c.b16 %v2128, %v2127
        %v2138 = vpack.c.b16 %v2130, %v2129
        %2147 = vmatprep.subr.bf16.mxu0 0
        %2148 = vmatpush1.bf16.msra.mxu0 %v2138
        %2149 = vmatprep.subr.bf16.mxu0 0
        %2150 = vmatpush1.bf16.msra.mxu0 %v2137
        %2151 = vmatprep.subr.bf16.mxu0 0
        %2152 = vmatpush1.bf16.msra.mxu0 %v2136
        %2153 = vmatprep.subr.bf16.mxu0 0
        %2154 = vmatpush1.bf16.msra.mxu0 %v2135
        %2155 = vmatprep.subr.bf16.mxu0 0
        %2156 = vmatpush1.bf16.msra.mxu0 %v2134
        %2157 = vmatprep.subr.bf16.mxu0 0
        %2158 = vmatpush1.bf16.msra.mxu0 %v2133
        %2159 = vmatprep.subr.bf16.mxu0 0
        %2160 = vmatpush1.bf16.msra.mxu0 %v2132
        %2161 = vmatprep.subr.bf16.mxu0 0
        %2162 = vmatpush1.bf16.msra.mxu0 %v2131
        %2163 = vmatprep.subr.bf16.mxu0 0
        %2164 = vmatpush2.bf16.msra.mxu0 0
        %2165 = vmatprep.subr.bf16.mxu0 0
        %2166 = vmatpush2.bf16.msra.mxu0 0
        %2167 = vmatprep.subr.bf16.mxu0 0
        %2168 = vmatpush2.bf16.msra.mxu0 0
        %2169 = vmatprep.subr.bf16.mxu0 0
        %2170 = vmatpush2.bf16.msra.mxu0 0
        %2171 = vmatprep.subr.bf16.mxu0 0
        %2172 = vmatpush2.bf16.msra.mxu0 0
        %2173 = vmatprep.subr.bf16.mxu0 0
        %2174 = vmatpush2.bf16.msra.mxu0 0
        %2175 = vmatprep.subr.bf16.mxu0 0
        %2176 = vmatpush2.bf16.msra.mxu0 0
        %2177 = vmatprep.subr.bf16.mxu0 0
        %2178 = vmatpush2.bf16.msra.mxu0 0
        %2179 = vmatprep.mubr.bf16.mxu0 0
        %2180 = vmatmul.mubr.bf16.gmra.mxu0 %v1589
        %v2181 = vpop.f32.mrf.mxu0
        %v2182 = vadd.f32 0.0, %v2181
        %v2183 = vpop.f32.mrf.mxu0
        %v2184 = vpop.f32.mrf.mxu0
        %v2185 = vadd.f32 0.0, %v2184
        %v2186 = vpop.f32.mrf.mxu0
        %2187 = vmatprep.mubr.bf16.mxu0 0
        %2188 = vmatmul.mubr.bf16.gmra.mxu0 %v1590
        %v2189 = vpop.f32.mrf.mxu0
        %v2190 = vadd.f32 0.0, %v2189
        %v2191 = vpop.f32.mrf.mxu0
        %v2192 = vpop.f32.mrf.mxu0
        %v2193 = vadd.f32 0.0, %v2192
        %v2194 = vpop.f32.mrf.mxu0
        %2195 = vmatprep.mubr.bf16.mxu0 0
        %2196 = vmatmul.mubr.bf16.gmra.mxu0 %v2087
        %v2197 = vpop.f32.mrf.mxu0
        %v2198 = vadd.f32 0.0, %v2197
        %v2199 = vpop.f32.mrf.mxu0
        %v2200 = vpop.f32.mrf.mxu0
        %v2201 = vadd.f32 0.0, %v2200
        %v2202 = vpop.f32.mrf.mxu0
        %2203 = vmatprep.mubr.bf16.mxu0 0
        %2204 = vmatmul.mubr.bf16.gmra.mxu0 %v2088
        %v2205 = vpop.f32.mrf.mxu0
        %v2206 = vadd.f32 0.0, %v2205
        %v2207 = vpop.f32.mrf.mxu0
        %v2208 = vpop.f32.mrf.mxu0
        %v2209 = vadd.f32 0.0, %v2208
        %v2210 = vpop.f32.mrf.mxu0
        %2211 = vmatprep.mubr.bf16.mxu0 0
        %2212 = vmatmul.mubr.bf16.gmra.mxu0 %v2089
        %v2213 = vpop.f32.mrf.mxu0
        %v2214 = vadd.f32 0.0, %v2213
        %v2215 = vpop.f32.mrf.mxu0
        %v2216 = vpop.f32.mrf.mxu0
        %v2217 = vadd.f32 0.0, %v2216
        %v2218 = vpop.f32.mrf.mxu0
        %2219 = vmatprep.mubr.bf16.mxu0 0
        %2220 = vmatmul.mubr.bf16.gmra.mxu0 %v2090
        %v2221 = vpop.f32.mrf.mxu0
        %v2222 = vadd.f32 0.0, %v2221
        %v2223 = vpop.f32.mrf.mxu0
        %v2224 = vpop.f32.mrf.mxu0
        %v2225 = vadd.f32 0.0, %v2224
        %v2226 = vpop.f32.mrf.mxu0
        %2227 = vmatprep.mubr.bf16.mxu0 0
        %2228 = vmatmul.mubr.bf16.gmra.mxu0 %v2091
        %v2229 = vpop.f32.mrf.mxu0
        %v2230 = vadd.f32 0.0, %v2229
        %v2231 = vpop.f32.mrf.mxu0
        %v2232 = vpop.f32.mrf.mxu0
        %v2233 = vadd.f32 0.0, %v2232
        %v2234 = vpop.f32.mrf.mxu0
        %2235 = vmatprep.mubr.bf16.mxu0 0
        %2236 = vmatmul.mubr.bf16.gmra.mxu0 %v2092
        %v2237 = vpop.f32.mrf.mxu0
        %v2238 = vadd.f32 0.0, %v2237
        %v2239 = vpop.f32.mrf.mxu0
        %v2240 = vpop.f32.mrf.mxu0
        %v2241 = vadd.f32 0.0, %v2240
        %v2242 = vpop.f32.mrf.mxu0
        %2243 = vdwg.mxu0
        %v2244 = vadd.f32 %v1994, %v2182
        %v2245 = vadd.f32 %v1995, %v2185
        %v2246 = vadd.f32 %v1996, %v2190
        %v2247 = vadd.f32 %v1997, %v2193
        %v2248 = vadd.f32 %v1998, %v2198
        %v2249 = vadd.f32 %v1999, %v2201
        %v2250 = vadd.f32 %v2000, %v2206
        %v2251 = vadd.f32 %v2001, %v2209
        %v2252 = vadd.f32 %v2002, %v2214
        %v2253 = vadd.f32 %v2003, %v2217
        %v2254 = vadd.f32 %v2004, %v2222
        %v2255 = vadd.f32 %v2005, %v2225
        %v2256 = vadd.f32 %v2006, %v2230
        %v2257 = vadd.f32 %v2007, %v2233
        %v2258 = vadd.f32 %v2008, %v2238
        %v2259 = vadd.f32 %v2009, %v2241
        %v2278 = vrot.slane %v516, 5
        %v2279 = vrot.slane %v2278, 4
        %v2280 = vrot.slane %v517, 5
        %v2281 = vsel %vm886, %v2279, %v2280
        %v2282 = vrot.slane %v2280, 4
        %v2283 = vrot.slane %v518, 5
        %v2284 = vsel %vm886, %v2282, %v2283
        %v2285 = vrot.slane %v520, 5
        %v2286 = vrot.slane %v2285, 4
        %v2287 = vrot.slane %v521, 5
        %v2288 = vsel %vm886, %v2286, %v2287
        %v2289 = vrot.slane %v2287, 4
        %v2290 = vrot.slane %v522, 5
        %v2291 = vsel %vm886, %v2289, %v2290
        %v2292 = vrot.slane %v524, 5
        %v2293 = vrot.slane %v2292, 4
        %v2294 = vrot.slane %v525, 5
        %v2295 = vsel %vm886, %v2293, %v2294
        %v2296 = vrot.slane %v2294, 4
        %v2297 = vrot.slane %v526, 5
        %v2298 = vsel %vm886, %v2296, %v2297
        %v2299 = vrot.slane %v528, 5
        %v2300 = vrot.slane %v2299, 4
        %v2301 = vrot.slane %v529, 5
        %v2302 = vsel %vm886, %v2300, %v2301
        %v2303 = vrot.slane %v2301, 4
        %v2304 = vrot.slane %v530, 5
        %v2305 = vsel %vm886, %v2303, %v2304
        %v2306 = vrot.slane %v533, 5
        %v2307 = vrot.slane %v2306, 4
        %v2308 = vrot.slane %v534, 5
        %v2309 = vsel %vm886, %v2307, %v2308
        %v2310 = vrot.slane %v2308, 4
        %v2311 = vrot.slane %v535, 5
        %v2312 = vsel %vm886, %v2310, %v2311
        %v2313 = vrot.slane %v539, 5
        %v2314 = vrot.slane %v2313, 4
        %v2315 = vrot.slane %v540, 5
        %v2316 = vsel %vm886, %v2314, %v2315
        %v2317 = vrot.slane %v2315, 4
        %v2318 = vrot.slane %v541, 5
        %v2319 = vsel %vm886, %v2317, %v2318
        %s2320 = scalar_lea.vmem [#allocation7], 384
        %v2321 = vld [vmem:[%s2320] sm:$0xf]
        %v2322 = vld [vmem:[%s2320 + $0x4] sm:$0xf]
        %v2323 = vld [vmem:[%s2320 + $0x8] sm:$0xf]
        %v2324 = vld [vmem:[%s2320 + $0xc] sm:$0xf]
        %v2325 = vld [vmem:[%s2320 + $0x10] sm:$0xf]
        %v2326 = vld [vmem:[%s2320 + $0x14] sm:$0xf]
        %v2327 = vld [vmem:[%s2320 + $0x18] sm:$0xf]
        %v2328 = vld [vmem:[%s2320 + $0x1c] sm:$0xf]
        %v2329 = vld [vmem:[%s2320 + $0x20] sm:$0xf]
        %v2330 = vld [vmem:[%s2320 + $0x24] sm:$0xf]
        %v2331 = vld [vmem:[%s2320 + $0x28] sm:$0xf]
        %v2332 = vld [vmem:[%s2320 + $0x2c] sm:$0xf]
        %v2333 = vld [vmem:[%s2320 + $0x30] sm:$0xf]
        %v2334 = vld [vmem:[%s2320 + $0x34] sm:$0xf]
        %v2335 = vld [vmem:[%s2320 + $0x38] sm:$0xf]
        %v2336 = vld [vmem:[%s2320 + $0x3c] sm:$0xf]
        %v2337 = vunpack.c.l.b16 %v2281
        %v2338 = vunpack.c.l.b16 %v2284
        %v2339 = vunpack.c.l.b16 %v2288
        %v2340 = vunpack.c.l.b16 %v2291
        %v2341 = vunpack.c.l.b16 %v2295
        %v2342 = vunpack.c.l.b16 %v2298
        %v2343 = vunpack.c.l.b16 %v2302
        %v2344 = vunpack.c.l.b16 %v2305
        %v2345 = vunpack.c.l.b16 %v2309
        %v2346 = vunpack.c.l.b16 %v2312
        %v2347 = vunpack.c.l.b16 %v2316
        %v2348 = vunpack.c.l.b16 %v2319
        %v2349 = vpack.c.b16 %v2338, %v2337
        %v2350 = vpack.c.b16 %v2340, %v2339
        %v2351 = vpack.c.b16 %v2342, %v2341
        %v2352 = vpack.c.b16 %v2344, %v2343
        %v2353 = vpack.c.b16 %v2346, %v2345
        %v2354 = vpack.c.b16 %v2348, %v2347
        %v2377 = vunpack.c.l.b16 %v2321
        %v2378 = vunpack.c.l.b16 %v2322
        %v2379 = vunpack.c.l.b16 %v2323
        %v2380 = vunpack.c.l.b16 %v2324
        %v2381 = vunpack.c.l.b16 %v2325
        %v2382 = vunpack.c.l.b16 %v2326
        %v2383 = vunpack.c.l.b16 %v2327
        %v2384 = vunpack.c.l.b16 %v2328
        %v2385 = vunpack.c.l.b16 %v2329
        %v2386 = vunpack.c.l.b16 %v2330
        %v2387 = vunpack.c.l.b16 %v2331
        %v2388 = vunpack.c.l.b16 %v2332
        %v2389 = vunpack.c.l.b16 %v2333
        %v2390 = vunpack.c.l.b16 %v2334
        %v2391 = vunpack.c.l.b16 %v2335
        %v2392 = vunpack.c.l.b16 %v2336
        %v2393 = vpack.c.b16 %v2378, %v2377
        %v2394 = vpack.c.b16 %v2380, %v2379
        %v2395 = vpack.c.b16 %v2382, %v2381
        %v2396 = vpack.c.b16 %v2384, %v2383
        %v2397 = vpack.c.b16 %v2386, %v2385
        %v2398 = vpack.c.b16 %v2388, %v2387
        %v2399 = vpack.c.b16 %v2390, %v2389
        %v2400 = vpack.c.b16 %v2392, %v2391
        %2409 = vmatprep.subr.bf16.mxu0 0
        %2410 = vmatpush1.bf16.msra.mxu0 %v2400
        %2411 = vmatprep.subr.bf16.mxu0 0
        %2412 = vmatpush1.bf16.msra.mxu0 %v2399
        %2413 = vmatprep.subr.bf16.mxu0 0
        %2414 = vmatpush1.bf16.msra.mxu0 %v2398
        %2415 = vmatprep.subr.bf16.mxu0 0
        %2416 = vmatpush1.bf16.msra.mxu0 %v2397
        %2417 = vmatprep.subr.bf16.mxu0 0
        %2418 = vmatpush1.bf16.msra.mxu0 %v2396
        %2419 = vmatprep.subr.bf16.mxu0 0
        %2420 = vmatpush1.bf16.msra.mxu0 %v2395
        %2421 = vmatprep.subr.bf16.mxu0 0
        %2422 = vmatpush1.bf16.msra.mxu0 %v2394
        %2423 = vmatprep.subr.bf16.mxu0 0
        %2424 = vmatpush1.bf16.msra.mxu0 %v2393
        %2425 = vmatprep.subr.bf16.mxu0 0
        %2426 = vmatpush2.bf16.msra.mxu0 0
        %2427 = vmatprep.subr.bf16.mxu0 0
        %2428 = vmatpush2.bf16.msra.mxu0 0
        %2429 = vmatprep.subr.bf16.mxu0 0
        %2430 = vmatpush2.bf16.msra.mxu0 0
        %2431 = vmatprep.subr.bf16.mxu0 0
        %2432 = vmatpush2.bf16.msra.mxu0 0
        %2433 = vmatprep.subr.bf16.mxu0 0
        %2434 = vmatpush2.bf16.msra.mxu0 0
        %2435 = vmatprep.subr.bf16.mxu0 0
        %2436 = vmatpush2.bf16.msra.mxu0 0
        %2437 = vmatprep.subr.bf16.mxu0 0
        %2438 = vmatpush2.bf16.msra.mxu0 0
        %2439 = vmatprep.subr.bf16.mxu0 0
        %2440 = vmatpush2.bf16.msra.mxu0 0
        %2441 = vmatprep.mubr.bf16.mxu0 0
        %2442 = vmatmul.mubr.bf16.gmra.mxu0 %v1841
        %v2443 = vpop.f32.mrf.mxu0
        %v2444 = vadd.f32 0.0, %v2443
        %v2445 = vpop.f32.mrf.mxu0
        %v2446 = vpop.f32.mrf.mxu0
        %v2447 = vadd.f32 0.0, %v2446
        %v2448 = vpop.f32.mrf.mxu0
        %2449 = vmatprep.mubr.bf16.mxu0 0
        %2450 = vmatmul.mubr.bf16.gmra.mxu0 %v1842
        %v2451 = vpop.f32.mrf.mxu0
        %v2452 = vadd.f32 0.0, %v2451
        %v2453 = vpop.f32.mrf.mxu0
        %v2454 = vpop.f32.mrf.mxu0
        %v2455 = vadd.f32 0.0, %v2454
        %v2456 = vpop.f32.mrf.mxu0
        %2457 = vmatprep.mubr.bf16.mxu0 0
        %2458 = vmatmul.mubr.bf16.gmra.mxu0 %v2349
        %v2459 = vpop.f32.mrf.mxu0
        %v2460 = vadd.f32 0.0, %v2459
        %v2461 = vpop.f32.mrf.mxu0
        %v2462 = vpop.f32.mrf.mxu0
        %v2463 = vadd.f32 0.0, %v2462
        %v2464 = vpop.f32.mrf.mxu0
        %2465 = vmatprep.mubr.bf16.mxu0 0
        %2466 = vmatmul.mubr.bf16.gmra.mxu0 %v2350
        %v2467 = vpop.f32.mrf.mxu0
        %v2468 = vadd.f32 0.0, %v2467
        %v2469 = vpop.f32.mrf.mxu0
        %v2470 = vpop.f32.mrf.mxu0
        %v2471 = vadd.f32 0.0, %v2470
        %v2472 = vpop.f32.mrf.mxu0
        %2473 = vmatprep.mubr.bf16.mxu0 0
        %2474 = vmatmul.mubr.bf16.gmra.mxu0 %v2351
        %v2475 = vpop.f32.mrf.mxu0
        %v2476 = vadd.f32 0.0, %v2475
        %v2477 = vpop.f32.mrf.mxu0
        %v2478 = vpop.f32.mrf.mxu0
        %v2479 = vadd.f32 0.0, %v2478
        %v2480 = vpop.f32.mrf.mxu0
        %2481 = vmatprep.mubr.bf16.mxu0 0
        %2482 = vmatmul.mubr.bf16.gmra.mxu0 %v2352
        %v2483 = vpop.f32.mrf.mxu0
        %v2484 = vadd.f32 0.0, %v2483
        %v2485 = vpop.f32.mrf.mxu0
        %v2486 = vpop.f32.mrf.mxu0
        %v2487 = vadd.f32 0.0, %v2486
        %v2488 = vpop.f32.mrf.mxu0
        %2489 = vmatprep.mubr.bf16.mxu0 0
        %2490 = vmatmul.mubr.bf16.gmra.mxu0 %v2353
        %v2491 = vpop.f32.mrf.mxu0
        %v2492 = vadd.f32 0.0, %v2491
        %v2493 = vpop.f32.mrf.mxu0
        %v2494 = vpop.f32.mrf.mxu0
        %v2495 = vadd.f32 0.0, %v2494
        %v2496 = vpop.f32.mrf.mxu0
        %2497 = vmatprep.mubr.bf16.mxu0 0
        %2498 = vmatmul.mubr.bf16.gmra.mxu0 %v2354
        %v2499 = vpop.f32.mrf.mxu0
        %v2500 = vadd.f32 0.0, %v2499
        %v2501 = vpop.f32.mrf.mxu0
        %v2502 = vpop.f32.mrf.mxu0
        %v2503 = vadd.f32 0.0, %v2502
        %v2504 = vpop.f32.mrf.mxu0
        %2505 = vdwg.mxu0
        %v2506 = vadd.f32 %v2244, %v2444
        %v2507 = vadd.f32 %v2245, %v2447
        %v2508 = vadd.f32 %v2246, %v2452
        %v2509 = vadd.f32 %v2247, %v2455
        %v2510 = vadd.f32 %v2248, %v2460
        %v2511 = vadd.f32 %v2249, %v2463
        %v2512 = vadd.f32 %v2250, %v2468
        %v2513 = vadd.f32 %v2251, %v2471
        %v2514 = vadd.f32 %v2252, %v2476
        %v2515 = vadd.f32 %v2253, %v2479
        %v2516 = vadd.f32 %v2254, %v2484
        %v2517 = vadd.f32 %v2255, %v2487
        %v2518 = vadd.f32 %v2256, %v2492
        %v2519 = vadd.f32 %v2257, %v2495
        %v2520 = vadd.f32 %v2258, %v2500
        %v2521 = vadd.f32 %v2259, %v2503
        %s2522 = scalar_lea.vmem [#allocation7], 448
        %v2523 = vld [vmem:[%s2522] sm:$0xf]
        %v2524 = vld [vmem:[%s2522 + $0x4] sm:$0xf]
        %v2525 = vld [vmem:[%s2522 + $0x8] sm:$0xf]
        %v2526 = vld [vmem:[%s2522 + $0xc] sm:$0xf]
        %v2527 = vld [vmem:[%s2522 + $0x10] sm:$0xf]
        %v2528 = vld [vmem:[%s2522 + $0x14] sm:$0xf]
        %v2529 = vld [vmem:[%s2522 + $0x18] sm:$0xf]
        %v2530 = vld [vmem:[%s2522 + $0x1c] sm:$0xf]
        %v2531 = vld [vmem:[%s2522 + $0x20] sm:$0xf]
        %v2532 = vld [vmem:[%s2522 + $0x24] sm:$0xf]
        %v2533 = vld [vmem:[%s2522 + $0x28] sm:$0xf]
        %v2534 = vld [vmem:[%s2522 + $0x2c] sm:$0xf]
        %v2535 = vld [vmem:[%s2522 + $0x30] sm:$0xf]
        %v2536 = vld [vmem:[%s2522 + $0x34] sm:$0xf]
        %v2537 = vld [vmem:[%s2522 + $0x38] sm:$0xf]
        %v2538 = vld [vmem:[%s2522 + $0x3c] sm:$0xf]
        %v2539 = vunpack.c.l.b16 %v517
        %v2540 = vunpack.c.l.b16 %v518
        %v2541 = vunpack.c.l.b16 %v521
        %v2542 = vunpack.c.l.b16 %v522
        %v2543 = vunpack.c.l.b16 %v525
        %v2544 = vunpack.c.l.b16 %v526
        %v2545 = vunpack.c.l.b16 %v529
        %v2546 = vunpack.c.l.b16 %v530
        %v2547 = vunpack.c.l.b16 %v534
        %v2548 = vunpack.c.l.b16 %v535
        %v2549 = vunpack.c.l.b16 %v540
        %v2550 = vunpack.c.l.b16 %v541
        %v2551 = vpack.c.b16 %v2540, %v2539
        %v2552 = vpack.c.b16 %v2542, %v2541
        %v2553 = vpack.c.b16 %v2544, %v2543
        %v2554 = vpack.c.b16 %v2546, %v2545
        %v2555 = vpack.c.b16 %v2548, %v2547
        %v2556 = vpack.c.b16 %v2550, %v2549
        %v2579 = vunpack.c.l.b16 %v2523
        %v2580 = vunpack.c.l.b16 %v2524
        %v2581 = vunpack.c.l.b16 %v2525
        %v2582 = vunpack.c.l.b16 %v2526
        %v2583 = vunpack.c.l.b16 %v2527
        %v2584 = vunpack.c.l.b16 %v2528
        %v2585 = vunpack.c.l.b16 %v2529
        %v2586 = vunpack.c.l.b16 %v2530
        %v2587 = vunpack.c.l.b16 %v2531
        %v2588 = vunpack.c.l.b16 %v2532
        %v2589 = vunpack.c.l.b16 %v2533
        %v2590 = vunpack.c.l.b16 %v2534
        %v2591 = vunpack.c.l.b16 %v2535
        %v2592 = vunpack.c.l.b16 %v2536
        %v2593 = vunpack.c.l.b16 %v2537
        %v2594 = vunpack.c.l.b16 %v2538
        %v2595 = vpack.c.b16 %v2580, %v2579
        %v2596 = vpack.c.b16 %v2582, %v2581
        %v2597 = vpack.c.b16 %v2584, %v2583
        %v2598 = vpack.c.b16 %v2586, %v2585
        %v2599 = vpack.c.b16 %v2588, %v2587
        %v2600 = vpack.c.b16 %v2590, %v2589
        %v2601 = vpack.c.b16 %v2592, %v2591
        %v2602 = vpack.c.b16 %v2594, %v2593
        %2611 = vmatprep.subr.bf16.mxu0 0
        %2612 = vmatpush1.bf16.msra.mxu0 %v2602
        %2613 = vmatprep.subr.bf16.mxu0 0
        %2614 = vmatpush1.bf16.msra.mxu0 %v2601
        %2615 = vmatprep.subr.bf16.mxu0 0
        %2616 = vmatpush1.bf16.msra.mxu0 %v2600
        %2617 = vmatprep.subr.bf16.mxu0 0
        %2618 = vmatpush1.bf16.msra.mxu0 %v2599
        %2619 = vmatprep.subr.bf16.mxu0 0
        %2620 = vmatpush1.bf16.msra.mxu0 %v2598
        %2621 = vmatprep.subr.bf16.mxu0 0
        %2622 = vmatpush1.bf16.msra.mxu0 %v2597
        %2623 = vmatprep.subr.bf16.mxu0 0
        %2624 = vmatpush1.bf16.msra.mxu0 %v2596
        %2625 = vmatprep.subr.bf16.mxu0 0
        %2626 = vmatpush1.bf16.msra.mxu0 %v2595
        %2627 = vmatprep.subr.bf16.mxu0 0
        %2628 = vmatpush2.bf16.msra.mxu0 0
        %2629 = vmatprep.subr.bf16.mxu0 0
        %2630 = vmatpush2.bf16.msra.mxu0 0
        %2631 = vmatprep.subr.bf16.mxu0 0
        %2632 = vmatpush2.bf16.msra.mxu0 0
        %2633 = vmatprep.subr.bf16.mxu0 0
        %2634 = vmatpush2.bf16.msra.mxu0 0
        %2635 = vmatprep.subr.bf16.mxu0 0
        %2636 = vmatpush2.bf16.msra.mxu0 0
        %2637 = vmatprep.subr.bf16.mxu0 0
        %2638 = vmatpush2.bf16.msra.mxu0 0
        %2639 = vmatprep.subr.bf16.mxu0 0
        %2640 = vmatpush2.bf16.msra.mxu0 0
        %2641 = vmatprep.subr.bf16.mxu0 0
        %2642 = vmatpush2.bf16.msra.mxu0 0
        %2643 = vmatprep.mubr.bf16.mxu0 0
        %2644 = vmatmul.mubr.bf16.gmra.mxu0 %v634
        %v2645 = vpop.f32.mrf.mxu0
        %v2646 = vadd.f32 0.0, %v2645
        %v2647 = vpop.f32.mrf.mxu0
        %v2648 = vpop.f32.mrf.mxu0
        %v2649 = vadd.f32 0.0, %v2648
        %v2650 = vpop.f32.mrf.mxu0
        %2651 = vmatprep.mubr.bf16.mxu0 0
        %2652 = vmatmul.mubr.bf16.gmra.mxu0 %v635
        %v2653 = vpop.f32.mrf.mxu0
        %v2654 = vadd.f32 0.0, %v2653
        %v2655 = vpop.f32.mrf.mxu0
        %v2656 = vpop.f32.mrf.mxu0
        %v2657 = vadd.f32 0.0, %v2656
        %v2658 = vpop.f32.mrf.mxu0
        %2659 = vmatprep.mubr.bf16.mxu0 0
        %2660 = vmatmul.mubr.bf16.gmra.mxu0 %v2551
        %v2661 = vpop.f32.mrf.mxu0
        %v2662 = vadd.f32 0.0, %v2661
        %v2663 = vpop.f32.mrf.mxu0
        %v2664 = vpop.f32.mrf.mxu0
        %v2665 = vadd.f32 0.0, %v2664
        %v2666 = vpop.f32.mrf.mxu0
        %2667 = vmatprep.mubr.bf16.mxu0 0
        %2668 = vmatmul.mubr.bf16.gmra.mxu0 %v2552
        %v2669 = vpop.f32.mrf.mxu0
        %v2670 = vadd.f32 0.0, %v2669
        %v2671 = vpop.f32.mrf.mxu0
        %v2672 = vpop.f32.mrf.mxu0
        %v2673 = vadd.f32 0.0, %v2672
        %v2674 = vpop.f32.mrf.mxu0
        %2675 = vmatprep.mubr.bf16.mxu0 0
        %2676 = vmatmul.mubr.bf16.gmra.mxu0 %v2553
        %v2677 = vpop.f32.mrf.mxu0
        %v2678 = vadd.f32 0.0, %v2677
        %v2679 = vpop.f32.mrf.mxu0
        %v2680 = vpop.f32.mrf.mxu0
        %v2681 = vadd.f32 0.0, %v2680
        %v2682 = vpop.f32.mrf.mxu0
        %2683 = vmatprep.mubr.bf16.mxu0 0
        %2684 = vmatmul.mubr.bf16.gmra.mxu0 %v2554
        %v2685 = vpop.f32.mrf.mxu0
        %v2686 = vadd.f32 0.0, %v2685
        %v2687 = vpop.f32.mrf.mxu0
        %v2688 = vpop.f32.mrf.mxu0
        %v2689 = vadd.f32 0.0, %v2688
        %v2690 = vpop.f32.mrf.mxu0
        %2691 = vmatprep.mubr.bf16.mxu0 0
        %2692 = vmatmul.mubr.bf16.gmra.mxu0 %v2555
        %v2693 = vpop.f32.mrf.mxu0
        %v2694 = vadd.f32 0.0, %v2693
        %v2695 = vpop.f32.mrf.mxu0
        %v2696 = vpop.f32.mrf.mxu0
        %v2697 = vadd.f32 0.0, %v2696
        %v2698 = vpop.f32.mrf.mxu0
        %2699 = vmatprep.mubr.bf16.mxu0 0
        %2700 = vmatmul.mubr.bf16.gmra.mxu0 %v2556
        %v2701 = vpop.f32.mrf.mxu0
        %v2702 = vadd.f32 0.0, %v2701
        %v2703 = vpop.f32.mrf.mxu0
        %v2704 = vpop.f32.mrf.mxu0
        %v2705 = vadd.f32 0.0, %v2704
        %v2706 = vpop.f32.mrf.mxu0
        %2707 = vdwg.mxu0
        %v2708 = vadd.f32 %v2506, %v2646
        %v2709 = vadd.f32 %v2507, %v2649
        %v2710 = vadd.f32 %v2508, %v2654
        %v2711 = vadd.f32 %v2509, %v2657
        %v2712 = vadd.f32 %v2510, %v2662
        %v2713 = vadd.f32 %v2511, %v2665
        %v2714 = vadd.f32 %v2512, %v2670
        %v2715 = vadd.f32 %v2513, %v2673
        %v2716 = vadd.f32 %v2514, %v2678
        %v2717 = vadd.f32 %v2515, %v2681
        %v2718 = vadd.f32 %v2516, %v2686
        %v2719 = vadd.f32 %v2517, %v2689
        %v2720 = vadd.f32 %v2518, %v2694
        %v2721 = vadd.f32 %v2519, %v2697
        %v2722 = vadd.f32 %v2520, %v2702
        %v2723 = vadd.f32 %v2521, %v2705
        %v2730 = vrot.slane %v517, 7
        %v2731 = vrot.slane %v2730, 4
        %v2732 = vrot.slane %v518, 7
        %v2733 = vsel %vm1493, %v2731, %v2732
        %v2734 = vrot.slane %v2732, 4
        %v2735 = vrot.slane %v519, 7
        %v2736 = vsel %vm1493, %v2734, %v2735
        %v2737 = vrot.slane %v521, 7
        %v2738 = vrot.slane %v2737, 4
        %v2739 = vrot.slane %v522, 7
        %v2740 = vsel %vm1493, %v2738, %v2739
        %v2741 = vrot.slane %v2739, 4
        %v2742 = vrot.slane %v523, 7
        %v2743 = vsel %vm1493, %v2741, %v2742
        %v2744 = vrot.slane %v525, 7
        %v2745 = vrot.slane %v2744, 4
        %v2746 = vrot.slane %v526, 7
        %v2747 = vsel %vm1493, %v2745, %v2746
        %v2748 = vrot.slane %v2746, 4
        %v2749 = vrot.slane %v527, 7
        %v2750 = vsel %vm1493, %v2748, %v2749
        %v2751 = vrot.slane %v529, 7
        %v2752 = vrot.slane %v2751, 4
        %v2753 = vrot.slane %v530, 7
        %v2754 = vsel %vm1493, %v2752, %v2753
        %v2755 = vrot.slane %v2753, 4
        %v2756 = vrot.slane %v531, 7
        %v2757 = vsel %vm1493, %v2755, %v2756
        %v2758 = vrot.slane %v534, 7
        %v2759 = vrot.slane %v2758, 4
        %v2760 = vrot.slane %v535, 7
        %v2761 = vsel %vm1493, %v2759, %v2760
        %v2762 = vrot.slane %v2760, 4
        %v2763 = vrot.slane %v536, 7
        %v2764 = vsel %vm1493, %v2762, %v2763
        %v2765 = vrot.slane %v540, 7
        %v2766 = vrot.slane %v2765, 4
        %v2767 = vrot.slane %v541, 7
        %v2768 = vsel %vm1493, %v2766, %v2767
        %v2769 = vrot.slane %v2767, 4
        %v2770 = vrot.slane %v542, 7
        %v2771 = vsel %vm1493, %v2769, %v2770
        %s2772 = scalar_lea.vmem [#allocation7], 512
        %v2773 = vld [vmem:[%s2772] sm:$0xf]
        %v2774 = vld [vmem:[%s2772 + $0x4] sm:$0xf]
        %v2775 = vld [vmem:[%s2772 + $0x8] sm:$0xf]
        %v2776 = vld [vmem:[%s2772 + $0xc] sm:$0xf]
        %v2777 = vld [vmem:[%s2772 + $0x10] sm:$0xf]
        %v2778 = vld [vmem:[%s2772 + $0x14] sm:$0xf]
        %v2779 = vld [vmem:[%s2772 + $0x18] sm:$0xf]
        %v2780 = vld [vmem:[%s2772 + $0x1c] sm:$0xf]
        %v2781 = vld [vmem:[%s2772 + $0x20] sm:$0xf]
        %v2782 = vld [vmem:[%s2772 + $0x24] sm:$0xf]
        %v2783 = vld [vmem:[%s2772 + $0x28] sm:$0xf]
        %v2784 = vld [vmem:[%s2772 + $0x2c] sm:$0xf]
        %v2785 = vld [vmem:[%s2772 + $0x30] sm:$0xf]
        %v2786 = vld [vmem:[%s2772 + $0x34] sm:$0xf]
        %v2787 = vld [vmem:[%s2772 + $0x38] sm:$0xf]
        %v2788 = vld [vmem:[%s2772 + $0x3c] sm:$0xf]
        %v2789 = vunpack.c.l.b16 %v2733
        %v2790 = vunpack.c.l.b16 %v2736
        %v2791 = vunpack.c.l.b16 %v2740
        %v2792 = vunpack.c.l.b16 %v2743
        %v2793 = vunpack.c.l.b16 %v2747
        %v2794 = vunpack.c.l.b16 %v2750
        %v2795 = vunpack.c.l.b16 %v2754
        %v2796 = vunpack.c.l.b16 %v2757
        %v2797 = vunpack.c.l.b16 %v2761
        %v2798 = vunpack.c.l.b16 %v2764
        %v2799 = vunpack.c.l.b16 %v2768
        %v2800 = vunpack.c.l.b16 %v2771
        %v2801 = vpack.c.b16 %v2790, %v2789
        %v2802 = vpack.c.b16 %v2792, %v2791
        %v2803 = vpack.c.b16 %v2794, %v2793
        %v2804 = vpack.c.b16 %v2796, %v2795
        %v2805 = vpack.c.b16 %v2798, %v2797
        %v2806 = vpack.c.b16 %v2800, %v2799
        %v2829 = vunpack.c.l.b16 %v2773
        %v2830 = vunpack.c.l.b16 %v2774
        %v2831 = vunpack.c.l.b16 %v2775
        %v2832 = vunpack.c.l.b16 %v2776
        %v2833 = vunpack.c.l.b16 %v2777
        %v2834 = vunpack.c.l.b16 %v2778
        %v2835 = vunpack.c.l.b16 %v2779
        %v2836 = vunpack.c.l.b16 %v2780
        %v2837 = vunpack.c.l.b16 %v2781
        %v2838 = vunpack.c.l.b16 %v2782
        %v2839 = vunpack.c.l.b16 %v2783
        %v2840 = vunpack.c.l.b16 %v2784
        %v2841 = vunpack.c.l.b16 %v2785
        %v2842 = vunpack.c.l.b16 %v2786
        %v2843 = vunpack.c.l.b16 %v2787
        %v2844 = vunpack.c.l.b16 %v2788
        %v2845 = vpack.c.b16 %v2830, %v2829
        %v2846 = vpack.c.b16 %v2832, %v2831
        %v2847 = vpack.c.b16 %v2834, %v2833
        %v2848 = vpack.c.b16 %v2836, %v2835
        %v2849 = vpack.c.b16 %v2838, %v2837
        %v2850 = vpack.c.b16 %v2840, %v2839
        %v2851 = vpack.c.b16 %v2842, %v2841
        %v2852 = vpack.c.b16 %v2844, %v2843
        %2861 = vmatprep.subr.bf16.mxu0 0
        %2862 = vmatpush1.bf16.msra.mxu0 %v2852
        %2863 = vmatprep.subr.bf16.mxu0 0
        %2864 = vmatpush1.bf16.msra.mxu0 %v2851
        %2865 = vmatprep.subr.bf16.mxu0 0
        %2866 = vmatpush1.bf16.msra.mxu0 %v2850
        %2867 = vmatprep.subr.bf16.mxu0 0
        %2868 = vmatpush1.bf16.msra.mxu0 %v2849
        %2869 = vmatprep.subr.bf16.mxu0 0
        %2870 = vmatpush1.bf16.msra.mxu0 %v2848
        %2871 = vmatprep.subr.bf16.mxu0 0
        %2872 = vmatpush1.bf16.msra.mxu0 %v2847
        %2873 = vmatprep.subr.bf16.mxu0 0
        %2874 = vmatpush1.bf16.msra.mxu0 %v2846
        %2875 = vmatprep.subr.bf16.mxu0 0
        %2876 = vmatpush1.bf16.msra.mxu0 %v2845
        %2877 = vmatprep.subr.bf16.mxu0 0
        %2878 = vmatpush2.bf16.msra.mxu0 0
        %2879 = vmatprep.subr.bf16.mxu0 0
        %2880 = vmatpush2.bf16.msra.mxu0 0
        %2881 = vmatprep.subr.bf16.mxu0 0
        %2882 = vmatpush2.bf16.msra.mxu0 0
        %2883 = vmatprep.subr.bf16.mxu0 0
        %2884 = vmatpush2.bf16.msra.mxu0 0
        %2885 = vmatprep.subr.bf16.mxu0 0
        %2886 = vmatpush2.bf16.msra.mxu0 0
        %2887 = vmatprep.subr.bf16.mxu0 0
        %2888 = vmatpush2.bf16.msra.mxu0 0
        %2889 = vmatprep.subr.bf16.mxu0 0
        %2890 = vmatpush2.bf16.msra.mxu0 0
        %2891 = vmatprep.subr.bf16.mxu0 0
        %2892 = vmatpush2.bf16.msra.mxu0 0
        %2893 = vmatprep.mubr.bf16.mxu0 0
        %2894 = vmatmul.mubr.bf16.gmra.mxu0 %v2091
        %v2895 = vpop.f32.mrf.mxu0
        %v2896 = vadd.f32 0.0, %v2895
        %v2897 = vpop.f32.mrf.mxu0
        %v2898 = vpop.f32.mrf.mxu0
        %v2899 = vadd.f32 0.0, %v2898
        %v2900 = vpop.f32.mrf.mxu0
        %2901 = vmatprep.mubr.bf16.mxu0 0
        %2902 = vmatmul.mubr.bf16.gmra.mxu0 %v2092
        %v2903 = vpop.f32.mrf.mxu0
        %v2904 = vadd.f32 0.0, %v2903
        %v2905 = vpop.f32.mrf.mxu0
        %v2906 = vpop.f32.mrf.mxu0
        %v2907 = vadd.f32 0.0, %v2906
        %v2908 = vpop.f32.mrf.mxu0
        %2909 = vmatprep.mubr.bf16.mxu0 0
        %2910 = vmatmul.mubr.bf16.gmra.mxu0 %v2801
        %v2911 = vpop.f32.mrf.mxu0
        %v2912 = vadd.f32 0.0, %v2911
        %v2913 = vpop.f32.mrf.mxu0
        %v2914 = vpop.f32.mrf.mxu0
        %v2915 = vadd.f32 0.0, %v2914
        %v2916 = vpop.f32.mrf.mxu0
        %2917 = vmatprep.mubr.bf16.mxu0 0
        %2918 = vmatmul.mubr.bf16.gmra.mxu0 %v2802
        %v2919 = vpop.f32.mrf.mxu0
        %v2920 = vadd.f32 0.0, %v2919
        %v2921 = vpop.f32.mrf.mxu0
        %v2922 = vpop.f32.mrf.mxu0
        %v2923 = vadd.f32 0.0, %v2922
        %v2924 = vpop.f32.mrf.mxu0
        %2925 = vmatprep.mubr.bf16.mxu0 0
        %2926 = vmatmul.mubr.bf16.gmra.mxu0 %v2803
        %v2927 = vpop.f32.mrf.mxu0
        %v2928 = vadd.f32 0.0, %v2927
        %v2929 = vpop.f32.mrf.mxu0
        %v2930 = vpop.f32.mrf.mxu0
        %v2931 = vadd.f32 0.0, %v2930
        %v2932 = vpop.f32.mrf.mxu0
        %2933 = vmatprep.mubr.bf16.mxu0 0
        %2934 = vmatmul.mubr.bf16.gmra.mxu0 %v2804
        %v2935 = vpop.f32.mrf.mxu0
        %v2936 = vadd.f32 0.0, %v2935
        %v2937 = vpop.f32.mrf.mxu0
        %v2938 = vpop.f32.mrf.mxu0
        %v2939 = vadd.f32 0.0, %v2938
        %v2940 = vpop.f32.mrf.mxu0
        %2941 = vmatprep.mubr.bf16.mxu0 0
        %2942 = vmatmul.mubr.bf16.gmra.mxu0 %v2805
        %v2943 = vpop.f32.mrf.mxu0
        %v2944 = vadd.f32 0.0, %v2943
        %v2945 = vpop.f32.mrf.mxu0
        %v2946 = vpop.f32.mrf.mxu0
        %v2947 = vadd.f32 0.0, %v2946
        %v2948 = vpop.f32.mrf.mxu0
        %2949 = vmatprep.mubr.bf16.mxu0 0
        %2950 = vmatmul.mubr.bf16.gmra.mxu0 %v2806
        %v2951 = vpop.f32.mrf.mxu0
        %v2952 = vadd.f32 0.0, %v2951
        %v2953 = vpop.f32.mrf.mxu0
        %v2954 = vpop.f32.mrf.mxu0
        %v2955 = vadd.f32 0.0, %v2954
        %v2956 = vpop.f32.mrf.mxu0
        %2957 = vdwg.mxu0
        %v2958 = vadd.f32 %v2708, %v2896
        %v2959 = vadd.f32 %v2709, %v2899
        %v2960 = vadd.f32 %v2710, %v2904
        %v2961 = vadd.f32 %v2711, %v2907
        %v2962 = vadd.f32 %v2712, %v2912
        %v2963 = vadd.f32 %v2713, %v2915
        %v2964 = vadd.f32 %v2714, %v2920
        %v2965 = vadd.f32 %v2715, %v2923
        %v2966 = vadd.f32 %v2716, %v2928
        %v2967 = vadd.f32 %v2717, %v2931
        %v2968 = vadd.f32 %v2718, %v2936
        %v2969 = vadd.f32 %v2719, %v2939
        %v2970 = vadd.f32 %v2720, %v2944
        %v2971 = vadd.f32 %v2721, %v2947
        %v2972 = vadd.f32 %v2722, %v2952
        %v2973 = vadd.f32 %v2723, %v2955
        %v2974 = vld [vmem:[%s5 + $0x1] sm:$0x1]
        %v2975 = vlaneseq
        %v2976 = vshrl.u32 %v2975, 7
        %v2977 = vsub.s32 0, %v2976
        %v2978 = vrot.slane %v2974, %v2977
        %v2979 = vmul.f32 %v2958, %v2978
        %v2980 = vmul.f32 %v2959, %v2978
        %v2981 = vmul.f32 %v2960, %v2978
        %v2982 = vmul.f32 %v2961, %v2978
        %v2983 = vmul.f32 %v2962, %v2978
        %v2984 = vmul.f32 %v2963, %v2978
        %v2985 = vmul.f32 %v2964, %v2978
        %v2986 = vmul.f32 %v2965, %v2978
        %v2987 = vmul.f32 %v2966, %v2978
        %v2988 = vmul.f32 %v2967, %v2978
        %v2989 = vmul.f32 %v2968, %v2978
        %v2990 = vmul.f32 %v2969, %v2978
        %v2991 = vmul.f32 %v2970, %v2978
        %v2992 = vmul.f32 %v2971, %v2978
        %v2993 = vmul.f32 %v2972, %v2978
        %v2994 = vmul.f32 %v2973, %v2978
        %v2995 = vld [vmem:[#allocation11 + $0x1] sm:$0x1]
        %v2996 = vlaneseq
        %v2997 = vshrl.u32 %v2996, 7
        %v2998 = vsub.s32 0, %v2997
        %v2999 = vrot.slane %v2995, %v2998
        %v3000 = vadd.f32 %v2979, %v2999
        %v3001 = vadd.f32 %v2980, %v2999
        %v3002 = vadd.f32 %v2981, %v2999
        %v3003 = vadd.f32 %v2982, %v2999
        %v3004 = vadd.f32 %v2983, %v2999
        %v3005 = vadd.f32 %v2984, %v2999
        %v3006 = vadd.f32 %v2985, %v2999
        %v3007 = vadd.f32 %v2986, %v2999
        %v3008 = vadd.f32 %v2987, %v2999
        %v3009 = vadd.f32 %v2988, %v2999
        %v3010 = vadd.f32 %v2989, %v2999
        %v3011 = vadd.f32 %v2990, %v2999
        %v3012 = vadd.f32 %v2991, %v2999
        %v3013 = vadd.f32 %v2992, %v2999
        %v3014 = vadd.f32 %v2993, %v2999
        %v3015 = vadd.f32 %v2994, %v2999
        %v3016 = vmax.f32 %v3000, 0.0
        %v3017 = vmax.f32 %v3001, 0.0
        %v3018 = vmax.f32 %v3002, 0.0
        %v3019 = vmax.f32 %v3003, 0.0
        %v3020 = vmax.f32 %v3004, 0.0
        %v3021 = vmax.f32 %v3005, 0.0
        %v3022 = vmax.f32 %v3006, 0.0
        %v3023 = vmax.f32 %v3007, 0.0
        %v3024 = vmax.f32 %v3008, 0.0
        %v3025 = vmax.f32 %v3009, 0.0
        %v3026 = vmax.f32 %v3010, 0.0
        %v3027 = vmax.f32 %v3011, 0.0
        %v3028 = vmax.f32 %v3012, 0.0
        %v3029 = vmax.f32 %v3013, 0.0
        %v3030 = vmax.f32 %v3014, 0.0
        %v3031 = vmax.f32 %v3015, 0.0
        %s3032 = scalar_lea.vmem [#allocation7], 832
        %v3033 = vld [vmem:[%s3032] sm:$0xf]
        %v3034 = vld [vmem:[%s3032 + $0x4] sm:$0xf]
        %v3035 = vld [vmem:[%s3032 + $0x8] sm:$0xf]
        %v3036 = vld [vmem:[%s3032 + $0xc] sm:$0xf]
        %v3037 = vld [vmem:[%s3032 + $0x10] sm:$0xf]
        %v3038 = vld [vmem:[%s3032 + $0x14] sm:$0xf]
        %v3039 = vld [vmem:[%s3032 + $0x18] sm:$0xf]
        %v3040 = vld [vmem:[%s3032 + $0x1c] sm:$0xf]
        %v3041 = vld [vmem:[%s3032 + $0x20] sm:$0xf]
        %v3042 = vld [vmem:[%s3032 + $0x24] sm:$0xf]
        %v3043 = vld [vmem:[%s3032 + $0x28] sm:$0xf]
        %v3044 = vld [vmem:[%s3032 + $0x2c] sm:$0xf]
        %v3045 = vld [vmem:[%s3032 + $0x30] sm:$0xf]
        %v3046 = vld [vmem:[%s3032 + $0x34] sm:$0xf]
        %v3047 = vld [vmem:[%s3032 + $0x38] sm:$0xf]
        %v3048 = vld [vmem:[%s3032 + $0x3c] sm:$0xf]
        %vm3069 = vcmask 1041408
        %vm3070 = vcmask 1045508
        %vm3071 = vmor %vm3069, %vm3070
        %v3072 = vrot.slane %v404, 6
        %v3073 = vrot.slane %v3072, 4
        %v3074 = vrot.slane %v405, 6
        %v3075 = vsel %vm3071, %v3073, %v3074
        %v3076 = vrot.slane %v3074, 4
        %v3077 = vrot.slane %v406, 6
        %v3078 = vsel %vm3071, %v3076, %v3077
        %v3079 = vrot.slane %v410, 6
        %v3080 = vrot.slane %v3079, 4
        %v3081 = vrot.slane %v411, 6
        %v3082 = vsel %vm3071, %v3080, %v3081
        %v3083 = vrot.slane %v3081, 4
        %v3084 = vrot.slane %v412, 6
        %v3085 = vsel %vm3071, %v3083, %v3084
        %v3086 = vrot.slane %v416, 6
        %v3087 = vrot.slane %v3086, 4
        %v3088 = vrot.slane %v417, 6
        %v3089 = vsel %vm3071, %v3087, %v3088
        %v3090 = vrot.slane %v3088, 4
        %v3091 = vrot.slane %v418, 6
        %v3092 = vsel %vm3071, %v3090, %v3091
        %v3093 = vrot.slane %v422, 6
        %v3094 = vrot.slane %v3093, 4
        %v3095 = vrot.slane %v423, 6
        %v3096 = vsel %vm3071, %v3094, %v3095
        %v3097 = vrot.slane %v3095, 4
        %v3098 = vrot.slane %v424, 6
        %v3099 = vsel %vm3071, %v3097, %v3098
        %v3100 = vrot.slane %v428, 6
        %v3101 = vrot.slane %v3100, 4
        %v3102 = vrot.slane %v429, 6
        %v3103 = vsel %vm3071, %v3101, %v3102
        %v3104 = vrot.slane %v3102, 4
        %v3105 = vrot.slane %v430, 6
        %v3106 = vsel %vm3071, %v3104, %v3105
        %v3107 = vrot.slane %v434, 6
        %v3108 = vrot.slane %v3107, 4
        %v3109 = vrot.slane %v435, 6
        %v3110 = vsel %vm3071, %v3108, %v3109
        %v3111 = vrot.slane %v3109, 4
        %v3112 = vrot.slane %v436, 6
        %v3113 = vsel %vm3071, %v3111, %v3112
        %v3114 = vrot.slane %v440, 6
        %v3115 = vrot.slane %v3114, 4
        %v3116 = vrot.slane %v441, 6
        %v3117 = vsel %vm3071, %v3115, %v3116
        %v3118 = vrot.slane %v3116, 4
        %v3119 = vrot.slane %v442, 6
        %v3120 = vsel %vm3071, %v3118, %v3119
        %v3121 = vrot.slane %v446, 6
        %v3122 = vrot.slane %v3121, 4
        %v3123 = vrot.slane %v447, 6
        %v3124 = vsel %vm3071, %v3122, %v3123
        %v3125 = vrot.slane %v3123, 4
        %v3126 = vrot.slane %v448, 6
        %v3127 = vsel %vm3071, %v3125, %v3126
        %s3128 = scalar_lea.vmem [#allocation7], 576
        %v3129 = vld [vmem:[%s3128] sm:$0xf]
        %v3130 = vld [vmem:[%s3128 + $0x4] sm:$0xf]
        %v3131 = vld [vmem:[%s3128 + $0x8] sm:$0xf]
        %v3132 = vld [vmem:[%s3128 + $0xc] sm:$0xf]
        %v3133 = vld [vmem:[%s3128 + $0x10] sm:$0xf]
        %v3134 = vld [vmem:[%s3128 + $0x14] sm:$0xf]
        %v3135 = vld [vmem:[%s3128 + $0x18] sm:$0xf]
        %v3136 = vld [vmem:[%s3128 + $0x1c] sm:$0xf]
        %v3137 = vld [vmem:[%s3128 + $0x20] sm:$0xf]
        %v3138 = vld [vmem:[%s3128 + $0x24] sm:$0xf]
        %v3139 = vld [vmem:[%s3128 + $0x28] sm:$0xf]
        %v3140 = vld [vmem:[%s3128 + $0x2c] sm:$0xf]
        %v3141 = vld [vmem:[%s3128 + $0x30] sm:$0xf]
        %v3142 = vld [vmem:[%s3128 + $0x34] sm:$0xf]
        %v3143 = vld [vmem:[%s3128 + $0x38] sm:$0xf]
        %v3144 = vld [vmem:[%s3128 + $0x3c] sm:$0xf]
        %v3145 = vunpack.c.l.b16 %v3075
        %v3146 = vunpack.c.l.b16 %v3078
        %v3147 = vunpack.c.l.b16 %v3082
        %v3148 = vunpack.c.l.b16 %v3085
        %v3149 = vunpack.c.l.b16 %v3089
        %v3150 = vunpack.c.l.b16 %v3092
        %v3151 = vunpack.c.l.b16 %v3096
        %v3152 = vunpack.c.l.b16 %v3099
        %v3153 = vunpack.c.l.b16 %v3103
        %v3154 = vunpack.c.l.b16 %v3106
        %v3155 = vunpack.c.l.b16 %v3110
        %v3156 = vunpack.c.l.b16 %v3113
        %v3157 = vunpack.c.l.b16 %v3117
        %v3158 = vunpack.c.l.b16 %v3120
        %v3159 = vunpack.c.l.b16 %v3124
        %v3160 = vunpack.c.l.b16 %v3127
        %v3161 = vpack.c.b16 %v3146, %v3145
        %v3162 = vpack.c.b16 %v3148, %v3147
        %v3163 = vpack.c.b16 %v3150, %v3149
        %v3164 = vpack.c.b16 %v3152, %v3151
        %v3165 = vpack.c.b16 %v3154, %v3153
        %v3166 = vpack.c.b16 %v3156, %v3155
        %v3167 = vpack.c.b16 %v3158, %v3157
        %v3168 = vpack.c.b16 %v3160, %v3159
        %v3193 = vunpack.c.l.b16 %v3129
        %v3194 = vunpack.c.l.b16 %v3130
        %v3195 = vunpack.c.l.b16 %v3131
        %v3196 = vunpack.c.l.b16 %v3132
        %v3197 = vunpack.c.l.b16 %v3133
        %v3198 = vunpack.c.l.b16 %v3134
        %v3199 = vunpack.c.l.b16 %v3135
        %v3200 = vunpack.c.l.b16 %v3136
        %v3201 = vunpack.c.l.b16 %v3137
        %v3202 = vunpack.c.l.b16 %v3138
        %v3203 = vunpack.c.l.b16 %v3139
        %v3204 = vunpack.c.l.b16 %v3140
        %v3205 = vunpack.c.l.b16 %v3141
        %v3206 = vunpack.c.l.b16 %v3142
        %v3207 = vunpack.c.l.b16 %v3143
        %v3208 = vunpack.c.l.b16 %v3144
        %v3209 = vpack.c.b16 %v3194, %v3193
        %v3210 = vpack.c.b16 %v3196, %v3195
        %v3211 = vpack.c.b16 %v3198, %v3197
        %v3212 = vpack.c.b16 %v3200, %v3199
        %v3213 = vpack.c.b16 %v3202, %v3201
        %v3214 = vpack.c.b16 %v3204, %v3203
        %v3215 = vpack.c.b16 %v3206, %v3205
        %v3216 = vpack.c.b16 %v3208, %v3207
        %3225 = vmatprep.subr.bf16.mxu0 0
        %3226 = vmatpush1.bf16.msra.mxu0 %v3216
        %3227 = vmatprep.subr.bf16.mxu0 0
        %3228 = vmatpush1.bf16.msra.mxu0 %v3215
        %3229 = vmatprep.subr.bf16.mxu0 0
        %3230 = vmatpush1.bf16.msra.mxu0 %v3214
        %3231 = vmatprep.subr.bf16.mxu0 0
        %3232 = vmatpush1.bf16.msra.mxu0 %v3213
        %3233 = vmatprep.subr.bf16.mxu0 0
        %3234 = vmatpush1.bf16.msra.mxu0 %v3212
        %3235 = vmatprep.subr.bf16.mxu0 0
        %3236 = vmatpush1.bf16.msra.mxu0 %v3211
        %3237 = vmatprep.subr.bf16.mxu0 0
        %3238 = vmatpush1.bf16.msra.mxu0 %v3210
        %3239 = vmatprep.subr.bf16.mxu0 0
        %3240 = vmatpush1.bf16.msra.mxu0 %v3209
        %3241 = vmatprep.subr.bf16.mxu0 0
        %3242 = vmatpush2.bf16.msra.mxu0 0
        %3243 = vmatprep.subr.bf16.mxu0 0
        %3244 = vmatpush2.bf16.msra.mxu0 0
        %3245 = vmatprep.subr.bf16.mxu0 0
        %3246 = vmatpush2.bf16.msra.mxu0 0
        %3247 = vmatprep.subr.bf16.mxu0 0
        %3248 = vmatpush2.bf16.msra.mxu0 0
        %3249 = vmatprep.subr.bf16.mxu0 0
        %3250 = vmatpush2.bf16.msra.mxu0 0
        %3251 = vmatprep.subr.bf16.mxu0 0
        %3252 = vmatpush2.bf16.msra.mxu0 0
        %3253 = vmatprep.subr.bf16.mxu0 0
        %3254 = vmatpush2.bf16.msra.mxu0 0
        %3255 = vmatprep.subr.bf16.mxu0 0
        %3256 = vmatpush2.bf16.msra.mxu0 0
        %3257 = vmatprep.mubr.bf16.mxu0 0
        %3258 = vmatmul.mubr.bf16.gmra.mxu0 %v3161
        %v3259 = vpop.f32.mrf.mxu0
        %v3260 = vadd.f32 0.0, %v3259
        %v3261 = vpop.f32.mrf.mxu0
        %v3262 = vpop.f32.mrf.mxu0
        %v3263 = vadd.f32 0.0, %v3262
        %v3264 = vpop.f32.mrf.mxu0
        %3265 = vmatprep.mubr.bf16.mxu0 0
        %3266 = vmatmul.mubr.bf16.gmra.mxu0 %v3162
        %v3267 = vpop.f32.mrf.mxu0
        %v3268 = vadd.f32 0.0, %v3267
        %v3269 = vpop.f32.mrf.mxu0
        %v3270 = vpop.f32.mrf.mxu0
        %v3271 = vadd.f32 0.0, %v3270
        %v3272 = vpop.f32.mrf.mxu0
        %3273 = vmatprep.mubr.bf16.mxu0 0
        %3274 = vmatmul.mubr.bf16.gmra.mxu0 %v3163
        %v3275 = vpop.f32.mrf.mxu0
        %v3276 = vadd.f32 0.0, %v3275
        %v3277 = vpop.f32.mrf.mxu0
        %v3278 = vpop.f32.mrf.mxu0
        %v3279 = vadd.f32 0.0, %v3278
        %v3280 = vpop.f32.mrf.mxu0
        %3281 = vmatprep.mubr.bf16.mxu0 0
        %3282 = vmatmul.mubr.bf16.gmra.mxu0 %v3164
        %v3283 = vpop.f32.mrf.mxu0
        %v3284 = vadd.f32 0.0, %v3283
        %v3285 = vpop.f32.mrf.mxu0
        %v3286 = vpop.f32.mrf.mxu0
        %v3287 = vadd.f32 0.0, %v3286
        %v3288 = vpop.f32.mrf.mxu0
        %3289 = vmatprep.mubr.bf16.mxu0 0
        %3290 = vmatmul.mubr.bf16.gmra.mxu0 %v3165
        %v3291 = vpop.f32.mrf.mxu0
        %v3292 = vadd.f32 0.0, %v3291
        %v3293 = vpop.f32.mrf.mxu0
        %v3294 = vpop.f32.mrf.mxu0
        %v3295 = vadd.f32 0.0, %v3294
        %v3296 = vpop.f32.mrf.mxu0
        %3297 = vmatprep.mubr.bf16.mxu0 0
        %3298 = vmatmul.mubr.bf16.gmra.mxu0 %v3166
        %v3299 = vpop.f32.mrf.mxu0
        %v3300 = vadd.f32 0.0, %v3299
        %v3301 = vpop.f32.mrf.mxu0
        %v3302 = vpop.f32.mrf.mxu0
        %v3303 = vadd.f32 0.0, %v3302
        %v3304 = vpop.f32.mrf.mxu0
        %3305 = vmatprep.mubr.bf16.mxu0 0
        %3306 = vmatmul.mubr.bf16.gmra.mxu0 %v3167
        %v3307 = vpop.f32.mrf.mxu0
        %v3308 = vadd.f32 0.0, %v3307
        %v3309 = vpop.f32.mrf.mxu0
        %v3310 = vpop.f32.mrf.mxu0
        %v3311 = vadd.f32 0.0, %v3310
        %v3312 = vpop.f32.mrf.mxu0
        %3313 = vmatprep.mubr.bf16.mxu0 0
        %3314 = vmatmul.mubr.bf16.gmra.mxu0 %v3168
        %v3315 = vpop.f32.mrf.mxu0
        %v3316 = vadd.f32 0.0, %v3315
        %v3317 = vpop.f32.mrf.mxu0
        %v3318 = vpop.f32.mrf.mxu0
        %v3319 = vadd.f32 0.0, %v3318
        %v3320 = vpop.f32.mrf.mxu0
        %3321 = vdwg.mxu0
        %v3338 = vunpack.c.l.b16 %v3033
        %v3339 = vunpack.c.l.b16 %v3034
        %v3340 = vunpack.c.l.b16 %v3035
        %v3341 = vunpack.c.l.b16 %v3036
        %v3342 = vunpack.c.l.b16 %v3037
        %v3343 = vunpack.c.l.b16 %v3038
        %v3344 = vunpack.c.l.b16 %v3039
        %v3345 = vunpack.c.l.b16 %v3040
        %v3346 = vunpack.c.l.b16 %v3041
        %v3347 = vunpack.c.l.b16 %v3042
        %v3348 = vunpack.c.l.b16 %v3043
        %v3349 = vunpack.c.l.b16 %v3044
        %v3350 = vunpack.c.l.b16 %v3045
        %v3351 = vunpack.c.l.b16 %v3046
        %v3352 = vunpack.c.l.b16 %v3047
        %v3353 = vunpack.c.l.b16 %v3048
        %v3354 = vpack.c.b16 %v3339, %v3338
        %v3355 = vpack.c.b16 %v3341, %v3340
        %v3356 = vpack.c.b16 %v3343, %v3342
        %v3357 = vpack.c.b16 %v3345, %v3344
        %v3358 = vpack.c.b16 %v3347, %v3346
        %v3359 = vpack.c.b16 %v3349, %v3348
        %v3360 = vpack.c.b16 %v3351, %v3350
        %v3361 = vpack.c.b16 %v3353, %v3352
        %3370 = vmatprep.subr.bf16.mxu0 0
        %3371 = vmatpush1.bf16.msra.mxu0 %v3361
        %3372 = vmatprep.subr.bf16.mxu0 0
        %3373 = vmatpush1.bf16.msra.mxu0 %v3360
        %3374 = vmatprep.subr.bf16.mxu0 0
        %3375 = vmatpush1.bf16.msra.mxu0 %v3359
        %3376 = vmatprep.subr.bf16.mxu0 0
        %3377 = vmatpush1.bf16.msra.mxu0 %v3358
        %3378 = vmatprep.subr.bf16.mxu0 0
        %3379 = vmatpush1.bf16.msra.mxu0 %v3357
        %3380 = vmatprep.subr.bf16.mxu0 0
        %3381 = vmatpush1.bf16.msra.mxu0 %v3356
        %3382 = vmatprep.subr.bf16.mxu0 0
        %3383 = vmatpush1.bf16.msra.mxu0 %v3355
        %3384 = vmatprep.subr.bf16.mxu0 0
        %3385 = vmatpush1.bf16.msra.mxu0 %v3354
        %3386 = vmatprep.subr.bf16.mxu0 0
        %3387 = vmatpush2.bf16.msra.mxu0 0
        %3388 = vmatprep.subr.bf16.mxu0 0
        %3389 = vmatpush2.bf16.msra.mxu0 0
        %3390 = vmatprep.subr.bf16.mxu0 0
        %3391 = vmatpush2.bf16.msra.mxu0 0
        %3392 = vmatprep.subr.bf16.mxu0 0
        %3393 = vmatpush2.bf16.msra.mxu0 0
        %3394 = vmatprep.subr.bf16.mxu0 0
        %3395 = vmatpush2.bf16.msra.mxu0 0
        %3396 = vmatprep.subr.bf16.mxu0 0
        %3397 = vmatpush2.bf16.msra.mxu0 0
        %3398 = vmatprep.subr.bf16.mxu0 0
        %3399 = vmatpush2.bf16.msra.mxu0 0
        %3400 = vmatprep.subr.bf16.mxu0 0
        %3401 = vmatpush2.bf16.msra.mxu0 0
        %3402 = vmatprep.mubr.bf16.mxu0 0
        %3403 = vmatmul.mubr.bf16.gmra.mxu0 %v628
        %v3404 = vpop.f32.mrf.mxu0
        %v3405 = vadd.f32 %v3260, %v3404
        %v3406 = vpop.f32.mrf.mxu0
        %v3407 = vpop.f32.mrf.mxu0
        %v3408 = vadd.f32 %v3263, %v3407
        %v3409 = vpop.f32.mrf.mxu0
        %3410 = vmatprep.mubr.bf16.mxu0 0
        %3411 = vmatmul.mubr.bf16.gmra.mxu0 %v629
        %v3412 = vpop.f32.mrf.mxu0
        %v3413 = vadd.f32 %v3268, %v3412
        %v3414 = vpop.f32.mrf.mxu0
        %v3415 = vpop.f32.mrf.mxu0
        %v3416 = vadd.f32 %v3271, %v3415
        %v3417 = vpop.f32.mrf.mxu0
        %3418 = vmatprep.mubr.bf16.mxu0 0
        %3419 = vmatmul.mubr.bf16.gmra.mxu0 %v630
        %v3420 = vpop.f32.mrf.mxu0
        %v3421 = vadd.f32 %v3276, %v3420
        %v3422 = vpop.f32.mrf.mxu0
        %v3423 = vpop.f32.mrf.mxu0
        %v3424 = vadd.f32 %v3279, %v3423
        %v3425 = vpop.f32.mrf.mxu0
        %3426 = vmatprep.mubr.bf16.mxu0 0
        %3427 = vmatmul.mubr.bf16.gmra.mxu0 %v631
        %v3428 = vpop.f32.mrf.mxu0
        %v3429 = vadd.f32 %v3284, %v3428
        %v3430 = vpop.f32.mrf.mxu0
        %v3431 = vpop.f32.mrf.mxu0
        %v3432 = vadd.f32 %v3287, %v3431
        %v3433 = vpop.f32.mrf.mxu0
        %3434 = vmatprep.mubr.bf16.mxu0 0
        %3435 = vmatmul.mubr.bf16.gmra.mxu0 %v632
        %v3436 = vpop.f32.mrf.mxu0
        %v3437 = vadd.f32 %v3292, %v3436
        %v3438 = vpop.f32.mrf.mxu0
        %v3439 = vpop.f32.mrf.mxu0
        %v3440 = vadd.f32 %v3295, %v3439
        %v3441 = vpop.f32.mrf.mxu0
        %3442 = vmatprep.mubr.bf16.mxu0 0
        %3443 = vmatmul.mubr.bf16.gmra.mxu0 %v633
        %v3444 = vpop.f32.mrf.mxu0
        %v3445 = vadd.f32 %v3300, %v3444
        %v3446 = vpop.f32.mrf.mxu0
        %v3447 = vpop.f32.mrf.mxu0
        %v3448 = vadd.f32 %v3303, %v3447
        %v3449 = vpop.f32.mrf.mxu0
        %3450 = vmatprep.mubr.bf16.mxu0 0
        %3451 = vmatmul.mubr.bf16.gmra.mxu0 %v634
        %v3452 = vpop.f32.mrf.mxu0
        %v3453 = vadd.f32 %v3308, %v3452
        %v3454 = vpop.f32.mrf.mxu0
        %v3455 = vpop.f32.mrf.mxu0
        %v3456 = vadd.f32 %v3311, %v3455
        %v3457 = vpop.f32.mrf.mxu0
        %3458 = vmatprep.mubr.bf16.mxu0 0
        %3459 = vmatmul.mubr.bf16.gmra.mxu0 %v635
        %v3460 = vpop.f32.mrf.mxu0
        %v3461 = vadd.f32 %v3316, %v3460
        %v3462 = vpop.f32.mrf.mxu0
        %v3463 = vpop.f32.mrf.mxu0
        %v3464 = vadd.f32 %v3319, %v3463
        %v3465 = vpop.f32.mrf.mxu0
        %3466 = vdwg.mxu0
        %s3467 = scalar_lea.vmem [#allocation7], 640
        %v3468 = vld [vmem:[%s3467] sm:$0xf]
        %v3469 = vld [vmem:[%s3467 + $0x4] sm:$0xf]
        %v3470 = vld [vmem:[%s3467 + $0x8] sm:$0xf]
        %v3471 = vld [vmem:[%s3467 + $0xc] sm:$0xf]
        %v3472 = vld [vmem:[%s3467 + $0x10] sm:$0xf]
        %v3473 = vld [vmem:[%s3467 + $0x14] sm:$0xf]
        %v3474 = vld [vmem:[%s3467 + $0x18] sm:$0xf]
        %v3475 = vld [vmem:[%s3467 + $0x1c] sm:$0xf]
        %v3476 = vld [vmem:[%s3467 + $0x20] sm:$0xf]
        %v3477 = vld [vmem:[%s3467 + $0x24] sm:$0xf]
        %v3478 = vld [vmem:[%s3467 + $0x28] sm:$0xf]
        %v3479 = vld [vmem:[%s3467 + $0x2c] sm:$0xf]
        %v3480 = vld [vmem:[%s3467 + $0x30] sm:$0xf]
        %v3481 = vld [vmem:[%s3467 + $0x34] sm:$0xf]
        %v3482 = vld [vmem:[%s3467 + $0x38] sm:$0xf]
        %v3483 = vld [vmem:[%s3467 + $0x3c] sm:$0xf]
        %v3490 = vunpack.c.l.b16 %v406
        %v3491 = vunpack.c.l.b16 %v407
        %v3492 = vunpack.c.l.b16 %v412
        %v3493 = vunpack.c.l.b16 %v413
        %v3494 = vunpack.c.l.b16 %v418
        %v3495 = vunpack.c.l.b16 %v419
        %v3496 = vunpack.c.l.b16 %v424
        %v3497 = vunpack.c.l.b16 %v425
        %v3498 = vunpack.c.l.b16 %v430
        %v3499 = vunpack.c.l.b16 %v431
        %v3500 = vunpack.c.l.b16 %v436
        %v3501 = vunpack.c.l.b16 %v437
        %v3502 = vpack.c.b16 %v3491, %v3490
        %v3503 = vpack.c.b16 %v3493, %v3492
        %v3504 = vpack.c.b16 %v3495, %v3494
        %v3505 = vpack.c.b16 %v3497, %v3496
        %v3506 = vpack.c.b16 %v3499, %v3498
        %v3507 = vpack.c.b16 %v3501, %v3500
        %v3530 = vunpack.c.l.b16 %v3468
        %v3531 = vunpack.c.l.b16 %v3469
        %v3532 = vunpack.c.l.b16 %v3470
        %v3533 = vunpack.c.l.b16 %v3471
        %v3534 = vunpack.c.l.b16 %v3472
        %v3535 = vunpack.c.l.b16 %v3473
        %v3536 = vunpack.c.l.b16 %v3474
        %v3537 = vunpack.c.l.b16 %v3475
        %v3538 = vunpack.c.l.b16 %v3476
        %v3539 = vunpack.c.l.b16 %v3477
        %v3540 = vunpack.c.l.b16 %v3478
        %v3541 = vunpack.c.l.b16 %v3479
        %v3542 = vunpack.c.l.b16 %v3480
        %v3543 = vunpack.c.l.b16 %v3481
        %v3544 = vunpack.c.l.b16 %v3482
        %v3545 = vunpack.c.l.b16 %v3483
        %v3546 = vpack.c.b16 %v3531, %v3530
        %v3547 = vpack.c.b16 %v3533, %v3532
        %v3548 = vpack.c.b16 %v3535, %v3534
        %v3549 = vpack.c.b16 %v3537, %v3536
        %v3550 = vpack.c.b16 %v3539, %v3538
        %v3551 = vpack.c.b16 %v3541, %v3540
        %v3552 = vpack.c.b16 %v3543, %v3542
        %v3553 = vpack.c.b16 %v3545, %v3544
        %3562 = vmatprep.subr.bf16.mxu0 0
        %3563 = vmatpush1.bf16.msra.mxu0 %v3553
        %3564 = vmatprep.subr.bf16.mxu0 0
        %3565 = vmatpush1.bf16.msra.mxu0 %v3552
        %3566 = vmatprep.subr.bf16.mxu0 0
        %3567 = vmatpush1.bf16.msra.mxu0 %v3551
        %3568 = vmatprep.subr.bf16.mxu0 0
        %3569 = vmatpush1.bf16.msra.mxu0 %v3550
        %3570 = vmatprep.subr.bf16.mxu0 0
        %3571 = vmatpush1.bf16.msra.mxu0 %v3549
        %3572 = vmatprep.subr.bf16.mxu0 0
        %3573 = vmatpush1.bf16.msra.mxu0 %v3548
        %3574 = vmatprep.subr.bf16.mxu0 0
        %3575 = vmatpush1.bf16.msra.mxu0 %v3547
        %3576 = vmatprep.subr.bf16.mxu0 0
        %3577 = vmatpush1.bf16.msra.mxu0 %v3546
        %3578 = vmatprep.subr.bf16.mxu0 0
        %3579 = vmatpush2.bf16.msra.mxu0 0
        %3580 = vmatprep.subr.bf16.mxu0 0
        %3581 = vmatpush2.bf16.msra.mxu0 0
        %3582 = vmatprep.subr.bf16.mxu0 0
        %3583 = vmatpush2.bf16.msra.mxu0 0
        %3584 = vmatprep.subr.bf16.mxu0 0
        %3585 = vmatpush2.bf16.msra.mxu0 0
        %3586 = vmatprep.subr.bf16.mxu0 0
        %3587 = vmatpush2.bf16.msra.mxu0 0
        %3588 = vmatprep.subr.bf16.mxu0 0
        %3589 = vmatpush2.bf16.msra.mxu0 0
        %3590 = vmatprep.subr.bf16.mxu0 0
        %3591 = vmatpush2.bf16.msra.mxu0 0
        %3592 = vmatprep.subr.bf16.mxu0 0
        %3593 = vmatpush2.bf16.msra.mxu0 0
        %3594 = vmatprep.mubr.bf16.mxu0 0
        %3595 = vmatmul.mubr.bf16.gmra.mxu0 %v3502
        %v3596 = vpop.f32.mrf.mxu0
        %v3597 = vadd.f32 0.0, %v3596
        %v3598 = vpop.f32.mrf.mxu0
        %v3599 = vpop.f32.mrf.mxu0
        %v3600 = vadd.f32 0.0, %v3599
        %v3601 = vpop.f32.mrf.mxu0
        %3602 = vmatprep.mubr.bf16.mxu0 0
        %3603 = vmatmul.mubr.bf16.gmra.mxu0 %v3503
        %v3604 = vpop.f32.mrf.mxu0
        %v3605 = vadd.f32 0.0, %v3604
        %v3606 = vpop.f32.mrf.mxu0
        %v3607 = vpop.f32.mrf.mxu0
        %v3608 = vadd.f32 0.0, %v3607
        %v3609 = vpop.f32.mrf.mxu0
        %3610 = vmatprep.mubr.bf16.mxu0 0
        %3611 = vmatmul.mubr.bf16.gmra.mxu0 %v3504
        %v3612 = vpop.f32.mrf.mxu0
        %v3613 = vadd.f32 0.0, %v3612
        %v3614 = vpop.f32.mrf.mxu0
        %v3615 = vpop.f32.mrf.mxu0
        %v3616 = vadd.f32 0.0, %v3615
        %v3617 = vpop.f32.mrf.mxu0
        %3618 = vmatprep.mubr.bf16.mxu0 0
        %3619 = vmatmul.mubr.bf16.gmra.mxu0 %v3505
        %v3620 = vpop.f32.mrf.mxu0
        %v3621 = vadd.f32 0.0, %v3620
        %v3622 = vpop.f32.mrf.mxu0
        %v3623 = vpop.f32.mrf.mxu0
        %v3624 = vadd.f32 0.0, %v3623
        %v3625 = vpop.f32.mrf.mxu0
        %3626 = vmatprep.mubr.bf16.mxu0 0
        %3627 = vmatmul.mubr.bf16.gmra.mxu0 %v3506
        %v3628 = vpop.f32.mrf.mxu0
        %v3629 = vadd.f32 0.0, %v3628
        %v3630 = vpop.f32.mrf.mxu0
        %v3631 = vpop.f32.mrf.mxu0
        %v3632 = vadd.f32 0.0, %v3631
        %v3633 = vpop.f32.mrf.mxu0
        %3634 = vmatprep.mubr.bf16.mxu0 0
        %3635 = vmatmul.mubr.bf16.gmra.mxu0 %v3507
        %v3636 = vpop.f32.mrf.mxu0
        %v3637 = vadd.f32 0.0, %v3636
        %v3638 = vpop.f32.mrf.mxu0
        %v3639 = vpop.f32.mrf.mxu0
        %v3640 = vadd.f32 0.0, %v3639
        %v3641 = vpop.f32.mrf.mxu0
        %3642 = vmatprep.mubr.bf16.mxu0 0
        %3643 = vmatmul.mubr.bf16.gmra.mxu0 %v1310
        %v3644 = vpop.f32.mrf.mxu0
        %v3645 = vadd.f32 0.0, %v3644
        %v3646 = vpop.f32.mrf.mxu0
        %v3647 = vpop.f32.mrf.mxu0
        %v3648 = vadd.f32 0.0, %v3647
        %v3649 = vpop.f32.mrf.mxu0
        %3650 = vmatprep.mubr.bf16.mxu0 0
        %3651 = vmatmul.mubr.bf16.gmra.mxu0 %v1311
        %v3652 = vpop.f32.mrf.mxu0
        %v3653 = vadd.f32 0.0, %v3652
        %v3654 = vpop.f32.mrf.mxu0
        %v3655 = vpop.f32.mrf.mxu0
        %v3656 = vadd.f32 0.0, %v3655
        %v3657 = vpop.f32.mrf.mxu0
        %3658 = vdwg.mxu0
        %v3659 = vadd.f32 %v3405, %v3597
        %v3660 = vadd.f32 %v3408, %v3600
        %v3661 = vadd.f32 %v3413, %v3605
        %v3662 = vadd.f32 %v3416, %v3608
        %v3663 = vadd.f32 %v3421, %v3613
        %v3664 = vadd.f32 %v3424, %v3616
        %v3665 = vadd.f32 %v3429, %v3621
        %v3666 = vadd.f32 %v3432, %v3624
        %v3667 = vadd.f32 %v3437, %v3629
        %v3668 = vadd.f32 %v3440, %v3632
        %v3669 = vadd.f32 %v3445, %v3637
        %v3670 = vadd.f32 %v3448, %v3640
        %v3671 = vadd.f32 %v3453, %v3645
        %v3672 = vadd.f32 %v3456, %v3648
        %v3673 = vadd.f32 %v3461, %v3653
        %v3674 = vadd.f32 %v3464, %v3656
        %v3689 = vrot.slane %v407, 6
        %v3690 = vrot.slane %v3689, 4
        %v3691 = vrot.slane %v408, 6
        %v3692 = vsel %vm3071, %v3690, %v3691
        %v3693 = vrot.slane %v3691, 4
        %v3694 = vrot.slane %v409, 6
        %v3695 = vsel %vm3071, %v3693, %v3694
        %v3696 = vrot.slane %v413, 6
        %v3697 = vrot.slane %v3696, 4
        %v3698 = vrot.slane %v414, 6
        %v3699 = vsel %vm3071, %v3697, %v3698
        %v3700 = vrot.slane %v3698, 4
        %v3701 = vrot.slane %v415, 6
        %v3702 = vsel %vm3071, %v3700, %v3701
        %v3703 = vrot.slane %v419, 6
        %v3704 = vrot.slane %v3703, 4
        %v3705 = vrot.slane %v420, 6
        %v3706 = vsel %vm3071, %v3704, %v3705
        %v3707 = vrot.slane %v3705, 4
        %v3708 = vrot.slane %v421, 6
        %v3709 = vsel %vm3071, %v3707, %v3708
        %v3710 = vrot.slane %v425, 6
        %v3711 = vrot.slane %v3710, 4
        %v3712 = vrot.slane %v426, 6
        %v3713 = vsel %vm3071, %v3711, %v3712
        %v3714 = vrot.slane %v3712, 4
        %v3715 = vrot.slane %v427, 6
        %v3716 = vsel %vm3071, %v3714, %v3715
        %v3717 = vrot.slane %v431, 6
        %v3718 = vrot.slane %v3717, 4
        %v3719 = vrot.slane %v432, 6
        %v3720 = vsel %vm3071, %v3718, %v3719
        %v3721 = vrot.slane %v3719, 4
        %v3722 = vrot.slane %v433, 6
        %v3723 = vsel %vm3071, %v3721, %v3722
        %v3724 = vrot.slane %v437, 6
        %v3725 = vrot.slane %v3724, 4
        %v3726 = vrot.slane %v438, 6
        %v3727 = vsel %vm3071, %v3725, %v3726
        %v3728 = vrot.slane %v3726, 4
        %v3729 = vrot.slane %v439, 6
        %v3730 = vsel %vm3071, %v3728, %v3729
        %v3731 = vrot.slane %v443, 6
        %v3732 = vrot.slane %v3731, 4
        %v3733 = vrot.slane %v444, 6
        %v3734 = vsel %vm3071, %v3732, %v3733
        %v3735 = vrot.slane %v3733, 4
        %v3736 = vrot.slane %v445, 6
        %v3737 = vsel %vm3071, %v3735, %v3736
        %v3738 = vrot.slane %v449, 6
        %v3739 = vrot.slane %v3738, 4
        %v3740 = vrot.slane %v450, 6
        %v3741 = vsel %vm3071, %v3739, %v3740
        %v3742 = vrot.slane %v3740, 4
        %v3743 = vrot.slane %v451, 6
        %v3744 = vsel %vm3071, %v3742, %v3743
        %s3745 = scalar_lea.vmem [#allocation7], 704
        %v3746 = vld [vmem:[%s3745] sm:$0xf]
        %v3747 = vld [vmem:[%s3745 + $0x4] sm:$0xf]
        %v3748 = vld [vmem:[%s3745 + $0x8] sm:$0xf]
        %v3749 = vld [vmem:[%s3745 + $0xc] sm:$0xf]
        %v3750 = vld [vmem:[%s3745 + $0x10] sm:$0xf]
        %v3751 = vld [vmem:[%s3745 + $0x14] sm:$0xf]
        %v3752 = vld [vmem:[%s3745 + $0x18] sm:$0xf]
        %v3753 = vld [vmem:[%s3745 + $0x1c] sm:$0xf]
        %v3754 = vld [vmem:[%s3745 + $0x20] sm:$0xf]
        %v3755 = vld [vmem:[%s3745 + $0x24] sm:$0xf]
        %v3756 = vld [vmem:[%s3745 + $0x28] sm:$0xf]
        %v3757 = vld [vmem:[%s3745 + $0x2c] sm:$0xf]
        %v3758 = vld [vmem:[%s3745 + $0x30] sm:$0xf]
        %v3759 = vld [vmem:[%s3745 + $0x34] sm:$0xf]
        %v3760 = vld [vmem:[%s3745 + $0x38] sm:$0xf]
        %v3761 = vld [vmem:[%s3745 + $0x3c] sm:$0xf]
        %v3762 = vunpack.c.l.b16 %v3692
        %v3763 = vunpack.c.l.b16 %v3695
        %v3764 = vunpack.c.l.b16 %v3699
        %v3765 = vunpack.c.l.b16 %v3702
        %v3766 = vunpack.c.l.b16 %v3706
        %v3767 = vunpack.c.l.b16 %v3709
        %v3768 = vunpack.c.l.b16 %v3713
        %v3769 = vunpack.c.l.b16 %v3716
        %v3770 = vunpack.c.l.b16 %v3720
        %v3771 = vunpack.c.l.b16 %v3723
        %v3772 = vunpack.c.l.b16 %v3727
        %v3773 = vunpack.c.l.b16 %v3730
        %v3774 = vunpack.c.l.b16 %v3734
        %v3775 = vunpack.c.l.b16 %v3737
        %v3776 = vunpack.c.l.b16 %v3741
        %v3777 = vunpack.c.l.b16 %v3744
        %v3778 = vpack.c.b16 %v3763, %v3762
        %v3779 = vpack.c.b16 %v3765, %v3764
        %v3780 = vpack.c.b16 %v3767, %v3766
        %v3781 = vpack.c.b16 %v3769, %v3768
        %v3782 = vpack.c.b16 %v3771, %v3770
        %v3783 = vpack.c.b16 %v3773, %v3772
        %v3784 = vpack.c.b16 %v3775, %v3774
        %v3785 = vpack.c.b16 %v3777, %v3776
        %v3810 = vunpack.c.l.b16 %v3746
        %v3811 = vunpack.c.l.b16 %v3747
        %v3812 = vunpack.c.l.b16 %v3748
        %v3813 = vunpack.c.l.b16 %v3749
        %v3814 = vunpack.c.l.b16 %v3750
        %v3815 = vunpack.c.l.b16 %v3751
        %v3816 = vunpack.c.l.b16 %v3752
        %v3817 = vunpack.c.l.b16 %v3753
        %v3818 = vunpack.c.l.b16 %v3754
        %v3819 = vunpack.c.l.b16 %v3755
        %v3820 = vunpack.c.l.b16 %v3756
        %v3821 = vunpack.c.l.b16 %v3757
        %v3822 = vunpack.c.l.b16 %v3758
        %v3823 = vunpack.c.l.b16 %v3759
        %v3824 = vunpack.c.l.b16 %v3760
        %v3825 = vunpack.c.l.b16 %v3761
        %v3826 = vpack.c.b16 %v3811, %v3810
        %v3827 = vpack.c.b16 %v3813, %v3812
        %v3828 = vpack.c.b16 %v3815, %v3814
        %v3829 = vpack.c.b16 %v3817, %v3816
        %v3830 = vpack.c.b16 %v3819, %v3818
        %v3831 = vpack.c.b16 %v3821, %v3820
        %v3832 = vpack.c.b16 %v3823, %v3822
        %v3833 = vpack.c.b16 %v3825, %v3824
        %3842 = vmatprep.subr.bf16.mxu0 0
        %3843 = vmatpush1.bf16.msra.mxu0 %v3833
        %3844 = vmatprep.subr.bf16.mxu0 0
        %3845 = vmatpush1.bf16.msra.mxu0 %v3832
        %3846 = vmatprep.subr.bf16.mxu0 0
        %3847 = vmatpush1.bf16.msra.mxu0 %v3831
        %3848 = vmatprep.subr.bf16.mxu0 0
        %3849 = vmatpush1.bf16.msra.mxu0 %v3830
        %3850 = vmatprep.subr.bf16.mxu0 0
        %3851 = vmatpush1.bf16.msra.mxu0 %v3829
        %3852 = vmatprep.subr.bf16.mxu0 0
        %3853 = vmatpush1.bf16.msra.mxu0 %v3828
        %3854 = vmatprep.subr.bf16.mxu0 0
        %3855 = vmatpush1.bf16.msra.mxu0 %v3827
        %3856 = vmatprep.subr.bf16.mxu0 0
        %3857 = vmatpush1.bf16.msra.mxu0 %v3826
        %3858 = vmatprep.subr.bf16.mxu0 0
        %3859 = vmatpush2.bf16.msra.mxu0 0
        %3860 = vmatprep.subr.bf16.mxu0 0
        %3861 = vmatpush2.bf16.msra.mxu0 0
        %3862 = vmatprep.subr.bf16.mxu0 0
        %3863 = vmatpush2.bf16.msra.mxu0 0
        %3864 = vmatprep.subr.bf16.mxu0 0
        %3865 = vmatpush2.bf16.msra.mxu0 0
        %3866 = vmatprep.subr.bf16.mxu0 0
        %3867 = vmatpush2.bf16.msra.mxu0 0
        %3868 = vmatprep.subr.bf16.mxu0 0
        %3869 = vmatpush2.bf16.msra.mxu0 0
        %3870 = vmatprep.subr.bf16.mxu0 0
        %3871 = vmatpush2.bf16.msra.mxu0 0
        %3872 = vmatprep.subr.bf16.mxu0 0
        %3873 = vmatpush2.bf16.msra.mxu0 0
        %3874 = vmatprep.mubr.bf16.mxu0 0
        %3875 = vmatmul.mubr.bf16.gmra.mxu0 %v3778
        %v3876 = vpop.f32.mrf.mxu0
        %v3877 = vadd.f32 0.0, %v3876
        %v3878 = vpop.f32.mrf.mxu0
        %v3879 = vpop.f32.mrf.mxu0
        %v3880 = vadd.f32 0.0, %v3879
        %v3881 = vpop.f32.mrf.mxu0
        %3882 = vmatprep.mubr.bf16.mxu0 0
        %3883 = vmatmul.mubr.bf16.gmra.mxu0 %v3779
        %v3884 = vpop.f32.mrf.mxu0
        %v3885 = vadd.f32 0.0, %v3884
        %v3886 = vpop.f32.mrf.mxu0
        %v3887 = vpop.f32.mrf.mxu0
        %v3888 = vadd.f32 0.0, %v3887
        %v3889 = vpop.f32.mrf.mxu0
        %3890 = vmatprep.mubr.bf16.mxu0 0
        %3891 = vmatmul.mubr.bf16.gmra.mxu0 %v3780
        %v3892 = vpop.f32.mrf.mxu0
        %v3893 = vadd.f32 0.0, %v3892
        %v3894 = vpop.f32.mrf.mxu0
        %v3895 = vpop.f32.mrf.mxu0
        %v3896 = vadd.f32 0.0, %v3895
        %v3897 = vpop.f32.mrf.mxu0
        %3898 = vmatprep.mubr.bf16.mxu0 0
        %3899 = vmatmul.mubr.bf16.gmra.mxu0 %v3781
        %v3900 = vpop.f32.mrf.mxu0
        %v3901 = vadd.f32 0.0, %v3900
        %v3902 = vpop.f32.mrf.mxu0
        %v3903 = vpop.f32.mrf.mxu0
        %v3904 = vadd.f32 0.0, %v3903
        %v3905 = vpop.f32.mrf.mxu0
        %3906 = vmatprep.mubr.bf16.mxu0 0
        %3907 = vmatmul.mubr.bf16.gmra.mxu0 %v3782
        %v3908 = vpop.f32.mrf.mxu0
        %v3909 = vadd.f32 0.0, %v3908
        %v3910 = vpop.f32.mrf.mxu0
        %v3911 = vpop.f32.mrf.mxu0
        %v3912 = vadd.f32 0.0, %v3911
        %v3913 = vpop.f32.mrf.mxu0
        %3914 = vmatprep.mubr.bf16.mxu0 0
        %3915 = vmatmul.mubr.bf16.gmra.mxu0 %v3783
        %v3916 = vpop.f32.mrf.mxu0
        %v3917 = vadd.f32 0.0, %v3916
        %v3918 = vpop.f32.mrf.mxu0
        %v3919 = vpop.f32.mrf.mxu0
        %v3920 = vadd.f32 0.0, %v3919
        %v3921 = vpop.f32.mrf.mxu0
        %3922 = vmatprep.mubr.bf16.mxu0 0
        %3923 = vmatmul.mubr.bf16.gmra.mxu0 %v3784
        %v3924 = vpop.f32.mrf.mxu0
        %v3925 = vadd.f32 0.0, %v3924
        %v3926 = vpop.f32.mrf.mxu0
        %v3927 = vpop.f32.mrf.mxu0
        %v3928 = vadd.f32 0.0, %v3927
        %v3929 = vpop.f32.mrf.mxu0
        %3930 = vmatprep.mubr.bf16.mxu0 0
        %3931 = vmatmul.mubr.bf16.gmra.mxu0 %v3785
        %v3932 = vpop.f32.mrf.mxu0
        %v3933 = vadd.f32 0.0, %v3932
        %v3934 = vpop.f32.mrf.mxu0
        %v3935 = vpop.f32.mrf.mxu0
        %v3936 = vadd.f32 0.0, %v3935
        %v3937 = vpop.f32.mrf.mxu0
        %3938 = vdwg.mxu0
        %v3939 = vadd.f32 %v3659, %v3877
        %v3940 = vadd.f32 %v3660, %v3880
        %v3941 = vadd.f32 %v3661, %v3885
        %v3942 = vadd.f32 %v3662, %v3888
        %v3943 = vadd.f32 %v3663, %v3893
        %v3944 = vadd.f32 %v3664, %v3896
        %v3945 = vadd.f32 %v3665, %v3901
        %v3946 = vadd.f32 %v3666, %v3904
        %v3947 = vadd.f32 %v3667, %v3909
        %v3948 = vadd.f32 %v3668, %v3912
        %v3949 = vadd.f32 %v3669, %v3917
        %v3950 = vadd.f32 %v3670, %v3920
        %v3951 = vadd.f32 %v3671, %v3925
        %v3952 = vadd.f32 %v3672, %v3928
        %v3953 = vadd.f32 %v3673, %v3933
        %v3954 = vadd.f32 %v3674, %v3936
        %v3963 = vrot.slane %v468, 6
        %v3964 = vrot.slane %v3963, 4
        %v3965 = vrot.slane %v469, 6
        %v3966 = vsel %vm3071, %v3964, %v3965
        %v3967 = vrot.slane %v3965, 4
        %v3968 = vrot.slane %v470, 6
        %v3969 = vsel %vm3071, %v3967, %v3968
        %v3970 = vrot.slane %v474, 6
        %v3971 = vrot.slane %v3970, 4
        %v3972 = vrot.slane %v475, 6
        %v3973 = vsel %vm3071, %v3971, %v3972
        %v3974 = vrot.slane %v3972, 4
        %v3975 = vrot.slane %v476, 6
        %v3976 = vsel %vm3071, %v3974, %v3975
        %v3977 = vrot.slane %v480, 6
        %v3978 = vrot.slane %v3977, 4
        %v3979 = vrot.slane %v481, 6
        %v3980 = vsel %vm3071, %v3978, %v3979
        %v3981 = vrot.slane %v3979, 4
        %v3982 = vrot.slane %v482, 6
        %v3983 = vsel %vm3071, %v3981, %v3982
        %v3984 = vrot.slane %v486, 6
        %v3985 = vrot.slane %v3984, 4
        %v3986 = vrot.slane %v487, 6
        %v3987 = vsel %vm3071, %v3985, %v3986
        %v3988 = vrot.slane %v3986, 4
        %v3989 = vrot.slane %v488, 6
        %v3990 = vsel %vm3071, %v3988, %v3989
        %v3991 = vrot.slane %v492, 6
        %v3992 = vrot.slane %v3991, 4
        %v3993 = vrot.slane %v493, 6
        %v3994 = vsel %vm3071, %v3992, %v3993
        %v3995 = vrot.slane %v3993, 4
        %v3996 = vrot.slane %v494, 6
        %v3997 = vsel %vm3071, %v3995, %v3996
        %v3998 = vrot.slane %v498, 6
        %v3999 = vrot.slane %v3998, 4
        %v4000 = vrot.slane %v499, 6
        %v4001 = vsel %vm3071, %v3999, %v4000
        %v4002 = vrot.slane %v4000, 4
        %v4003 = vrot.slane %v500, 6
        %v4004 = vsel %vm3071, %v4002, %v4003
        %v4005 = vrot.slane %v504, 6
        %v4006 = vrot.slane %v4005, 4
        %v4007 = vrot.slane %v505, 6
        %v4008 = vsel %vm3071, %v4006, %v4007
        %v4009 = vrot.slane %v4007, 4
        %v4010 = vrot.slane %v506, 6
        %v4011 = vsel %vm3071, %v4009, %v4010
        %v4012 = vrot.slane %v510, 6
        %v4013 = vrot.slane %v4012, 4
        %v4014 = vrot.slane %v511, 6
        %v4015 = vsel %vm3071, %v4013, %v4014
        %v4016 = vrot.slane %v4014, 4
        %v4017 = vrot.slane %v512, 6
        %v4018 = vsel %vm3071, %v4016, %v4017
        %s4019 = scalar_lea.vmem [#allocation7], 768
        %v4020 = vld [vmem:[%s4019] sm:$0xf]
        %v4021 = vld [vmem:[%s4019 + $0x4] sm:$0xf]
        %v4022 = vld [vmem:[%s4019 + $0x8] sm:$0xf]
        %v4023 = vld [vmem:[%s4019 + $0xc] sm:$0xf]
        %v4024 = vld [vmem:[%s4019 + $0x10] sm:$0xf]
        %v4025 = vld [vmem:[%s4019 + $0x14] sm:$0xf]
        %v4026 = vld [vmem:[%s4019 + $0x18] sm:$0xf]
        %v4027 = vld [vmem:[%s4019 + $0x1c] sm:$0xf]
        %v4028 = vld [vmem:[%s4019 + $0x20] sm:$0xf]
        %v4029 = vld [vmem:[%s4019 + $0x24] sm:$0xf]
        %v4030 = vld [vmem:[%s4019 + $0x28] sm:$0xf]
        %v4031 = vld [vmem:[%s4019 + $0x2c] sm:$0xf]
        %v4032 = vld [vmem:[%s4019 + $0x30] sm:$0xf]
        %v4033 = vld [vmem:[%s4019 + $0x34] sm:$0xf]
        %v4034 = vld [vmem:[%s4019 + $0x38] sm:$0xf]
        %v4035 = vld [vmem:[%s4019 + $0x3c] sm:$0xf]
        %v4036 = vunpack.c.l.b16 %v3966
        %v4037 = vunpack.c.l.b16 %v3969
        %v4038 = vunpack.c.l.b16 %v3973
        %v4039 = vunpack.c.l.b16 %v3976
        %v4040 = vunpack.c.l.b16 %v3980
        %v4041 = vunpack.c.l.b16 %v3983
        %v4042 = vunpack.c.l.b16 %v3987
        %v4043 = vunpack.c.l.b16 %v3990
        %v4044 = vunpack.c.l.b16 %v3994
        %v4045 = vunpack.c.l.b16 %v3997
        %v4046 = vunpack.c.l.b16 %v4001
        %v4047 = vunpack.c.l.b16 %v4004
        %v4048 = vunpack.c.l.b16 %v4008
        %v4049 = vunpack.c.l.b16 %v4011
        %v4050 = vunpack.c.l.b16 %v4015
        %v4051 = vunpack.c.l.b16 %v4018
        %v4052 = vpack.c.b16 %v4037, %v4036
        %v4053 = vpack.c.b16 %v4039, %v4038
        %v4054 = vpack.c.b16 %v4041, %v4040
        %v4055 = vpack.c.b16 %v4043, %v4042
        %v4056 = vpack.c.b16 %v4045, %v4044
        %v4057 = vpack.c.b16 %v4047, %v4046
        %v4058 = vpack.c.b16 %v4049, %v4048
        %v4059 = vpack.c.b16 %v4051, %v4050
        %v4084 = vunpack.c.l.b16 %v4020
        %v4085 = vunpack.c.l.b16 %v4021
        %v4086 = vunpack.c.l.b16 %v4022
        %v4087 = vunpack.c.l.b16 %v4023
        %v4088 = vunpack.c.l.b16 %v4024
        %v4089 = vunpack.c.l.b16 %v4025
        %v4090 = vunpack.c.l.b16 %v4026
        %v4091 = vunpack.c.l.b16 %v4027
        %v4092 = vunpack.c.l.b16 %v4028
        %v4093 = vunpack.c.l.b16 %v4029
        %v4094 = vunpack.c.l.b16 %v4030
        %v4095 = vunpack.c.l.b16 %v4031
        %v4096 = vunpack.c.l.b16 %v4032
        %v4097 = vunpack.c.l.b16 %v4033
        %v4098 = vunpack.c.l.b16 %v4034
        %v4099 = vunpack.c.l.b16 %v4035
        %v4100 = vpack.c.b16 %v4085, %v4084
        %v4101 = vpack.c.b16 %v4087, %v4086
        %v4102 = vpack.c.b16 %v4089, %v4088
        %v4103 = vpack.c.b16 %v4091, %v4090
        %v4104 = vpack.c.b16 %v4093, %v4092
        %v4105 = vpack.c.b16 %v4095, %v4094
        %v4106 = vpack.c.b16 %v4097, %v4096
        %v4107 = vpack.c.b16 %v4099, %v4098
        %4116 = vmatprep.subr.bf16.mxu0 0
        %4117 = vmatpush1.bf16.msra.mxu0 %v4107
        %4118 = vmatprep.subr.bf16.mxu0 0
        %4119 = vmatpush1.bf16.msra.mxu0 %v4106
        %4120 = vmatprep.subr.bf16.mxu0 0
        %4121 = vmatpush1.bf16.msra.mxu0 %v4105
        %4122 = vmatprep.subr.bf16.mxu0 0
        %4123 = vmatpush1.bf16.msra.mxu0 %v4104
        %4124 = vmatprep.subr.bf16.mxu0 0
        %4125 = vmatpush1.bf16.msra.mxu0 %v4103
        %4126 = vmatprep.subr.bf16.mxu0 0
        %4127 = vmatpush1.bf16.msra.mxu0 %v4102
        %4128 = vmatprep.subr.bf16.mxu0 0
        %4129 = vmatpush1.bf16.msra.mxu0 %v4101
        %4130 = vmatprep.subr.bf16.mxu0 0
        %4131 = vmatpush1.bf16.msra.mxu0 %v4100
        %4132 = vmatprep.subr.bf16.mxu0 0
        %4133 = vmatpush2.bf16.msra.mxu0 0
        %4134 = vmatprep.subr.bf16.mxu0 0
        %4135 = vmatpush2.bf16.msra.mxu0 0
        %4136 = vmatprep.subr.bf16.mxu0 0
        %4137 = vmatpush2.bf16.msra.mxu0 0
        %4138 = vmatprep.subr.bf16.mxu0 0
        %4139 = vmatpush2.bf16.msra.mxu0 0
        %4140 = vmatprep.subr.bf16.mxu0 0
        %4141 = vmatpush2.bf16.msra.mxu0 0
        %4142 = vmatprep.subr.bf16.mxu0 0
        %4143 = vmatpush2.bf16.msra.mxu0 0
        %4144 = vmatprep.subr.bf16.mxu0 0
        %4145 = vmatpush2.bf16.msra.mxu0 0
        %4146 = vmatprep.subr.bf16.mxu0 0
        %4147 = vmatpush2.bf16.msra.mxu0 0
        %4148 = vmatprep.mubr.bf16.mxu0 0
        %4149 = vmatmul.mubr.bf16.gmra.mxu0 %v4052
        %v4150 = vpop.f32.mrf.mxu0
        %v4151 = vadd.f32 0.0, %v4150
        %v4152 = vpop.f32.mrf.mxu0
        %v4153 = vpop.f32.mrf.mxu0
        %v4154 = vadd.f32 0.0, %v4153
        %v4155 = vpop.f32.mrf.mxu0
        %4156 = vmatprep.mubr.bf16.mxu0 0
        %4157 = vmatmul.mubr.bf16.gmra.mxu0 %v4053
        %v4158 = vpop.f32.mrf.mxu0
        %v4159 = vadd.f32 0.0, %v4158
        %v4160 = vpop.f32.mrf.mxu0
        %v4161 = vpop.f32.mrf.mxu0
        %v4162 = vadd.f32 0.0, %v4161
        %v4163 = vpop.f32.mrf.mxu0
        %4164 = vmatprep.mubr.bf16.mxu0 0
        %4165 = vmatmul.mubr.bf16.gmra.mxu0 %v4054
        %v4166 = vpop.f32.mrf.mxu0
        %v4167 = vadd.f32 0.0, %v4166
        %v4168 = vpop.f32.mrf.mxu0
        %v4169 = vpop.f32.mrf.mxu0
        %v4170 = vadd.f32 0.0, %v4169
        %v4171 = vpop.f32.mrf.mxu0
        %4172 = vmatprep.mubr.bf16.mxu0 0
        %4173 = vmatmul.mubr.bf16.gmra.mxu0 %v4055
        %v4174 = vpop.f32.mrf.mxu0
        %v4175 = vadd.f32 0.0, %v4174
        %v4176 = vpop.f32.mrf.mxu0
        %v4177 = vpop.f32.mrf.mxu0
        %v4178 = vadd.f32 0.0, %v4177
        %v4179 = vpop.f32.mrf.mxu0
        %4180 = vmatprep.mubr.bf16.mxu0 0
        %4181 = vmatmul.mubr.bf16.gmra.mxu0 %v4056
        %v4182 = vpop.f32.mrf.mxu0
        %v4183 = vadd.f32 0.0, %v4182
        %v4184 = vpop.f32.mrf.mxu0
        %v4185 = vpop.f32.mrf.mxu0
        %v4186 = vadd.f32 0.0, %v4185
        %v4187 = vpop.f32.mrf.mxu0
        %4188 = vmatprep.mubr.bf16.mxu0 0
        %4189 = vmatmul.mubr.bf16.gmra.mxu0 %v4057
        %v4190 = vpop.f32.mrf.mxu0
        %v4191 = vadd.f32 0.0, %v4190
        %v4192 = vpop.f32.mrf.mxu0
        %v4193 = vpop.f32.mrf.mxu0
        %v4194 = vadd.f32 0.0, %v4193
        %v4195 = vpop.f32.mrf.mxu0
        %4196 = vmatprep.mubr.bf16.mxu0 0
        %4197 = vmatmul.mubr.bf16.gmra.mxu0 %v4058
        %v4198 = vpop.f32.mrf.mxu0
        %v4199 = vadd.f32 0.0, %v4198
        %v4200 = vpop.f32.mrf.mxu0
        %v4201 = vpop.f32.mrf.mxu0
        %v4202 = vadd.f32 0.0, %v4201
        %v4203 = vpop.f32.mrf.mxu0
        %4204 = vmatprep.mubr.bf16.mxu0 0
        %4205 = vmatmul.mubr.bf16.gmra.mxu0 %v4059
        %v4206 = vpop.f32.mrf.mxu0
        %v4207 = vadd.f32 0.0, %v4206
        %v4208 = vpop.f32.mrf.mxu0
        %v4209 = vpop.f32.mrf.mxu0
        %v4210 = vadd.f32 0.0, %v4209
        %v4211 = vpop.f32.mrf.mxu0
        %4212 = vdwg.mxu0
        %v4213 = vadd.f32 %v3939, %v4151
        %v4214 = vadd.f32 %v3940, %v4154
        %v4215 = vadd.f32 %v3941, %v4159
        %v4216 = vadd.f32 %v3942, %v4162
        %v4217 = vadd.f32 %v3943, %v4167
        %v4218 = vadd.f32 %v3944, %v4170
        %v4219 = vadd.f32 %v3945, %v4175
        %v4220 = vadd.f32 %v3946, %v4178
        %v4221 = vadd.f32 %v3947, %v4183
        %v4222 = vadd.f32 %v3948, %v4186
        %v4223 = vadd.f32 %v3949, %v4191
        %v4224 = vadd.f32 %v3950, %v4194
        %v4225 = vadd.f32 %v3951, %v4199
        %v4226 = vadd.f32 %v3952, %v4202
        %v4227 = vadd.f32 %v3953, %v4207
        %v4228 = vadd.f32 %v3954, %v4210
        %v4237 = vrot.slane %v471, 6
        %v4238 = vrot.slane %v4237, 4
        %v4239 = vrot.slane %v472, 6
        %v4240 = vsel %vm3071, %v4238, %v4239
        %v4241 = vrot.slane %v4239, 4
        %v4242 = vrot.slane %v473, 6
        %v4243 = vsel %vm3071, %v4241, %v4242
        %v4244 = vrot.slane %v477, 6
        %v4245 = vrot.slane %v4244, 4
        %v4246 = vrot.slane %v478, 6
        %v4247 = vsel %vm3071, %v4245, %v4246
        %v4248 = vrot.slane %v4246, 4
        %v4249 = vrot.slane %v479, 6
        %v4250 = vsel %vm3071, %v4248, %v4249
        %v4251 = vrot.slane %v483, 6
        %v4252 = vrot.slane %v4251, 4
        %v4253 = vrot.slane %v484, 6
        %v4254 = vsel %vm3071, %v4252, %v4253
        %v4255 = vrot.slane %v4253, 4
        %v4256 = vrot.slane %v485, 6
        %v4257 = vsel %vm3071, %v4255, %v4256
        %v4258 = vrot.slane %v489, 6
        %v4259 = vrot.slane %v4258, 4
        %v4260 = vrot.slane %v490, 6
        %v4261 = vsel %vm3071, %v4259, %v4260
        %v4262 = vrot.slane %v4260, 4
        %v4263 = vrot.slane %v491, 6
        %v4264 = vsel %vm3071, %v4262, %v4263
        %v4265 = vrot.slane %v495, 6
        %v4266 = vrot.slane %v4265, 4
        %v4267 = vrot.slane %v496, 6
        %v4268 = vsel %vm3071, %v4266, %v4267
        %v4269 = vrot.slane %v4267, 4
        %v4270 = vrot.slane %v497, 6
        %v4271 = vsel %vm3071, %v4269, %v4270
        %v4272 = vrot.slane %v501, 6
        %v4273 = vrot.slane %v4272, 4
        %v4274 = vrot.slane %v502, 6
        %v4275 = vsel %vm3071, %v4273, %v4274
        %v4276 = vrot.slane %v4274, 4
        %v4277 = vrot.slane %v503, 6
        %v4278 = vsel %vm3071, %v4276, %v4277
        %v4279 = vrot.slane %v507, 6
        %v4280 = vrot.slane %v4279, 4
        %v4281 = vrot.slane %v508, 6
        %v4282 = vsel %vm3071, %v4280, %v4281
        %v4283 = vrot.slane %v4281, 4
        %v4284 = vrot.slane %v509, 6
        %v4285 = vsel %vm3071, %v4283, %v4284
        %v4286 = vrot.slane %v513, 6
        %v4287 = vrot.slane %v4286, 4
        %v4288 = vrot.slane %v514, 6
        %v4289 = vsel %vm3071, %v4287, %v4288
        %v4290 = vrot.slane %v4288, 4
        %v4291 = vrot.slane %v515, 6
        %v4292 = vsel %vm3071, %v4290, %v4291
        %s4293 = scalar_lea.vmem [#allocation7], 896
        %v4294 = vld [vmem:[%s4293] sm:$0xf]
        %v4295 = vld [vmem:[%s4293 + $0x4] sm:$0xf]
        %v4296 = vld [vmem:[%s4293 + $0x8] sm:$0xf]
        %v4297 = vld [vmem:[%s4293 + $0xc] sm:$0xf]
        %v4298 = vld [vmem:[%s4293 + $0x10] sm:$0xf]
        %v4299 = vld [vmem:[%s4293 + $0x14] sm:$0xf]
        %v4300 = vld [vmem:[%s4293 + $0x18] sm:$0xf]
        %v4301 = vld [vmem:[%s4293 + $0x1c] sm:$0xf]
        %v4302 = vld [vmem:[%s4293 + $0x20] sm:$0xf]
        %v4303 = vld [vmem:[%s4293 + $0x24] sm:$0xf]
        %v4304 = vld [vmem:[%s4293 + $0x28] sm:$0xf]
        %v4305 = vld [vmem:[%s4293 + $0x2c] sm:$0xf]
        %v4306 = vld [vmem:[%s4293 + $0x30] sm:$0xf]
        %v4307 = vld [vmem:[%s4293 + $0x34] sm:$0xf]
        %v4308 = vld [vmem:[%s4293 + $0x38] sm:$0xf]
        %v4309 = vld [vmem:[%s4293 + $0x3c] sm:$0xf]
        %v4310 = vunpack.c.l.b16 %v4240
        %v4311 = vunpack.c.l.b16 %v4243
        %v4312 = vunpack.c.l.b16 %v4247
        %v4313 = vunpack.c.l.b16 %v4250
        %v4314 = vunpack.c.l.b16 %v4254
        %v4315 = vunpack.c.l.b16 %v4257
        %v4316 = vunpack.c.l.b16 %v4261
        %v4317 = vunpack.c.l.b16 %v4264
        %v4318 = vunpack.c.l.b16 %v4268
        %v4319 = vunpack.c.l.b16 %v4271
        %v4320 = vunpack.c.l.b16 %v4275
        %v4321 = vunpack.c.l.b16 %v4278
        %v4322 = vunpack.c.l.b16 %v4282
        %v4323 = vunpack.c.l.b16 %v4285
        %v4324 = vunpack.c.l.b16 %v4289
        %v4325 = vunpack.c.l.b16 %v4292
        %v4326 = vpack.c.b16 %v4311, %v4310
        %v4327 = vpack.c.b16 %v4313, %v4312
        %v4328 = vpack.c.b16 %v4315, %v4314
        %v4329 = vpack.c.b16 %v4317, %v4316
        %v4330 = vpack.c.b16 %v4319, %v4318
        %v4331 = vpack.c.b16 %v4321, %v4320
        %v4332 = vpack.c.b16 %v4323, %v4322
        %v4333 = vpack.c.b16 %v4325, %v4324
        %v4358 = vunpack.c.l.b16 %v4294
        %v4359 = vunpack.c.l.b16 %v4295
        %v4360 = vunpack.c.l.b16 %v4296
        %v4361 = vunpack.c.l.b16 %v4297
        %v4362 = vunpack.c.l.b16 %v4298
        %v4363 = vunpack.c.l.b16 %v4299
        %v4364 = vunpack.c.l.b16 %v4300
        %v4365 = vunpack.c.l.b16 %v4301
        %v4366 = vunpack.c.l.b16 %v4302
        %v4367 = vunpack.c.l.b16 %v4303
        %v4368 = vunpack.c.l.b16 %v4304
        %v4369 = vunpack.c.l.b16 %v4305
        %v4370 = vunpack.c.l.b16 %v4306
        %v4371 = vunpack.c.l.b16 %v4307
        %v4372 = vunpack.c.l.b16 %v4308
        %v4373 = vunpack.c.l.b16 %v4309
        %v4374 = vpack.c.b16 %v4359, %v4358
        %v4375 = vpack.c.b16 %v4361, %v4360
        %v4376 = vpack.c.b16 %v4363, %v4362
        %v4377 = vpack.c.b16 %v4365, %v4364
        %v4378 = vpack.c.b16 %v4367, %v4366
        %v4379 = vpack.c.b16 %v4369, %v4368
        %v4380 = vpack.c.b16 %v4371, %v4370
        %v4381 = vpack.c.b16 %v4373, %v4372
        %4390 = vmatprep.subr.bf16.mxu0 0
        %4391 = vmatpush1.bf16.msra.mxu0 %v4381
        %4392 = vmatprep.subr.bf16.mxu0 0
        %4393 = vmatpush1.bf16.msra.mxu0 %v4380
        %4394 = vmatprep.subr.bf16.mxu0 0
        %4395 = vmatpush1.bf16.msra.mxu0 %v4379
        %4396 = vmatprep.subr.bf16.mxu0 0
        %4397 = vmatpush1.bf16.msra.mxu0 %v4378
        %4398 = vmatprep.subr.bf16.mxu0 0
        %4399 = vmatpush1.bf16.msra.mxu0 %v4377
        %4400 = vmatprep.subr.bf16.mxu0 0
        %4401 = vmatpush1.bf16.msra.mxu0 %v4376
        %4402 = vmatprep.subr.bf16.mxu0 0
        %4403 = vmatpush1.bf16.msra.mxu0 %v4375
        %4404 = vmatprep.subr.bf16.mxu0 0
        %4405 = vmatpush1.bf16.msra.mxu0 %v4374
        %4406 = vmatprep.subr.bf16.mxu0 0
        %4407 = vmatpush2.bf16.msra.mxu0 0
        %4408 = vmatprep.subr.bf16.mxu0 0
        %4409 = vmatpush2.bf16.msra.mxu0 0
        %4410 = vmatprep.subr.bf16.mxu0 0
        %4411 = vmatpush2.bf16.msra.mxu0 0
        %4412 = vmatprep.subr.bf16.mxu0 0
        %4413 = vmatpush2.bf16.msra.mxu0 0
        %4414 = vmatprep.subr.bf16.mxu0 0
        %4415 = vmatpush2.bf16.msra.mxu0 0
        %4416 = vmatprep.subr.bf16.mxu0 0
        %4417 = vmatpush2.bf16.msra.mxu0 0
        %4418 = vmatprep.subr.bf16.mxu0 0
        %4419 = vmatpush2.bf16.msra.mxu0 0
        %4420 = vmatprep.subr.bf16.mxu0 0
        %4421 = vmatpush2.bf16.msra.mxu0 0
        %4422 = vmatprep.mubr.bf16.mxu0 0
        %4423 = vmatmul.mubr.bf16.gmra.mxu0 %v4326
        %v4424 = vpop.f32.mrf.mxu0
        %v4425 = vadd.f32 0.0, %v4424
        %v4426 = vpop.f32.mrf.mxu0
        %v4427 = vpop.f32.mrf.mxu0
        %v4428 = vadd.f32 0.0, %v4427
        %v4429 = vpop.f32.mrf.mxu0
        %4430 = vmatprep.mubr.bf16.mxu0 0
        %4431 = vmatmul.mubr.bf16.gmra.mxu0 %v4327
        %v4432 = vpop.f32.mrf.mxu0
        %v4433 = vadd.f32 0.0, %v4432
        %v4434 = vpop.f32.mrf.mxu0
        %v4435 = vpop.f32.mrf.mxu0
        %v4436 = vadd.f32 0.0, %v4435
        %v4437 = vpop.f32.mrf.mxu0
        %4438 = vmatprep.mubr.bf16.mxu0 0
        %4439 = vmatmul.mubr.bf16.gmra.mxu0 %v4328
        %v4440 = vpop.f32.mrf.mxu0
        %v4441 = vadd.f32 0.0, %v4440
        %v4442 = vpop.f32.mrf.mxu0
        %v4443 = vpop.f32.mrf.mxu0
        %v4444 = vadd.f32 0.0, %v4443
        %v4445 = vpop.f32.mrf.mxu0
        %4446 = vmatprep.mubr.bf16.mxu0 0
        %4447 = vmatmul.mubr.bf16.gmra.mxu0 %v4329
        %v4448 = vpop.f32.mrf.mxu0
        %v4449 = vadd.f32 0.0, %v4448
        %v4450 = vpop.f32.mrf.mxu0
        %v4451 = vpop.f32.mrf.mxu0
        %v4452 = vadd.f32 0.0, %v4451
        %v4453 = vpop.f32.mrf.mxu0
        %4454 = vmatprep.mubr.bf16.mxu0 0
        %4455 = vmatmul.mubr.bf16.gmra.mxu0 %v4330
        %v4456 = vpop.f32.mrf.mxu0
        %v4457 = vadd.f32 0.0, %v4456
        %v4458 = vpop.f32.mrf.mxu0
        %v4459 = vpop.f32.mrf.mxu0
        %v4460 = vadd.f32 0.0, %v4459
        %v4461 = vpop.f32.mrf.mxu0
        %4462 = vmatprep.mubr.bf16.mxu0 0
        %4463 = vmatmul.mubr.bf16.gmra.mxu0 %v4331
        %v4464 = vpop.f32.mrf.mxu0
        %v4465 = vadd.f32 0.0, %v4464
        %v4466 = vpop.f32.mrf.mxu0
        %v4467 = vpop.f32.mrf.mxu0
        %v4468 = vadd.f32 0.0, %v4467
        %v4469 = vpop.f32.mrf.mxu0
        %4470 = vmatprep.mubr.bf16.mxu0 0
        %4471 = vmatmul.mubr.bf16.gmra.mxu0 %v4332
        %v4472 = vpop.f32.mrf.mxu0
        %v4473 = vadd.f32 0.0, %v4472
        %v4474 = vpop.f32.mrf.mxu0
        %v4475 = vpop.f32.mrf.mxu0
        %v4476 = vadd.f32 0.0, %v4475
        %v4477 = vpop.f32.mrf.mxu0
        %4478 = vmatprep.mubr.bf16.mxu0 0
        %4479 = vmatmul.mubr.bf16.gmra.mxu0 %v4333
        %v4480 = vpop.f32.mrf.mxu0
        %v4481 = vadd.f32 0.0, %v4480
        %v4482 = vpop.f32.mrf.mxu0
        %v4483 = vpop.f32.mrf.mxu0
        %v4484 = vadd.f32 0.0, %v4483
        %v4485 = vpop.f32.mrf.mxu0
        %4486 = vdwg.mxu0
        %v4487 = vadd.f32 %v4213, %v4425
        %v4488 = vadd.f32 %v4214, %v4428
        %v4489 = vadd.f32 %v4215, %v4433
        %v4490 = vadd.f32 %v4216, %v4436
        %v4491 = vadd.f32 %v4217, %v4441
        %v4492 = vadd.f32 %v4218, %v4444
        %v4493 = vadd.f32 %v4219, %v4449
        %v4494 = vadd.f32 %v4220, %v4452
        %v4495 = vadd.f32 %v4221, %v4457
        %v4496 = vadd.f32 %v4222, %v4460
        %v4497 = vadd.f32 %v4223, %v4465
        %v4498 = vadd.f32 %v4224, %v4468
        %v4499 = vadd.f32 %v4225, %v4473
        %v4500 = vadd.f32 %v4226, %v4476
        %v4501 = vadd.f32 %v4227, %v4481
        %v4502 = vadd.f32 %v4228, %v4484
        %v4523 = vrot.slane %v532, 6
        %v4524 = vrot.slane %v4523, 4
        %v4525 = vrot.slane %v533, 6
        %v4526 = vsel %vm3071, %v4524, %v4525
        %v4527 = vrot.slane %v4525, 4
        %v4528 = vrot.slane %v534, 6
        %v4529 = vsel %vm3071, %v4527, %v4528
        %v4530 = vrot.slane %v538, 6
        %v4531 = vrot.slane %v4530, 4
        %v4532 = vrot.slane %v539, 6
        %v4533 = vsel %vm3071, %v4531, %v4532
        %v4534 = vrot.slane %v4532, 4
        %v4535 = vrot.slane %v540, 6
        %v4536 = vsel %vm3071, %v4534, %v4535
        %v4537 = vrot.slane %v544, 6
        %v4538 = vrot.slane %v4537, 4
        %v4539 = vrot.slane %v545, 6
        %v4540 = vsel %vm3071, %v4538, %v4539
        %v4541 = vrot.slane %v4539, 4
        %v4542 = vrot.slane %v546, 6
        %v4543 = vsel %vm3071, %v4541, %v4542
        %v4544 = vrot.slane %v550, 6
        %v4545 = vrot.slane %v4544, 4
        %v4546 = vrot.slane %v551, 6
        %v4547 = vsel %vm3071, %v4545, %v4546
        %v4548 = vrot.slane %v4546, 4
        %v4549 = vrot.slane %v552, 6
        %v4550 = vsel %vm3071, %v4548, %v4549
        %v4551 = vrot.slane %v556, 6
        %v4552 = vrot.slane %v4551, 4
        %v4553 = vrot.slane %v557, 6
        %v4554 = vsel %vm3071, %v4552, %v4553
        %v4555 = vrot.slane %v4553, 4
        %v4556 = vrot.slane %v558, 6
        %v4557 = vsel %vm3071, %v4555, %v4556
        %v4558 = vrot.slane %v562, 6
        %v4559 = vrot.slane %v4558, 4
        %v4560 = vrot.slane %v563, 6
        %v4561 = vsel %vm3071, %v4559, %v4560
        %v4562 = vrot.slane %v4560, 4
        %v4563 = vrot.slane %v564, 6
        %v4564 = vsel %vm3071, %v4562, %v4563
        %v4565 = vrot.slane %v568, 6
        %v4566 = vrot.slane %v4565, 4
        %v4567 = vrot.slane %v569, 6
        %v4568 = vsel %vm3071, %v4566, %v4567
        %v4569 = vrot.slane %v4567, 4
        %v4570 = vrot.slane %v570, 6
        %v4571 = vsel %vm3071, %v4569, %v4570
        %v4572 = vrot.slane %v574, 6
        %v4573 = vrot.slane %v4572, 4
        %v4574 = vrot.slane %v575, 6
        %v4575 = vsel %vm3071, %v4573, %v4574
        %v4576 = vrot.slane %v4574, 4
        %v4577 = vrot.slane %v576, 6
        %v4578 = vsel %vm3071, %v4576, %v4577
        %s4579 = scalar_lea.vmem [#allocation7], 960
        %v4580 = vld [vmem:[%s4579] sm:$0xf]
        %v4581 = vld [vmem:[%s4579 + $0x4] sm:$0xf]
        %v4582 = vld [vmem:[%s4579 + $0x8] sm:$0xf]
        %v4583 = vld [vmem:[%s4579 + $0xc] sm:$0xf]
        %v4584 = vld [vmem:[%s4579 + $0x10] sm:$0xf]
        %v4585 = vld [vmem:[%s4579 + $0x14] sm:$0xf]
        %v4586 = vld [vmem:[%s4579 + $0x18] sm:$0xf]
        %v4587 = vld [vmem:[%s4579 + $0x1c] sm:$0xf]
        %v4588 = vld [vmem:[%s4579 + $0x20] sm:$0xf]
        %v4589 = vld [vmem:[%s4579 + $0x24] sm:$0xf]
        %v4590 = vld [vmem:[%s4579 + $0x28] sm:$0xf]
        %v4591 = vld [vmem:[%s4579 + $0x2c] sm:$0xf]
        %v4592 = vld [vmem:[%s4579 + $0x30] sm:$0xf]
        %v4593 = vld [vmem:[%s4579 + $0x34] sm:$0xf]
        %v4594 = vld [vmem:[%s4579 + $0x38] sm:$0xf]
        %v4595 = vld [vmem:[%s4579 + $0x3c] sm:$0xf]
        %v4596 = vunpack.c.l.b16 %v4526
        %v4597 = vunpack.c.l.b16 %v4529
        %v4598 = vunpack.c.l.b16 %v4533
        %v4599 = vunpack.c.l.b16 %v4536
        %v4600 = vunpack.c.l.b16 %v4540
        %v4601 = vunpack.c.l.b16 %v4543
        %v4602 = vunpack.c.l.b16 %v4547
        %v4603 = vunpack.c.l.b16 %v4550
        %v4604 = vunpack.c.l.b16 %v4554
        %v4605 = vunpack.c.l.b16 %v4557
        %v4606 = vunpack.c.l.b16 %v4561
        %v4607 = vunpack.c.l.b16 %v4564
        %v4608 = vunpack.c.l.b16 %v4568
        %v4609 = vunpack.c.l.b16 %v4571
        %v4610 = vunpack.c.l.b16 %v4575
        %v4611 = vunpack.c.l.b16 %v4578
        %v4612 = vpack.c.b16 %v4597, %v4596
        %v4613 = vpack.c.b16 %v4599, %v4598
        %v4614 = vpack.c.b16 %v4601, %v4600
        %v4615 = vpack.c.b16 %v4603, %v4602
        %v4616 = vpack.c.b16 %v4605, %v4604
        %v4617 = vpack.c.b16 %v4607, %v4606
        %v4618 = vpack.c.b16 %v4609, %v4608
        %v4619 = vpack.c.b16 %v4611, %v4610
        %v4644 = vunpack.c.l.b16 %v4580
        %v4645 = vunpack.c.l.b16 %v4581
        %v4646 = vunpack.c.l.b16 %v4582
        %v4647 = vunpack.c.l.b16 %v4583
        %v4648 = vunpack.c.l.b16 %v4584
        %v4649 = vunpack.c.l.b16 %v4585
        %v4650 = vunpack.c.l.b16 %v4586
        %v4651 = vunpack.c.l.b16 %v4587
        %v4652 = vunpack.c.l.b16 %v4588
        %v4653 = vunpack.c.l.b16 %v4589
        %v4654 = vunpack.c.l.b16 %v4590
        %v4655 = vunpack.c.l.b16 %v4591
        %v4656 = vunpack.c.l.b16 %v4592
        %v4657 = vunpack.c.l.b16 %v4593
        %v4658 = vunpack.c.l.b16 %v4594
        %v4659 = vunpack.c.l.b16 %v4595
        %v4660 = vpack.c.b16 %v4645, %v4644
        %v4661 = vpack.c.b16 %v4647, %v4646
        %v4662 = vpack.c.b16 %v4649, %v4648
        %v4663 = vpack.c.b16 %v4651, %v4650
        %v4664 = vpack.c.b16 %v4653, %v4652
        %v4665 = vpack.c.b16 %v4655, %v4654
        %v4666 = vpack.c.b16 %v4657, %v4656
        %v4667 = vpack.c.b16 %v4659, %v4658
        %4676 = vmatprep.subr.bf16.mxu0 0
        %4677 = vmatpush1.bf16.msra.mxu0 %v4667
        %4678 = vmatprep.subr.bf16.mxu0 0
        %4679 = vmatpush1.bf16.msra.mxu0 %v4666
        %4680 = vmatprep.subr.bf16.mxu0 0
        %4681 = vmatpush1.bf16.msra.mxu0 %v4665
        %4682 = vmatprep.subr.bf16.mxu0 0
        %4683 = vmatpush1.bf16.msra.mxu0 %v4664
        %4684 = vmatprep.subr.bf16.mxu0 0
        %4685 = vmatpush1.bf16.msra.mxu0 %v4663
        %4686 = vmatprep.subr.bf16.mxu0 0
        %4687 = vmatpush1.bf16.msra.mxu0 %v4662
        %4688 = vmatprep.subr.bf16.mxu0 0
        %4689 = vmatpush1.bf16.msra.mxu0 %v4661
        %4690 = vmatprep.subr.bf16.mxu0 0
        %4691 = vmatpush1.bf16.msra.mxu0 %v4660
        %4692 = vmatprep.subr.bf16.mxu0 0
        %4693 = vmatpush2.bf16.msra.mxu0 0
        %4694 = vmatprep.subr.bf16.mxu0 0
        %4695 = vmatpush2.bf16.msra.mxu0 0
        %4696 = vmatprep.subr.bf16.mxu0 0
        %4697 = vmatpush2.bf16.msra.mxu0 0
        %4698 = vmatprep.subr.bf16.mxu0 0
        %4699 = vmatpush2.bf16.msra.mxu0 0
        %4700 = vmatprep.subr.bf16.mxu0 0
        %4701 = vmatpush2.bf16.msra.mxu0 0
        %4702 = vmatprep.subr.bf16.mxu0 0
        %4703 = vmatpush2.bf16.msra.mxu0 0
        %4704 = vmatprep.subr.bf16.mxu0 0
        %4705 = vmatpush2.bf16.msra.mxu0 0
        %4706 = vmatprep.subr.bf16.mxu0 0
        %4707 = vmatpush2.bf16.msra.mxu0 0
        %4708 = vmatprep.mubr.bf16.mxu0 0
        %4709 = vmatmul.mubr.bf16.gmra.mxu0 %v4612
        %v4710 = vpop.f32.mrf.mxu0
        %v4711 = vadd.f32 0.0, %v4710
        %v4712 = vpop.f32.mrf.mxu0
        %v4713 = vpop.f32.mrf.mxu0
        %v4714 = vadd.f32 0.0, %v4713
        %v4715 = vpop.f32.mrf.mxu0
        %4716 = vmatprep.mubr.bf16.mxu0 0
        %4717 = vmatmul.mubr.bf16.gmra.mxu0 %v4613
        %v4718 = vpop.f32.mrf.mxu0
        %v4719 = vadd.f32 0.0, %v4718
        %v4720 = vpop.f32.mrf.mxu0
        %v4721 = vpop.f32.mrf.mxu0
        %v4722 = vadd.f32 0.0, %v4721
        %v4723 = vpop.f32.mrf.mxu0
        %4724 = vmatprep.mubr.bf16.mxu0 0
        %4725 = vmatmul.mubr.bf16.gmra.mxu0 %v4614
        %v4726 = vpop.f32.mrf.mxu0
        %v4727 = vadd.f32 0.0, %v4726
        %v4728 = vpop.f32.mrf.mxu0
        %v4729 = vpop.f32.mrf.mxu0
        %v4730 = vadd.f32 0.0, %v4729
        %v4731 = vpop.f32.mrf.mxu0
        %4732 = vmatprep.mubr.bf16.mxu0 0
        %4733 = vmatmul.mubr.bf16.gmra.mxu0 %v4615
        %v4734 = vpop.f32.mrf.mxu0
        %v4735 = vadd.f32 0.0, %v4734
        %v4736 = vpop.f32.mrf.mxu0
        %v4737 = vpop.f32.mrf.mxu0
        %v4738 = vadd.f32 0.0, %v4737
        %v4739 = vpop.f32.mrf.mxu0
        %4740 = vmatprep.mubr.bf16.mxu0 0
        %4741 = vmatmul.mubr.bf16.gmra.mxu0 %v4616
        %v4742 = vpop.f32.mrf.mxu0
        %v4743 = vadd.f32 0.0, %v4742
        %v4744 = vpop.f32.mrf.mxu0
        %v4745 = vpop.f32.mrf.mxu0
        %v4746 = vadd.f32 0.0, %v4745
        %v4747 = vpop.f32.mrf.mxu0
        %4748 = vmatprep.mubr.bf16.mxu0 0
        %4749 = vmatmul.mubr.bf16.gmra.mxu0 %v4617
        %v4750 = vpop.f32.mrf.mxu0
        %v4751 = vadd.f32 0.0, %v4750
        %v4752 = vpop.f32.mrf.mxu0
        %v4753 = vpop.f32.mrf.mxu0
        %v4754 = vadd.f32 0.0, %v4753
        %v4755 = vpop.f32.mrf.mxu0
        %4756 = vmatprep.mubr.bf16.mxu0 0
        %4757 = vmatmul.mubr.bf16.gmra.mxu0 %v4618
        %v4758 = vpop.f32.mrf.mxu0
        %v4759 = vadd.f32 0.0, %v4758
        %v4760 = vpop.f32.mrf.mxu0
        %v4761 = vpop.f32.mrf.mxu0
        %v4762 = vadd.f32 0.0, %v4761
        %v4763 = vpop.f32.mrf.mxu0
        %4764 = vmatprep.mubr.bf16.mxu0 0
        %4765 = vmatmul.mubr.bf16.gmra.mxu0 %v4619
        %v4766 = vpop.f32.mrf.mxu0
        %v4767 = vadd.f32 0.0, %v4766
        %v4768 = vpop.f32.mrf.mxu0
        %v4769 = vpop.f32.mrf.mxu0
        %v4770 = vadd.f32 0.0, %v4769
        %v4771 = vpop.f32.mrf.mxu0
        %4772 = vdwg.mxu0
        %v4773 = vadd.f32 %v4487, %v4711
        %v4774 = vadd.f32 %v4488, %v4714
        %v4775 = vadd.f32 %v4489, %v4719
        %v4776 = vadd.f32 %v4490, %v4722
        %v4777 = vadd.f32 %v4491, %v4727
        %v4778 = vadd.f32 %v4492, %v4730
        %v4779 = vadd.f32 %v4493, %v4735
        %v4780 = vadd.f32 %v4494, %v4738
        %v4781 = vadd.f32 %v4495, %v4743
        %v4782 = vadd.f32 %v4496, %v4746
        %v4783 = vadd.f32 %v4497, %v4751
        %v4784 = vadd.f32 %v4498, %v4754
        %v4785 = vadd.f32 %v4499, %v4759
        %v4786 = vadd.f32 %v4500, %v4762
        %v4787 = vadd.f32 %v4501, %v4767
        %v4788 = vadd.f32 %v4502, %v4770
        %s4789 = scalar_lea.vmem [#allocation7], 1024
        %v4790 = vld [vmem:[%s4789] sm:$0xf]
        %v4791 = vld [vmem:[%s4789 + $0x4] sm:$0xf]
        %v4792 = vld [vmem:[%s4789 + $0x8] sm:$0xf]
        %v4793 = vld [vmem:[%s4789 + $0xc] sm:$0xf]
        %v4794 = vld [vmem:[%s4789 + $0x10] sm:$0xf]
        %v4795 = vld [vmem:[%s4789 + $0x14] sm:$0xf]
        %v4796 = vld [vmem:[%s4789 + $0x18] sm:$0xf]
        %v4797 = vld [vmem:[%s4789 + $0x1c] sm:$0xf]
        %v4798 = vld [vmem:[%s4789 + $0x20] sm:$0xf]
        %v4799 = vld [vmem:[%s4789 + $0x24] sm:$0xf]
        %v4800 = vld [vmem:[%s4789 + $0x28] sm:$0xf]
        %v4801 = vld [vmem:[%s4789 + $0x2c] sm:$0xf]
        %v4802 = vld [vmem:[%s4789 + $0x30] sm:$0xf]
        %v4803 = vld [vmem:[%s4789 + $0x34] sm:$0xf]
        %v4804 = vld [vmem:[%s4789 + $0x38] sm:$0xf]
        %v4805 = vld [vmem:[%s4789 + $0x3c] sm:$0xf]
        %v4812 = vunpack.c.l.b16 %v546
        %v4813 = vunpack.c.l.b16 %v547
        %v4814 = vunpack.c.l.b16 %v552
        %v4815 = vunpack.c.l.b16 %v553
        %v4816 = vunpack.c.l.b16 %v558
        %v4817 = vunpack.c.l.b16 %v559
        %v4818 = vunpack.c.l.b16 %v564
        %v4819 = vunpack.c.l.b16 %v565
        %v4820 = vunpack.c.l.b16 %v570
        %v4821 = vunpack.c.l.b16 %v571
        %v4822 = vunpack.c.l.b16 %v576
        %v4823 = vunpack.c.l.b16 %v577
        %v4824 = vpack.c.b16 %v4813, %v4812
        %v4825 = vpack.c.b16 %v4815, %v4814
        %v4826 = vpack.c.b16 %v4817, %v4816
        %v4827 = vpack.c.b16 %v4819, %v4818
        %v4828 = vpack.c.b16 %v4821, %v4820
        %v4829 = vpack.c.b16 %v4823, %v4822
        %v4852 = vunpack.c.l.b16 %v4790
        %v4853 = vunpack.c.l.b16 %v4791
        %v4854 = vunpack.c.l.b16 %v4792
        %v4855 = vunpack.c.l.b16 %v4793
        %v4856 = vunpack.c.l.b16 %v4794
        %v4857 = vunpack.c.l.b16 %v4795
        %v4858 = vunpack.c.l.b16 %v4796
        %v4859 = vunpack.c.l.b16 %v4797
        %v4860 = vunpack.c.l.b16 %v4798
        %v4861 = vunpack.c.l.b16 %v4799
        %v4862 = vunpack.c.l.b16 %v4800
        %v4863 = vunpack.c.l.b16 %v4801
        %v4864 = vunpack.c.l.b16 %v4802
        %v4865 = vunpack.c.l.b16 %v4803
        %v4866 = vunpack.c.l.b16 %v4804
        %v4867 = vunpack.c.l.b16 %v4805
        %v4868 = vpack.c.b16 %v4853, %v4852
        %v4869 = vpack.c.b16 %v4855, %v4854
        %v4870 = vpack.c.b16 %v4857, %v4856
        %v4871 = vpack.c.b16 %v4859, %v4858
        %v4872 = vpack.c.b16 %v4861, %v4860
        %v4873 = vpack.c.b16 %v4863, %v4862
        %v4874 = vpack.c.b16 %v4865, %v4864
        %v4875 = vpack.c.b16 %v4867, %v4866
        %4884 = vmatprep.subr.bf16.mxu0 0
        %4885 = vmatpush1.bf16.msra.mxu0 %v4875
        %4886 = vmatprep.subr.bf16.mxu0 0
        %4887 = vmatpush1.bf16.msra.mxu0 %v4874
        %4888 = vmatprep.subr.bf16.mxu0 0
        %4889 = vmatpush1.bf16.msra.mxu0 %v4873
        %4890 = vmatprep.subr.bf16.mxu0 0
        %4891 = vmatpush1.bf16.msra.mxu0 %v4872
        %4892 = vmatprep.subr.bf16.mxu0 0
        %4893 = vmatpush1.bf16.msra.mxu0 %v4871
        %4894 = vmatprep.subr.bf16.mxu0 0
        %4895 = vmatpush1.bf16.msra.mxu0 %v4870
        %4896 = vmatprep.subr.bf16.mxu0 0
        %4897 = vmatpush1.bf16.msra.mxu0 %v4869
        %4898 = vmatprep.subr.bf16.mxu0 0
        %4899 = vmatpush1.bf16.msra.mxu0 %v4868
        %4900 = vmatprep.subr.bf16.mxu0 0
        %4901 = vmatpush2.bf16.msra.mxu0 0
        %4902 = vmatprep.subr.bf16.mxu0 0
        %4903 = vmatpush2.bf16.msra.mxu0 0
        %4904 = vmatprep.subr.bf16.mxu0 0
        %4905 = vmatpush2.bf16.msra.mxu0 0
        %4906 = vmatprep.subr.bf16.mxu0 0
        %4907 = vmatpush2.bf16.msra.mxu0 0
        %4908 = vmatprep.subr.bf16.mxu0 0
        %4909 = vmatpush2.bf16.msra.mxu0 0
        %4910 = vmatprep.subr.bf16.mxu0 0
        %4911 = vmatpush2.bf16.msra.mxu0 0
        %4912 = vmatprep.subr.bf16.mxu0 0
        %4913 = vmatpush2.bf16.msra.mxu0 0
        %4914 = vmatprep.subr.bf16.mxu0 0
        %4915 = vmatpush2.bf16.msra.mxu0 0
        %4916 = vmatprep.mubr.bf16.mxu0 0
        %4917 = vmatmul.mubr.bf16.gmra.mxu0 %v2555
        %v4918 = vpop.f32.mrf.mxu0
        %v4919 = vadd.f32 0.0, %v4918
        %v4920 = vpop.f32.mrf.mxu0
        %v4921 = vpop.f32.mrf.mxu0
        %v4922 = vadd.f32 0.0, %v4921
        %v4923 = vpop.f32.mrf.mxu0
        %4924 = vmatprep.mubr.bf16.mxu0 0
        %4925 = vmatmul.mubr.bf16.gmra.mxu0 %v2556
        %v4926 = vpop.f32.mrf.mxu0
        %v4927 = vadd.f32 0.0, %v4926
        %v4928 = vpop.f32.mrf.mxu0
        %v4929 = vpop.f32.mrf.mxu0
        %v4930 = vadd.f32 0.0, %v4929
        %v4931 = vpop.f32.mrf.mxu0
        %4932 = vmatprep.mubr.bf16.mxu0 0
        %4933 = vmatmul.mubr.bf16.gmra.mxu0 %v4824
        %v4934 = vpop.f32.mrf.mxu0
        %v4935 = vadd.f32 0.0, %v4934
        %v4936 = vpop.f32.mrf.mxu0
        %v4937 = vpop.f32.mrf.mxu0
        %v4938 = vadd.f32 0.0, %v4937
        %v4939 = vpop.f32.mrf.mxu0
        %4940 = vmatprep.mubr.bf16.mxu0 0
        %4941 = vmatmul.mubr.bf16.gmra.mxu0 %v4825
        %v4942 = vpop.f32.mrf.mxu0
        %v4943 = vadd.f32 0.0, %v4942
        %v4944 = vpop.f32.mrf.mxu0
        %v4945 = vpop.f32.mrf.mxu0
        %v4946 = vadd.f32 0.0, %v4945
        %v4947 = vpop.f32.mrf.mxu0
        %4948 = vmatprep.mubr.bf16.mxu0 0
        %4949 = vmatmul.mubr.bf16.gmra.mxu0 %v4826
        %v4950 = vpop.f32.mrf.mxu0
        %v4951 = vadd.f32 0.0, %v4950
        %v4952 = vpop.f32.mrf.mxu0
        %v4953 = vpop.f32.mrf.mxu0
        %v4954 = vadd.f32 0.0, %v4953
        %v4955 = vpop.f32.mrf.mxu0
        %4956 = vmatprep.mubr.bf16.mxu0 0
        %4957 = vmatmul.mubr.bf16.gmra.mxu0 %v4827
        %v4958 = vpop.f32.mrf.mxu0
        %v4959 = vadd.f32 0.0, %v4958
        %v4960 = vpop.f32.mrf.mxu0
        %v4961 = vpop.f32.mrf.mxu0
        %v4962 = vadd.f32 0.0, %v4961
        %v4963 = vpop.f32.mrf.mxu0
        %4964 = vmatprep.mubr.bf16.mxu0 0
        %4965 = vmatmul.mubr.bf16.gmra.mxu0 %v4828
        %v4966 = vpop.f32.mrf.mxu0
        %v4967 = vadd.f32 0.0, %v4966
        %v4968 = vpop.f32.mrf.mxu0
        %v4969 = vpop.f32.mrf.mxu0
        %v4970 = vadd.f32 0.0, %v4969
        %v4971 = vpop.f32.mrf.mxu0
        %4972 = vmatprep.mubr.bf16.mxu0 0
        %4973 = vmatmul.mubr.bf16.gmra.mxu0 %v4829
        %v4974 = vpop.f32.mrf.mxu0
        %v4975 = vadd.f32 0.0, %v4974
        %v4976 = vpop.f32.mrf.mxu0
        %v4977 = vpop.f32.mrf.mxu0
        %v4978 = vadd.f32 0.0, %v4977
        %v4979 = vpop.f32.mrf.mxu0
        %4980 = vdwg.mxu0
        %v4981 = vadd.f32 %v4773, %v4919
        %v4982 = vadd.f32 %v4774, %v4922
        %v4983 = vadd.f32 %v4775, %v4927
        %v4984 = vadd.f32 %v4776, %v4930
        %v4985 = vadd.f32 %v4777, %v4935
        %v4986 = vadd.f32 %v4778, %v4938
        %v4987 = vadd.f32 %v4779, %v4943
        %v4988 = vadd.f32 %v4780, %v4946
        %v4989 = vadd.f32 %v4781, %v4951
        %v4990 = vadd.f32 %v4782, %v4954
        %v4991 = vadd.f32 %v4783, %v4959
        %v4992 = vadd.f32 %v4784, %v4962
        %v4993 = vadd.f32 %v4785, %v4967
        %v4994 = vadd.f32 %v4786, %v4970
        %v4995 = vadd.f32 %v4787, %v4975
        %v4996 = vadd.f32 %v4788, %v4978
        %v5011 = vrot.slane %v535, 6
        %v5012 = vrot.slane %v5011, 4
        %v5013 = vrot.slane %v536, 6
        %v5014 = vsel %vm3071, %v5012, %v5013
        %v5015 = vrot.slane %v5013, 4
        %v5016 = vrot.slane %v537, 6
        %v5017 = vsel %vm3071, %v5015, %v5016
        %v5018 = vrot.slane %v541, 6
        %v5019 = vrot.slane %v5018, 4
        %v5020 = vrot.slane %v542, 6
        %v5021 = vsel %vm3071, %v5019, %v5020
        %v5022 = vrot.slane %v5020, 4
        %v5023 = vrot.slane %v543, 6
        %v5024 = vsel %vm3071, %v5022, %v5023
        %v5025 = vrot.slane %v547, 6
        %v5026 = vrot.slane %v5025, 4
        %v5027 = vrot.slane %v548, 6
        %v5028 = vsel %vm3071, %v5026, %v5027
        %v5029 = vrot.slane %v5027, 4
        %v5030 = vrot.slane %v549, 6
        %v5031 = vsel %vm3071, %v5029, %v5030
        %v5032 = vrot.slane %v553, 6
        %v5033 = vrot.slane %v5032, 4
        %v5034 = vrot.slane %v554, 6
        %v5035 = vsel %vm3071, %v5033, %v5034
        %v5036 = vrot.slane %v5034, 4
        %v5037 = vrot.slane %v555, 6
        %v5038 = vsel %vm3071, %v5036, %v5037
        %v5039 = vrot.slane %v559, 6
        %v5040 = vrot.slane %v5039, 4
        %v5041 = vrot.slane %v560, 6
        %v5042 = vsel %vm3071, %v5040, %v5041
        %v5043 = vrot.slane %v5041, 4
        %v5044 = vrot.slane %v561, 6
        %v5045 = vsel %vm3071, %v5043, %v5044
        %v5046 = vrot.slane %v565, 6
        %v5047 = vrot.slane %v5046, 4
        %v5048 = vrot.slane %v566, 6
        %v5049 = vsel %vm3071, %v5047, %v5048
        %v5050 = vrot.slane %v5048, 4
        %v5051 = vrot.slane %v567, 6
        %v5052 = vsel %vm3071, %v5050, %v5051
        %v5053 = vrot.slane %v571, 6
        %v5054 = vrot.slane %v5053, 4
        %v5055 = vrot.slane %v572, 6
        %v5056 = vsel %vm3071, %v5054, %v5055
        %v5057 = vrot.slane %v5055, 4
        %v5058 = vrot.slane %v573, 6
        %v5059 = vsel %vm3071, %v5057, %v5058
        %v5060 = vrot.slane %v577, 6
        %v5061 = vrot.slane %v5060, 4
        %v5062 = vrot.slane %v578, 6
        %v5063 = vsel %vm3071, %v5061, %v5062
        %v5064 = vrot.slane %v5062, 4
        %v5065 = vrot.slane %v579, 6
        %v5066 = vsel %vm3071, %v5064, %v5065
        %s5067 = scalar_lea.vmem [#allocation7], 1088
        %v5068 = vld [vmem:[%s5067] sm:$0xf]
        %v5069 = vld [vmem:[%s5067 + $0x4] sm:$0xf]
        %v5070 = vld [vmem:[%s5067 + $0x8] sm:$0xf]
        %v5071 = vld [vmem:[%s5067 + $0xc] sm:$0xf]
        %v5072 = vld [vmem:[%s5067 + $0x10] sm:$0xf]
        %v5073 = vld [vmem:[%s5067 + $0x14] sm:$0xf]
        %v5074 = vld [vmem:[%s5067 + $0x18] sm:$0xf]
        %v5075 = vld [vmem:[%s5067 + $0x1c] sm:$0xf]
        %v5076 = vld [vmem:[%s5067 + $0x20] sm:$0xf]
        %v5077 = vld [vmem:[%s5067 + $0x24] sm:$0xf]
        %v5078 = vld [vmem:[%s5067 + $0x28] sm:$0xf]
        %v5079 = vld [vmem:[%s5067 + $0x2c] sm:$0xf]
        %v5080 = vld [vmem:[%s5067 + $0x30] sm:$0xf]
        %v5081 = vld [vmem:[%s5067 + $0x34] sm:$0xf]
        %v5082 = vld [vmem:[%s5067 + $0x38] sm:$0xf]
        %v5083 = vld [vmem:[%s5067 + $0x3c] sm:$0xf]
        %v5084 = vunpack.c.l.b16 %v5014
        %v5085 = vunpack.c.l.b16 %v5017
        %v5086 = vunpack.c.l.b16 %v5021
        %v5087 = vunpack.c.l.b16 %v5024
        %v5088 = vunpack.c.l.b16 %v5028
        %v5089 = vunpack.c.l.b16 %v5031
        %v5090 = vunpack.c.l.b16 %v5035
        %v5091 = vunpack.c.l.b16 %v5038
        %v5092 = vunpack.c.l.b16 %v5042
        %v5093 = vunpack.c.l.b16 %v5045
        %v5094 = vunpack.c.l.b16 %v5049
        %v5095 = vunpack.c.l.b16 %v5052
        %v5096 = vunpack.c.l.b16 %v5056
        %v5097 = vunpack.c.l.b16 %v5059
        %v5098 = vunpack.c.l.b16 %v5063
        %v5099 = vunpack.c.l.b16 %v5066
        %v5100 = vpack.c.b16 %v5085, %v5084
        %v5101 = vpack.c.b16 %v5087, %v5086
        %v5102 = vpack.c.b16 %v5089, %v5088
        %v5103 = vpack.c.b16 %v5091, %v5090
        %v5104 = vpack.c.b16 %v5093, %v5092
        %v5105 = vpack.c.b16 %v5095, %v5094
        %v5106 = vpack.c.b16 %v5097, %v5096
        %v5107 = vpack.c.b16 %v5099, %v5098
        %v5132 = vunpack.c.l.b16 %v5068
        %v5133 = vunpack.c.l.b16 %v5069
        %v5134 = vunpack.c.l.b16 %v5070
        %v5135 = vunpack.c.l.b16 %v5071
        %v5136 = vunpack.c.l.b16 %v5072
        %v5137 = vunpack.c.l.b16 %v5073
        %v5138 = vunpack.c.l.b16 %v5074
        %v5139 = vunpack.c.l.b16 %v5075
        %v5140 = vunpack.c.l.b16 %v5076
        %v5141 = vunpack.c.l.b16 %v5077
        %v5142 = vunpack.c.l.b16 %v5078
        %v5143 = vunpack.c.l.b16 %v5079
        %v5144 = vunpack.c.l.b16 %v5080
        %v5145 = vunpack.c.l.b16 %v5081
        %v5146 = vunpack.c.l.b16 %v5082
        %v5147 = vunpack.c.l.b16 %v5083
        %v5148 = vpack.c.b16 %v5133, %v5132
        %v5149 = vpack.c.b16 %v5135, %v5134
        %v5150 = vpack.c.b16 %v5137, %v5136
        %v5151 = vpack.c.b16 %v5139, %v5138
        %v5152 = vpack.c.b16 %v5141, %v5140
        %v5153 = vpack.c.b16 %v5143, %v5142
        %v5154 = vpack.c.b16 %v5145, %v5144
        %v5155 = vpack.c.b16 %v5147, %v5146
        %5164 = vmatprep.subr.bf16.mxu0 0
        %5165 = vmatpush1.bf16.msra.mxu0 %v5155
        %5166 = vmatprep.subr.bf16.mxu0 0
        %5167 = vmatpush1.bf16.msra.mxu0 %v5154
        %5168 = vmatprep.subr.bf16.mxu0 0
        %5169 = vmatpush1.bf16.msra.mxu0 %v5153
        %5170 = vmatprep.subr.bf16.mxu0 0
        %5171 = vmatpush1.bf16.msra.mxu0 %v5152
        %5172 = vmatprep.subr.bf16.mxu0 0
        %5173 = vmatpush1.bf16.msra.mxu0 %v5151
        %5174 = vmatprep.subr.bf16.mxu0 0
        %5175 = vmatpush1.bf16.msra.mxu0 %v5150
        %5176 = vmatprep.subr.bf16.mxu0 0
        %5177 = vmatpush1.bf16.msra.mxu0 %v5149
        %5178 = vmatprep.subr.bf16.mxu0 0
        %5179 = vmatpush1.bf16.msra.mxu0 %v5148
        %5180 = vmatprep.subr.bf16.mxu0 0
        %5181 = vmatpush2.bf16.msra.mxu0 0
        %5182 = vmatprep.subr.bf16.mxu0 0
        %5183 = vmatpush2.bf16.msra.mxu0 0
        %5184 = vmatprep.subr.bf16.mxu0 0
        %5185 = vmatpush2.bf16.msra.mxu0 0
        %5186 = vmatprep.subr.bf16.mxu0 0
        %5187 = vmatpush2.bf16.msra.mxu0 0
        %5188 = vmatprep.subr.bf16.mxu0 0
        %5189 = vmatpush2.bf16.msra.mxu0 0
        %5190 = vmatprep.subr.bf16.mxu0 0
        %5191 = vmatpush2.bf16.msra.mxu0 0
        %5192 = vmatprep.subr.bf16.mxu0 0
        %5193 = vmatpush2.bf16.msra.mxu0 0
        %5194 = vmatprep.subr.bf16.mxu0 0
        %5195 = vmatpush2.bf16.msra.mxu0 0
        %5196 = vmatprep.mubr.bf16.mxu0 0
        %5197 = vmatmul.mubr.bf16.gmra.mxu0 %v5100
        %v5198 = vpop.f32.mrf.mxu0
        %v5199 = vadd.f32 0.0, %v5198
        %v5200 = vpop.f32.mrf.mxu0
        %v5201 = vpop.f32.mrf.mxu0
        %v5202 = vadd.f32 0.0, %v5201
        %v5203 = vpop.f32.mrf.mxu0
        %5204 = vmatprep.mubr.bf16.mxu0 0
        %5205 = vmatmul.mubr.bf16.gmra.mxu0 %v5101
        %v5206 = vpop.f32.mrf.mxu0
        %v5207 = vadd.f32 0.0, %v5206
        %v5208 = vpop.f32.mrf.mxu0
        %v5209 = vpop.f32.mrf.mxu0
        %v5210 = vadd.f32 0.0, %v5209
        %v5211 = vpop.f32.mrf.mxu0
        %5212 = vmatprep.mubr.bf16.mxu0 0
        %5213 = vmatmul.mubr.bf16.gmra.mxu0 %v5102
        %v5214 = vpop.f32.mrf.mxu0
        %v5215 = vadd.f32 0.0, %v5214
        %v5216 = vpop.f32.mrf.mxu0
        %v5217 = vpop.f32.mrf.mxu0
        %v5218 = vadd.f32 0.0, %v5217
        %v5219 = vpop.f32.mrf.mxu0
        %5220 = vmatprep.mubr.bf16.mxu0 0
        %5221 = vmatmul.mubr.bf16.gmra.mxu0 %v5103
        %v5222 = vpop.f32.mrf.mxu0
        %v5223 = vadd.f32 0.0, %v5222
        %v5224 = vpop.f32.mrf.mxu0
        %v5225 = vpop.f32.mrf.mxu0
        %v5226 = vadd.f32 0.0, %v5225
        %v5227 = vpop.f32.mrf.mxu0
        %5228 = vmatprep.mubr.bf16.mxu0 0
        %5229 = vmatmul.mubr.bf16.gmra.mxu0 %v5104
        %v5230 = vpop.f32.mrf.mxu0
        %v5231 = vadd.f32 0.0, %v5230
        %v5232 = vpop.f32.mrf.mxu0
        %v5233 = vpop.f32.mrf.mxu0
        %v5234 = vadd.f32 0.0, %v5233
        %v5235 = vpop.f32.mrf.mxu0
        %5236 = vmatprep.mubr.bf16.mxu0 0
        %5237 = vmatmul.mubr.bf16.gmra.mxu0 %v5105
        %v5238 = vpop.f32.mrf.mxu0
        %v5239 = vadd.f32 0.0, %v5238
        %v5240 = vpop.f32.mrf.mxu0
        %v5241 = vpop.f32.mrf.mxu0
        %v5242 = vadd.f32 0.0, %v5241
        %v5243 = vpop.f32.mrf.mxu0
        %5244 = vmatprep.mubr.bf16.mxu0 0
        %5245 = vmatmul.mubr.bf16.gmra.mxu0 %v5106
        %v5246 = vpop.f32.mrf.mxu0
        %v5247 = vadd.f32 0.0, %v5246
        %v5248 = vpop.f32.mrf.mxu0
        %v5249 = vpop.f32.mrf.mxu0
        %v5250 = vadd.f32 0.0, %v5249
        %v5251 = vpop.f32.mrf.mxu0
        %5252 = vmatprep.mubr.bf16.mxu0 0
        %5253 = vmatmul.mubr.bf16.gmra.mxu0 %v5107
        %v5254 = vpop.f32.mrf.mxu0
        %v5255 = vadd.f32 0.0, %v5254
        %v5256 = vpop.f32.mrf.mxu0
        %v5257 = vpop.f32.mrf.mxu0
        %v5258 = vadd.f32 0.0, %v5257
        %v5259 = vpop.f32.mrf.mxu0
        %5260 = vdwg.mxu0
        %v5261 = vadd.f32 %v4981, %v5199
        %v5262 = vadd.f32 %v4982, %v5202
        %v5263 = vadd.f32 %v4983, %v5207
        %v5264 = vadd.f32 %v4984, %v5210
        %v5265 = vadd.f32 %v4985, %v5215
        %v5266 = vadd.f32 %v4986, %v5218
        %v5267 = vadd.f32 %v4987, %v5223
        %v5268 = vadd.f32 %v4988, %v5226
        %v5269 = vadd.f32 %v4989, %v5231
        %v5270 = vadd.f32 %v4990, %v5234
        %v5271 = vadd.f32 %v4991, %v5239
        %v5272 = vadd.f32 %v4992, %v5242
        %v5273 = vadd.f32 %v4993, %v5247
        %v5274 = vadd.f32 %v4994, %v5250
        %v5275 = vadd.f32 %v4995, %v5255
        %v5276 = vadd.f32 %v4996, %v5258
        %v5277 = vld [vmem:[%s5 + $0x2] sm:$0x1]
        %v5278 = vlaneseq
        %v5279 = vshrl.u32 %v5278, 7
        %v5280 = vsub.s32 0, %v5279
        %v5281 = vrot.slane %v5277, %v5280
        %v5282 = vmul.f32 %v5261, %v5281
        %v5283 = vmul.f32 %v5262, %v5281
        %v5284 = vmul.f32 %v5263, %v5281
        %v5285 = vmul.f32 %v5264, %v5281
        %v5286 = vmul.f32 %v5265, %v5281
        %v5287 = vmul.f32 %v5266, %v5281
        %v5288 = vmul.f32 %v5267, %v5281
        %v5289 = vmul.f32 %v5268, %v5281
        %v5290 = vmul.f32 %v5269, %v5281
        %v5291 = vmul.f32 %v5270, %v5281
        %v5292 = vmul.f32 %v5271, %v5281
        %v5293 = vmul.f32 %v5272, %v5281
        %v5294 = vmul.f32 %v5273, %v5281
        %v5295 = vmul.f32 %v5274, %v5281
        %v5296 = vmul.f32 %v5275, %v5281
        %v5297 = vmul.f32 %v5276, %v5281
        %v5298 = vld [vmem:[#allocation11 + $0x2] sm:$0x1]
        %v5299 = vlaneseq
        %v5300 = vshrl.u32 %v5299, 7
        %v5301 = vsub.s32 0, %v5300
        %v5302 = vrot.slane %v5298, %v5301
        %v5303 = vadd.f32 %v5282, %v5302
        %v5304 = vadd.f32 %v5283, %v5302
        %v5305 = vadd.f32 %v5284, %v5302
        %v5306 = vadd.f32 %v5285, %v5302
        %v5307 = vadd.f32 %v5286, %v5302
        %v5308 = vadd.f32 %v5287, %v5302
        %v5309 = vadd.f32 %v5288, %v5302
        %v5310 = vadd.f32 %v5289, %v5302
        %v5311 = vadd.f32 %v5290, %v5302
        %v5312 = vadd.f32 %v5291, %v5302
        %v5313 = vadd.f32 %v5292, %v5302
        %v5314 = vadd.f32 %v5293, %v5302
        %v5315 = vadd.f32 %v5294, %v5302
        %v5316 = vadd.f32 %v5295, %v5302
        %v5317 = vadd.f32 %v5296, %v5302
        %v5318 = vadd.f32 %v5297, %v5302
        %v5319 = vmax.f32 %v5303, 0.0
        %v5320 = vmax.f32 %v5304, 0.0
        %v5321 = vmax.f32 %v5305, 0.0
        %v5322 = vmax.f32 %v5306, 0.0
        %v5323 = vmax.f32 %v5307, 0.0
        %v5324 = vmax.f32 %v5308, 0.0
        %v5325 = vmax.f32 %v5309, 0.0
        %v5326 = vmax.f32 %v5310, 0.0
        %v5327 = vmax.f32 %v5311, 0.0
        %v5328 = vmax.f32 %v5312, 0.0
        %v5329 = vmax.f32 %v5313, 0.0
        %v5330 = vmax.f32 %v5314, 0.0
        %v5331 = vmax.f32 %v5315, 0.0
        %v5332 = vmax.f32 %v5316, 0.0
        %v5333 = vmax.f32 %v5317, 0.0
        %v5334 = vmax.f32 %v5318, 0.0
        %s5335 = scalar_lea.vmem [#allocation7], 1408
        %v5336 = vld [vmem:[%s5335] sm:$0xf]
        %v5337 = vld [vmem:[%s5335 + $0x4] sm:$0xf]
        %v5338 = vld [vmem:[%s5335 + $0x8] sm:$0xf]
        %v5339 = vld [vmem:[%s5335 + $0xc] sm:$0xf]
        %v5340 = vld [vmem:[%s5335 + $0x10] sm:$0xf]
        %v5341 = vld [vmem:[%s5335 + $0x14] sm:$0xf]
        %v5342 = vld [vmem:[%s5335 + $0x18] sm:$0xf]
        %v5343 = vld [vmem:[%s5335 + $0x1c] sm:$0xf]
        %v5344 = vld [vmem:[%s5335 + $0x20] sm:$0xf]
        %v5345 = vld [vmem:[%s5335 + $0x24] sm:$0xf]
        %v5346 = vld [vmem:[%s5335 + $0x28] sm:$0xf]
        %v5347 = vld [vmem:[%s5335 + $0x2c] sm:$0xf]
        %v5348 = vld [vmem:[%s5335 + $0x30] sm:$0xf]
        %v5349 = vld [vmem:[%s5335 + $0x34] sm:$0xf]
        %v5350 = vld [vmem:[%s5335 + $0x38] sm:$0xf]
        %v5351 = vld [vmem:[%s5335 + $0x3c] sm:$0xf]
        %v5368 = vunpack.c.l.b16 %v5336
        %v5369 = vunpack.c.l.b16 %v5337
        %v5370 = vunpack.c.l.b16 %v5338
        %v5371 = vunpack.c.l.b16 %v5339
        %v5372 = vunpack.c.l.b16 %v5340
        %v5373 = vunpack.c.l.b16 %v5341
        %v5374 = vunpack.c.l.b16 %v5342
        %v5375 = vunpack.c.l.b16 %v5343
        %v5376 = vunpack.c.l.b16 %v5344
        %v5377 = vunpack.c.l.b16 %v5345
        %v5378 = vunpack.c.l.b16 %v5346
        %v5379 = vunpack.c.l.b16 %v5347
        %v5380 = vunpack.c.l.b16 %v5348
        %v5381 = vunpack.c.l.b16 %v5349
        %v5382 = vunpack.c.l.b16 %v5350
        %v5383 = vunpack.c.l.b16 %v5351
        %v5384 = vpack.c.b16 %v5369, %v5368
        %v5385 = vpack.c.b16 %v5371, %v5370
        %v5386 = vpack.c.b16 %v5373, %v5372
        %v5387 = vpack.c.b16 %v5375, %v5374
        %v5388 = vpack.c.b16 %v5377, %v5376
        %v5389 = vpack.c.b16 %v5379, %v5378
        %v5390 = vpack.c.b16 %v5381, %v5380
        %v5391 = vpack.c.b16 %v5383, %v5382
        %5400 = vmatprep.subr.bf16.mxu0 0
        %5401 = vmatpush1.bf16.msra.mxu0 %v5391
        %5402 = vmatprep.subr.bf16.mxu0 0
        %5403 = vmatpush1.bf16.msra.mxu0 %v5390
        %5404 = vmatprep.subr.bf16.mxu0 0
        %5405 = vmatpush1.bf16.msra.mxu0 %v5389
        %5406 = vmatprep.subr.bf16.mxu0 0
        %5407 = vmatpush1.bf16.msra.mxu0 %v5388
        %5408 = vmatprep.subr.bf16.mxu0 0
        %5409 = vmatpush1.bf16.msra.mxu0 %v5387
        %5410 = vmatprep.subr.bf16.mxu0 0
        %5411 = vmatpush1.bf16.msra.mxu0 %v5386
        %5412 = vmatprep.subr.bf16.mxu0 0
        %5413 = vmatpush1.bf16.msra.mxu0 %v5385
        %5414 = vmatprep.subr.bf16.mxu0 0
        %5415 = vmatpush1.bf16.msra.mxu0 %v5384
        %5416 = vmatprep.subr.bf16.mxu0 0
        %5417 = vmatpush2.bf16.msra.mxu0 0
        %5418 = vmatprep.subr.bf16.mxu0 0
        %5419 = vmatpush2.bf16.msra.mxu0 0
        %5420 = vmatprep.subr.bf16.mxu0 0
        %5421 = vmatpush2.bf16.msra.mxu0 0
        %5422 = vmatprep.subr.bf16.mxu0 0
        %5423 = vmatpush2.bf16.msra.mxu0 0
        %5424 = vmatprep.subr.bf16.mxu0 0
        %5425 = vmatpush2.bf16.msra.mxu0 0
        %5426 = vmatprep.subr.bf16.mxu0 0
        %5427 = vmatpush2.bf16.msra.mxu0 0
        %5428 = vmatprep.subr.bf16.mxu0 0
        %5429 = vmatpush2.bf16.msra.mxu0 0
        %5430 = vmatprep.subr.bf16.mxu0 0
        %5431 = vmatpush2.bf16.msra.mxu0 0
        %5432 = vmatprep.mubr.bf16.mxu0 0
        %5433 = vmatmul.mubr.bf16.gmra.mxu0 %v628
        %v5434 = vpop.f32.mrf.mxu0
        %v5435 = vadd.f32 0.0, %v5434
        %v5436 = vpop.f32.mrf.mxu0
        %v5437 = vpop.f32.mrf.mxu0
        %v5438 = vadd.f32 0.0, %v5437
        %v5439 = vpop.f32.mrf.mxu0
        %5440 = vmatprep.mubr.bf16.mxu0 0
        %5441 = vmatmul.mubr.bf16.gmra.mxu0 %v629
        %v5442 = vpop.f32.mrf.mxu0
        %v5443 = vadd.f32 0.0, %v5442
        %v5444 = vpop.f32.mrf.mxu0
        %v5445 = vpop.f32.mrf.mxu0
        %v5446 = vadd.f32 0.0, %v5445
        %v5447 = vpop.f32.mrf.mxu0
        %5448 = vmatprep.mubr.bf16.mxu0 0
        %5449 = vmatmul.mubr.bf16.gmra.mxu0 %v630
        %v5450 = vpop.f32.mrf.mxu0
        %v5451 = vadd.f32 0.0, %v5450
        %v5452 = vpop.f32.mrf.mxu0
        %v5453 = vpop.f32.mrf.mxu0
        %v5454 = vadd.f32 0.0, %v5453
        %v5455 = vpop.f32.mrf.mxu0
        %5456 = vmatprep.mubr.bf16.mxu0 0
        %5457 = vmatmul.mubr.bf16.gmra.mxu0 %v631
        %v5458 = vpop.f32.mrf.mxu0
        %v5459 = vadd.f32 0.0, %v5458
        %v5460 = vpop.f32.mrf.mxu0
        %v5461 = vpop.f32.mrf.mxu0
        %v5462 = vadd.f32 0.0, %v5461
        %v5463 = vpop.f32.mrf.mxu0
        %5464 = vmatprep.mubr.bf16.mxu0 0
        %5465 = vmatmul.mubr.bf16.gmra.mxu0 %v632
        %v5466 = vpop.f32.mrf.mxu0
        %v5467 = vadd.f32 0.0, %v5466
        %v5468 = vpop.f32.mrf.mxu0
        %v5469 = vpop.f32.mrf.mxu0
        %v5470 = vadd.f32 0.0, %v5469
        %v5471 = vpop.f32.mrf.mxu0
        %5472 = vmatprep.mubr.bf16.mxu0 0
        %5473 = vmatmul.mubr.bf16.gmra.mxu0 %v633
        %v5474 = vpop.f32.mrf.mxu0
        %v5475 = vadd.f32 0.0, %v5474
        %v5476 = vpop.f32.mrf.mxu0
        %v5477 = vpop.f32.mrf.mxu0
        %v5478 = vadd.f32 0.0, %v5477
        %v5479 = vpop.f32.mrf.mxu0
        %5480 = vmatprep.mubr.bf16.mxu0 0
        %5481 = vmatmul.mubr.bf16.gmra.mxu0 %v634
        %v5482 = vpop.f32.mrf.mxu0
        %v5483 = vadd.f32 0.0, %v5482
        %v5484 = vpop.f32.mrf.mxu0
        %v5485 = vpop.f32.mrf.mxu0
        %v5486 = vadd.f32 0.0, %v5485
        %v5487 = vpop.f32.mrf.mxu0
        %5488 = vmatprep.mubr.bf16.mxu0 0
        %5489 = vmatmul.mubr.bf16.gmra.mxu0 %v635
        %v5490 = vpop.f32.mrf.mxu0
        %v5491 = vadd.f32 0.0, %v5490
        %v5492 = vpop.f32.mrf.mxu0
        %v5493 = vpop.f32.mrf.mxu0
        %v5494 = vadd.f32 0.0, %v5493
        %v5495 = vpop.f32.mrf.mxu0
        %5496 = vdwg.mxu0
        %v5497 = vld [vmem:[%s5 + $0x3] sm:$0x1]
        %v5498 = vlaneseq
        %v5499 = vshrl.u32 %v5498, 7
        %v5500 = vsub.s32 0, %v5499
        %v5501 = vrot.slane %v5497, %v5500
        %v5502 = vmul.f32 %v5435, %v5501
        %v5503 = vmul.f32 %v5438, %v5501
        %v5504 = vmul.f32 %v5443, %v5501
        %v5505 = vmul.f32 %v5446, %v5501
        %v5506 = vmul.f32 %v5451, %v5501
        %v5507 = vmul.f32 %v5454, %v5501
        %v5508 = vmul.f32 %v5459, %v5501
        %v5509 = vmul.f32 %v5462, %v5501
        %v5510 = vmul.f32 %v5467, %v5501
        %v5511 = vmul.f32 %v5470, %v5501
        %v5512 = vmul.f32 %v5475, %v5501
        %v5513 = vmul.f32 %v5478, %v5501
        %v5514 = vmul.f32 %v5483, %v5501
        %v5515 = vmul.f32 %v5486, %v5501
        %v5516 = vmul.f32 %v5491, %v5501
        %v5517 = vmul.f32 %v5494, %v5501
        %v5518 = vld [vmem:[#allocation11 + $0x3] sm:$0x1]
        %v5519 = vlaneseq
        %v5520 = vshrl.u32 %v5519, 7
        %v5521 = vsub.s32 0, %v5520
        %v5522 = vrot.slane %v5518, %v5521
        %v5523 = vadd.f32 %v5502, %v5522
        %v5524 = vadd.f32 %v5503, %v5522
        %v5525 = vadd.f32 %v5504, %v5522
        %v5526 = vadd.f32 %v5505, %v5522
        %v5527 = vadd.f32 %v5506, %v5522
        %v5528 = vadd.f32 %v5507, %v5522
        %v5529 = vadd.f32 %v5508, %v5522
        %v5530 = vadd.f32 %v5509, %v5522
        %v5531 = vadd.f32 %v5510, %v5522
        %v5532 = vadd.f32 %v5511, %v5522
        %v5533 = vadd.f32 %v5512, %v5522
        %v5534 = vadd.f32 %v5513, %v5522
        %v5535 = vadd.f32 %v5514, %v5522
        %v5536 = vadd.f32 %v5515, %v5522
        %v5537 = vadd.f32 %v5516, %v5522
        %v5538 = vadd.f32 %v5517, %v5522
        %v5539 = vmax.f32 %v5523, 0.0
        %v5540 = vmax.f32 %v5524, 0.0
        %v5541 = vmax.f32 %v5525, 0.0
        %v5542 = vmax.f32 %v5526, 0.0
        %v5543 = vmax.f32 %v5527, 0.0
        %v5544 = vmax.f32 %v5528, 0.0
        %v5545 = vmax.f32 %v5529, 0.0
        %v5546 = vmax.f32 %v5530, 0.0
        %v5547 = vmax.f32 %v5531, 0.0
        %v5548 = vmax.f32 %v5532, 0.0
        %v5549 = vmax.f32 %v5533, 0.0
        %v5550 = vmax.f32 %v5534, 0.0
        %v5551 = vmax.f32 %v5535, 0.0
        %v5552 = vmax.f32 %v5536, 0.0
        %v5553 = vmax.f32 %v5537, 0.0
        %v5554 = vmax.f32 %v5538, 0.0
        %v5555 = vpack.c.bf16 %v832, %v831
        %v5556 = vpack.c.bf16 %v834, %v833
        %v5557 = vpack.c.bf16 %v836, %v835
        %v5558 = vpack.c.bf16 %v838, %v837
        %v5559 = vpack.c.bf16 %v840, %v839
        %v5560 = vpack.c.bf16 %v842, %v841
        %v5561 = vpack.c.bf16 %v844, %v843
        %v5562 = vpack.c.bf16 %v846, %v845
        %v5563 = vpack.c.bf16 %v3017, %v3016
        %v5564 = vpack.c.bf16 %v3019, %v3018
        %v5565 = vpack.c.bf16 %v3021, %v3020
        %v5566 = vpack.c.bf16 %v3023, %v3022
        %v5567 = vpack.c.bf16 %v3025, %v3024
        %v5568 = vpack.c.bf16 %v3027, %v3026
        %v5569 = vpack.c.bf16 %v3029, %v3028
        %v5570 = vpack.c.bf16 %v3031, %v3030
        %v5571 = vpack.c.bf16 %v5320, %v5319
        %v5572 = vpack.c.bf16 %v5322, %v5321
        %v5573 = vpack.c.bf16 %v5324, %v5323
        %v5574 = vpack.c.bf16 %v5326, %v5325
        %v5575 = vpack.c.bf16 %v5328, %v5327
        %v5576 = vpack.c.bf16 %v5330, %v5329
        %v5577 = vpack.c.bf16 %v5332, %v5331
        %v5578 = vpack.c.bf16 %v5334, %v5333
        %v5579 = vpack.c.bf16 %v5540, %v5539
        %v5580 = vpack.c.bf16 %v5542, %v5541
        %v5581 = vpack.c.bf16 %v5544, %v5543
        %v5582 = vpack.c.bf16 %v5546, %v5545
        %v5583 = vpack.c.bf16 %v5548, %v5547
        %v5584 = vpack.c.bf16 %v5550, %v5549
        %v5585 = vpack.c.bf16 %v5552, %v5551
        %v5586 = vpack.c.bf16 %v5554, %v5553
        %v5587 = vld [vmem:[#allocation8] sm:$0xf]
        %v5588 = vld [vmem:[#allocation8 + $0x4] sm:$0xf]
        %v5589 = vld [vmem:[#allocation8 + $0x8] sm:$0xf]
        %v5590 = vld [vmem:[#allocation8 + $0xc] sm:$0xf]
        %v5591 = vld [vmem:[#allocation8 + $0x10] sm:$0xf]
        %v5592 = vld [vmem:[#allocation8 + $0x14] sm:$0xf]
        %v5593 = vld [vmem:[#allocation8 + $0x18] sm:$0xf]
        %v5594 = vld [vmem:[#allocation8 + $0x1c] sm:$0xf]
        %v5595 = vld [vmem:[#allocation8 + $0x20] sm:$0xf]
        %v5596 = vld [vmem:[#allocation8 + $0x24] sm:$0xf]
        %v5597 = vld [vmem:[#allocation8 + $0x28] sm:$0xf]
        %v5598 = vld [vmem:[#allocation8 + $0x2c] sm:$0xf]
        %v5599 = vld [vmem:[#allocation8 + $0x30] sm:$0xf]
        %v5600 = vld [vmem:[#allocation8 + $0x34] sm:$0xf]
        %v5601 = vld [vmem:[#allocation8 + $0x38] sm:$0xf]
        %v5602 = vld [vmem:[#allocation8 + $0x3c] sm:$0xf]
        %v5603 = vld [vmem:[#allocation8 + $0x40] sm:$0xf]
        %v5604 = vld [vmem:[#allocation8 + $0x44] sm:$0xf]
        %v5605 = vld [vmem:[#allocation8 + $0x48] sm:$0xf]
        %v5606 = vld [vmem:[#allocation8 + $0x4c] sm:$0xf]
        %v5607 = vld [vmem:[#allocation8 + $0x50] sm:$0xf]
        %v5608 = vld [vmem:[#allocation8 + $0x54] sm:$0xf]
        %v5609 = vld [vmem:[#allocation8 + $0x58] sm:$0xf]
        %v5610 = vld [vmem:[#allocation8 + $0x5c] sm:$0xf]
        %v5611 = vld [vmem:[#allocation8 + $0x60] sm:$0xf]
        %v5612 = vld [vmem:[#allocation8 + $0x64] sm:$0xf]
        %v5613 = vld [vmem:[#allocation8 + $0x68] sm:$0xf]
        %v5614 = vld [vmem:[#allocation8 + $0x6c] sm:$0xf]
        %v5615 = vld [vmem:[#allocation8 + $0x70] sm:$0xf]
        %v5616 = vld [vmem:[#allocation8 + $0x74] sm:$0xf]
        %v5617 = vld [vmem:[#allocation8 + $0x78] sm:$0xf]
        %v5618 = vld [vmem:[#allocation8 + $0x7c] sm:$0xf]
        %s5619 = scalar_lea.vmem [#allocation8], 128
        %v5620 = vld [vmem:[%s5619] sm:$0xf]
        %v5621 = vld [vmem:[%s5619 + $0x4] sm:$0xf]
        %v5622 = vld [vmem:[%s5619 + $0x8] sm:$0xf]
        %v5623 = vld [vmem:[%s5619 + $0xc] sm:$0xf]
        %v5624 = vld [vmem:[%s5619 + $0x10] sm:$0xf]
        %v5625 = vld [vmem:[%s5619 + $0x14] sm:$0xf]
        %v5626 = vld [vmem:[%s5619 + $0x18] sm:$0xf]
        %v5627 = vld [vmem:[%s5619 + $0x1c] sm:$0xf]
        %v5628 = vld [vmem:[%s5619 + $0x20] sm:$0xf]
        %v5629 = vld [vmem:[%s5619 + $0x24] sm:$0xf]
        %v5630 = vld [vmem:[%s5619 + $0x28] sm:$0xf]
        %v5631 = vld [vmem:[%s5619 + $0x2c] sm:$0xf]
        %v5632 = vld [vmem:[%s5619 + $0x30] sm:$0xf]
        %v5633 = vld [vmem:[%s5619 + $0x34] sm:$0xf]
        %v5634 = vld [vmem:[%s5619 + $0x38] sm:$0xf]
        %v5635 = vld [vmem:[%s5619 + $0x3c] sm:$0xf]
        %v5636 = vld [vmem:[%s5619 + $0x40] sm:$0xf]
        %v5637 = vld [vmem:[%s5619 + $0x44] sm:$0xf]
        %v5638 = vld [vmem:[%s5619 + $0x48] sm:$0xf]
        %v5639 = vld [vmem:[%s5619 + $0x4c] sm:$0xf]
        %v5640 = vld [vmem:[%s5619 + $0x50] sm:$0xf]
        %v5641 = vld [vmem:[%s5619 + $0x54] sm:$0xf]
        %v5642 = vld [vmem:[%s5619 + $0x58] sm:$0xf]
        %v5643 = vld [vmem:[%s5619 + $0x5c] sm:$0xf]
        %v5644 = vld [vmem:[%s5619 + $0x60] sm:$0xf]
        %v5645 = vld [vmem:[%s5619 + $0x64] sm:$0xf]
        %v5646 = vld [vmem:[%s5619 + $0x68] sm:$0xf]
        %v5647 = vld [vmem:[%s5619 + $0x6c] sm:$0xf]
        %v5648 = vld [vmem:[%s5619 + $0x70] sm:$0xf]
        %v5649 = vld [vmem:[%s5619 + $0x74] sm:$0xf]
        %v5650 = vld [vmem:[%s5619 + $0x78] sm:$0xf]
        %v5651 = vld [vmem:[%s5619 + $0x7c] sm:$0xf]
        %v5684 = vunpack.c.l.b16 %v5620
        %v5685 = vunpack.c.l.b16 %v5621
        %v5686 = vunpack.c.l.b16 %v5622
        %v5687 = vunpack.c.l.b16 %v5623
        %v5688 = vunpack.c.l.b16 %v5624
        %v5689 = vunpack.c.l.b16 %v5625
        %v5690 = vunpack.c.l.b16 %v5626
        %v5691 = vunpack.c.l.b16 %v5627
        %v5692 = vunpack.c.l.b16 %v5628
        %v5693 = vunpack.c.l.b16 %v5629
        %v5694 = vunpack.c.l.b16 %v5630
        %v5695 = vunpack.c.l.b16 %v5631
        %v5696 = vunpack.c.l.b16 %v5632
        %v5697 = vunpack.c.l.b16 %v5633
        %v5698 = vunpack.c.l.b16 %v5634
        %v5699 = vunpack.c.l.b16 %v5635
        %v5700 = vunpack.c.l.b16 %v5636
        %v5701 = vunpack.c.l.b16 %v5637
        %v5702 = vunpack.c.l.b16 %v5638
        %v5703 = vunpack.c.l.b16 %v5639
        %v5704 = vunpack.c.l.b16 %v5640
        %v5705 = vunpack.c.l.b16 %v5641
        %v5706 = vunpack.c.l.b16 %v5642
        %v5707 = vunpack.c.l.b16 %v5643
        %v5708 = vunpack.c.l.b16 %v5644
        %v5709 = vunpack.c.l.b16 %v5645
        %v5710 = vunpack.c.l.b16 %v5646
        %v5711 = vunpack.c.l.b16 %v5647
        %v5712 = vunpack.c.l.b16 %v5648
        %v5713 = vunpack.c.l.b16 %v5649
        %v5714 = vunpack.c.l.b16 %v5650
        %v5715 = vunpack.c.l.b16 %v5651
        %v5716 = vpack.c.b16 %v5685, %v5684
        %v5717 = vpack.c.b16 %v5687, %v5686
        %v5718 = vpack.c.b16 %v5689, %v5688
        %v5719 = vpack.c.b16 %v5691, %v5690
        %v5720 = vpack.c.b16 %v5693, %v5692
        %v5721 = vpack.c.b16 %v5695, %v5694
        %v5722 = vpack.c.b16 %v5697, %v5696
        %v5723 = vpack.c.b16 %v5699, %v5698
        %v5724 = vpack.c.b16 %v5701, %v5700
        %v5725 = vpack.c.b16 %v5703, %v5702
        %v5726 = vpack.c.b16 %v5705, %v5704
        %v5727 = vpack.c.b16 %v5707, %v5706
        %v5728 = vpack.c.b16 %v5709, %v5708
        %v5729 = vpack.c.b16 %v5711, %v5710
        %v5730 = vpack.c.b16 %v5713, %v5712
        %v5731 = vpack.c.b16 %v5715, %v5714
        %5748 = vmatprep.subr.bf16.mxu0 0
        %5749 = vmatpush1.bf16.msra.mxu0 %v5723
        %5750 = vmatprep.subr.bf16.mxu0 0
        %5751 = vmatpush1.bf16.msra.mxu0 %v5722
        %5752 = vmatprep.subr.bf16.mxu0 0
        %5753 = vmatpush1.bf16.msra.mxu0 %v5721
        %5754 = vmatprep.subr.bf16.mxu0 0
        %5755 = vmatpush1.bf16.msra.mxu0 %v5720
        %5756 = vmatprep.subr.bf16.mxu0 0
        %5757 = vmatpush1.bf16.msra.mxu0 %v5719
        %5758 = vmatprep.subr.bf16.mxu0 0
        %5759 = vmatpush1.bf16.msra.mxu0 %v5718
        %5760 = vmatprep.subr.bf16.mxu0 0
        %5761 = vmatpush1.bf16.msra.mxu0 %v5717
        %5762 = vmatprep.subr.bf16.mxu0 0
        %5763 = vmatpush1.bf16.msra.mxu0 %v5716
        %5764 = vmatprep.subr.bf16.mxu0 0
        %5765 = vmatpush2.bf16.msra.mxu0 %v5731
        %5766 = vmatprep.subr.bf16.mxu0 0
        %5767 = vmatpush2.bf16.msra.mxu0 %v5730
        %5768 = vmatprep.subr.bf16.mxu0 0
        %5769 = vmatpush2.bf16.msra.mxu0 %v5729
        %5770 = vmatprep.subr.bf16.mxu0 0
        %5771 = vmatpush2.bf16.msra.mxu0 %v5728
        %5772 = vmatprep.subr.bf16.mxu0 0
        %5773 = vmatpush2.bf16.msra.mxu0 %v5727
        %5774 = vmatprep.subr.bf16.mxu0 0
        %5775 = vmatpush2.bf16.msra.mxu0 %v5726
        %5776 = vmatprep.subr.bf16.mxu0 0
        %5777 = vmatpush2.bf16.msra.mxu0 %v5725
        %5778 = vmatprep.subr.bf16.mxu0 0
        %5779 = vmatpush2.bf16.msra.mxu0 %v5724
        %5780 = vmatprep.mubr.bf16.mxu0 %v5579
        %5781 = vmatmul.mubr.bf16.gmra.mxu0 %v5571
        %v5782 = vpop.f32.mrf.mxu0
        %v5783 = vadd.f32 0.0, %v5782
        %v5784 = vpop.f32.mrf.mxu0
        %v5785 = vpop.f32.mrf.mxu0
        %v5786 = vadd.f32 0.0, %v5785
        %v5787 = vpop.f32.mrf.mxu0
        %5788 = vmatprep.mubr.bf16.mxu0 %v5580
        %5789 = vmatmul.mubr.bf16.gmra.mxu0 %v5572
        %v5790 = vpop.f32.mrf.mxu0
        %v5791 = vadd.f32 0.0, %v5790
        %v5792 = vpop.f32.mrf.mxu0
        %v5793 = vpop.f32.mrf.mxu0
        %v5794 = vadd.f32 0.0, %v5793
        %v5795 = vpop.f32.mrf.mxu0
        %5796 = vmatprep.mubr.bf16.mxu0 %v5581
        %5797 = vmatmul.mubr.bf16.gmra.mxu0 %v5573
        %v5798 = vpop.f32.mrf.mxu0
        %v5799 = vadd.f32 0.0, %v5798
        %v5800 = vpop.f32.mrf.mxu0
        %v5801 = vpop.f32.mrf.mxu0
        %v5802 = vadd.f32 0.0, %v5801
        %v5803 = vpop.f32.mrf.mxu0
        %5804 = vmatprep.mubr.bf16.mxu0 %v5582
        %5805 = vmatmul.mubr.bf16.gmra.mxu0 %v5574
        %v5806 = vpop.f32.mrf.mxu0
        %v5807 = vadd.f32 0.0, %v5806
        %v5808 = vpop.f32.mrf.mxu0
        %v5809 = vpop.f32.mrf.mxu0
        %v5810 = vadd.f32 0.0, %v5809
        %v5811 = vpop.f32.mrf.mxu0
        %5812 = vmatprep.mubr.bf16.mxu0 %v5583
        %5813 = vmatmul.mubr.bf16.gmra.mxu0 %v5575
        %v5814 = vpop.f32.mrf.mxu0
        %v5815 = vadd.f32 0.0, %v5814
        %v5816 = vpop.f32.mrf.mxu0
        %v5817 = vpop.f32.mrf.mxu0
        %v5818 = vadd.f32 0.0, %v5817
        %v5819 = vpop.f32.mrf.mxu0
        %5820 = vmatprep.mubr.bf16.mxu0 %v5584
        %5821 = vmatmul.mubr.bf16.gmra.mxu0 %v5576
        %v5822 = vpop.f32.mrf.mxu0
        %v5823 = vadd.f32 0.0, %v5822
        %v5824 = vpop.f32.mrf.mxu0
        %v5825 = vpop.f32.mrf.mxu0
        %v5826 = vadd.f32 0.0, %v5825
        %v5827 = vpop.f32.mrf.mxu0
        %5828 = vmatprep.mubr.bf16.mxu0 %v5585
        %5829 = vmatmul.mubr.bf16.gmra.mxu0 %v5577
        %v5830 = vpop.f32.mrf.mxu0
        %v5831 = vadd.f32 0.0, %v5830
        %v5832 = vpop.f32.mrf.mxu0
        %v5833 = vpop.f32.mrf.mxu0
        %v5834 = vadd.f32 0.0, %v5833
        %v5835 = vpop.f32.mrf.mxu0
        %5836 = vmatprep.mubr.bf16.mxu0 %v5586
        %5837 = vmatmul.mubr.bf16.gmra.mxu0 %v5578
        %v5838 = vpop.f32.mrf.mxu0
        %v5839 = vadd.f32 0.0, %v5838
        %v5840 = vpop.f32.mrf.mxu0
        %v5841 = vpop.f32.mrf.mxu0
        %v5842 = vadd.f32 0.0, %v5841
        %v5843 = vpop.f32.mrf.mxu0
        %5844 = vdwg.mxu0
        %v5877 = vunpack.c.l.b16 %v5587
        %v5878 = vunpack.c.l.b16 %v5588
        %v5879 = vunpack.c.l.b16 %v5589
        %v5880 = vunpack.c.l.b16 %v5590
        %v5881 = vunpack.c.l.b16 %v5591
        %v5882 = vunpack.c.l.b16 %v5592
        %v5883 = vunpack.c.l.b16 %v5593
        %v5884 = vunpack.c.l.b16 %v5594
        %v5885 = vunpack.c.l.b16 %v5595
        %v5886 = vunpack.c.l.b16 %v5596
        %v5887 = vunpack.c.l.b16 %v5597
        %v5888 = vunpack.c.l.b16 %v5598
        %v5889 = vunpack.c.l.b16 %v5599
        %v5890 = vunpack.c.l.b16 %v5600
        %v5891 = vunpack.c.l.b16 %v5601
        %v5892 = vunpack.c.l.b16 %v5602
        %v5893 = vunpack.c.l.b16 %v5603
        %v5894 = vunpack.c.l.b16 %v5604
        %v5895 = vunpack.c.l.b16 %v5605
        %v5896 = vunpack.c.l.b16 %v5606
        %v5897 = vunpack.c.l.b16 %v5607
        %v5898 = vunpack.c.l.b16 %v5608
        %v5899 = vunpack.c.l.b16 %v5609
        %v5900 = vunpack.c.l.b16 %v5610
        %v5901 = vunpack.c.l.b16 %v5611
        %v5902 = vunpack.c.l.b16 %v5612
        %v5903 = vunpack.c.l.b16 %v5613
        %v5904 = vunpack.c.l.b16 %v5614
        %v5905 = vunpack.c.l.b16 %v5615
        %v5906 = vunpack.c.l.b16 %v5616
        %v5907 = vunpack.c.l.b16 %v5617
        %v5908 = vunpack.c.l.b16 %v5618
        %v5909 = vpack.c.b16 %v5878, %v5877
        %v5910 = vpack.c.b16 %v5880, %v5879
        %v5911 = vpack.c.b16 %v5882, %v5881
        %v5912 = vpack.c.b16 %v5884, %v5883
        %v5913 = vpack.c.b16 %v5886, %v5885
        %v5914 = vpack.c.b16 %v5888, %v5887
        %v5915 = vpack.c.b16 %v5890, %v5889
        %v5916 = vpack.c.b16 %v5892, %v5891
        %v5917 = vpack.c.b16 %v5894, %v5893
        %v5918 = vpack.c.b16 %v5896, %v5895
        %v5919 = vpack.c.b16 %v5898, %v5897
        %v5920 = vpack.c.b16 %v5900, %v5899
        %v5921 = vpack.c.b16 %v5902, %v5901
        %v5922 = vpack.c.b16 %v5904, %v5903
        %v5923 = vpack.c.b16 %v5906, %v5905
        %v5924 = vpack.c.b16 %v5908, %v5907
        %5941 = vmatprep.subr.bf16.mxu0 0
        %5942 = vmatpush1.bf16.msra.mxu0 %v5916
        %5943 = vmatprep.subr.bf16.mxu0 0
        %5944 = vmatpush1.bf16.msra.mxu0 %v5915
        %5945 = vmatprep.subr.bf16.mxu0 0
        %5946 = vmatpush1.bf16.msra.mxu0 %v5914
        %5947 = vmatprep.subr.bf16.mxu0 0
        %5948 = vmatpush1.bf16.msra.mxu0 %v5913
        %5949 = vmatprep.subr.bf16.mxu0 0
        %5950 = vmatpush1.bf16.msra.mxu0 %v5912
        %5951 = vmatprep.subr.bf16.mxu0 0
        %5952 = vmatpush1.bf16.msra.mxu0 %v5911
        %5953 = vmatprep.subr.bf16.mxu0 0
        %5954 = vmatpush1.bf16.msra.mxu0 %v5910
        %5955 = vmatprep.subr.bf16.mxu0 0
        %5956 = vmatpush1.bf16.msra.mxu0 %v5909
        %5957 = vmatprep.subr.bf16.mxu0 0
        %5958 = vmatpush2.bf16.msra.mxu0 %v5924
        %5959 = vmatprep.subr.bf16.mxu0 0
        %5960 = vmatpush2.bf16.msra.mxu0 %v5923
        %5961 = vmatprep.subr.bf16.mxu0 0
        %5962 = vmatpush2.bf16.msra.mxu0 %v5922
        %5963 = vmatprep.subr.bf16.mxu0 0
        %5964 = vmatpush2.bf16.msra.mxu0 %v5921
        %5965 = vmatprep.subr.bf16.mxu0 0
        %5966 = vmatpush2.bf16.msra.mxu0 %v5920
        %5967 = vmatprep.subr.bf16.mxu0 0
        %5968 = vmatpush2.bf16.msra.mxu0 %v5919
        %5969 = vmatprep.subr.bf16.mxu0 0
        %5970 = vmatpush2.bf16.msra.mxu0 %v5918
        %5971 = vmatprep.subr.bf16.mxu0 0
        %5972 = vmatpush2.bf16.msra.mxu0 %v5917
        %5973 = vmatprep.mubr.bf16.mxu0 %v5563
        %5974 = vmatmul.mubr.bf16.gmra.mxu0 %v5555
        %v5975 = vpop.f32.mrf.mxu0
        %v5976 = vadd.f32 %v5783, %v5975
        %v5977 = vpop.f32.mrf.mxu0
        %v5978 = vpop.f32.mrf.mxu0
        %v5979 = vadd.f32 %v5786, %v5978
        %v5980 = vpop.f32.mrf.mxu0
        %5981 = vmatprep.mubr.bf16.mxu0 %v5564
        %5982 = vmatmul.mubr.bf16.gmra.mxu0 %v5556
        %v5983 = vpop.f32.mrf.mxu0
        %v5984 = vadd.f32 %v5791, %v5983
        %v5985 = vpop.f32.mrf.mxu0
        %v5986 = vpop.f32.mrf.mxu0
        %v5987 = vadd.f32 %v5794, %v5986
        %v5988 = vpop.f32.mrf.mxu0
        %5989 = vmatprep.mubr.bf16.mxu0 %v5565
        %5990 = vmatmul.mubr.bf16.gmra.mxu0 %v5557
        %v5991 = vpop.f32.mrf.mxu0
        %v5992 = vadd.f32 %v5799, %v5991
        %v5993 = vpop.f32.mrf.mxu0
        %v5994 = vpop.f32.mrf.mxu0
        %v5995 = vadd.f32 %v5802, %v5994
        %v5996 = vpop.f32.mrf.mxu0
        %5997 = vmatprep.mubr.bf16.mxu0 %v5566
        %5998 = vmatmul.mubr.bf16.gmra.mxu0 %v5558
        %v5999 = vpop.f32.mrf.mxu0
        %v6000 = vadd.f32 %v5807, %v5999
        %v6001 = vpop.f32.mrf.mxu0
        %v6002 = vpop.f32.mrf.mxu0
        %v6003 = vadd.f32 %v5810, %v6002
        %v6004 = vpop.f32.mrf.mxu0
        %6005 = vmatprep.mubr.bf16.mxu0 %v5567
        %6006 = vmatmul.mubr.bf16.gmra.mxu0 %v5559
        %v6007 = vpop.f32.mrf.mxu0
        %v6008 = vadd.f32 %v5815, %v6007
        %v6009 = vpop.f32.mrf.mxu0
        %v6010 = vpop.f32.mrf.mxu0
        %v6011 = vadd.f32 %v5818, %v6010
        %v6012 = vpop.f32.mrf.mxu0
        %6013 = vmatprep.mubr.bf16.mxu0 %v5568
        %6014 = vmatmul.mubr.bf16.gmra.mxu0 %v5560
        %v6015 = vpop.f32.mrf.mxu0
        %v6016 = vadd.f32 %v5823, %v6015
        %v6017 = vpop.f32.mrf.mxu0
        %v6018 = vpop.f32.mrf.mxu0
        %v6019 = vadd.f32 %v5826, %v6018
        %v6020 = vpop.f32.mrf.mxu0
        %6021 = vmatprep.mubr.bf16.mxu0 %v5569
        %6022 = vmatmul.mubr.bf16.gmra.mxu0 %v5561
        %v6023 = vpop.f32.mrf.mxu0
        %v6024 = vadd.f32 %v5831, %v6023
        %v6025 = vpop.f32.mrf.mxu0
        %v6026 = vpop.f32.mrf.mxu0
        %v6027 = vadd.f32 %v5834, %v6026
        %v6028 = vpop.f32.mrf.mxu0
        %6029 = vmatprep.mubr.bf16.mxu0 %v5570
        %6030 = vmatmul.mubr.bf16.gmra.mxu0 %v5562
        %v6031 = vpop.f32.mrf.mxu0
        %v6032 = vadd.f32 %v5839, %v6031
        %v6033 = vpop.f32.mrf.mxu0
        %v6034 = vpop.f32.mrf.mxu0
        %v6035 = vadd.f32 %v5842, %v6034
        %v6036 = vpop.f32.mrf.mxu0
        %6037 = vdwg.mxu0
        %v6038 = vld [vmem:[%s359] sm:$0x1]
        %v6040 = vlaneseq
        %v6041 = vshrl.u32 %v6040, 7
        %v6042 = vsub.s32 0, %v6041
        %v6043 = vrot.slane %v6038, %v6042
        %v6045 = vadd.f32 %v5976, %v6043
        %v6046 = vadd.f32 %v5979, %v6043
        %v6047 = vadd.f32 %v5984, %v6043
        %v6048 = vadd.f32 %v5987, %v6043
        %v6049 = vadd.f32 %v5992, %v6043
        %v6050 = vadd.f32 %v5995, %v6043
        %v6051 = vadd.f32 %v6000, %v6043
        %v6052 = vadd.f32 %v6003, %v6043
        %v6053 = vadd.f32 %v6008, %v6043
        %v6054 = vadd.f32 %v6011, %v6043
        %v6055 = vadd.f32 %v6016, %v6043
        %v6056 = vadd.f32 %v6019, %v6043
        %v6057 = vadd.f32 %v6024, %v6043
        %v6058 = vadd.f32 %v6027, %v6043
        %v6059 = vadd.f32 %v6032, %v6043
        %v6060 = vadd.f32 %v6035, %v6043
        %v6061 = vld [vmem:[%s5 + $0x5] sm:$0x1]
        %v6062 = vlaneseq
        %v6063 = vshrl.u32 %v6062, 7
        %v6064 = vsub.s32 0, %v6063
        %v6065 = vrot.slane %v6061, %v6064
        %v6066 = vmul.f32 %v6045, %v6065
        %v6067 = vmul.f32 %v6046, %v6065
        %v6068 = vmul.f32 %v6047, %v6065
        %v6069 = vmul.f32 %v6048, %v6065
        %v6070 = vmul.f32 %v6049, %v6065
        %v6071 = vmul.f32 %v6050, %v6065
        %v6072 = vmul.f32 %v6051, %v6065
        %v6073 = vmul.f32 %v6052, %v6065
        %v6074 = vmul.f32 %v6053, %v6065
        %v6075 = vmul.f32 %v6054, %v6065
        %v6076 = vmul.f32 %v6055, %v6065
        %v6077 = vmul.f32 %v6056, %v6065
        %v6078 = vmul.f32 %v6057, %v6065
        %v6079 = vmul.f32 %v6058, %v6065
        %v6080 = vmul.f32 %v6059, %v6065
        %v6081 = vmul.f32 %v6060, %v6065
        %v6082 = vld [vmem:[#allocation11 + $0x5] sm:$0x1]
        %v6083 = vlaneseq
        %v6084 = vshrl.u32 %v6083, 7
        %v6085 = vsub.s32 0, %v6084
        %v6086 = vrot.slane %v6082, %v6085
        %v6087 = vadd.f32 %v6066, %v6086
        %v6088 = vadd.f32 %v6067, %v6086
        %v6089 = vadd.f32 %v6068, %v6086
        %v6090 = vadd.f32 %v6069, %v6086
        %v6091 = vadd.f32 %v6070, %v6086
        %v6092 = vadd.f32 %v6071, %v6086
        %v6093 = vadd.f32 %v6072, %v6086
        %v6094 = vadd.f32 %v6073, %v6086
        %v6095 = vadd.f32 %v6074, %v6086
        %v6096 = vadd.f32 %v6075, %v6086
        %v6097 = vadd.f32 %v6076, %v6086
        %v6098 = vadd.f32 %v6077, %v6086
        %v6099 = vadd.f32 %v6078, %v6086
        %v6100 = vadd.f32 %v6079, %v6086
        %v6101 = vadd.f32 %v6080, %v6086
        %v6102 = vadd.f32 %v6081, %v6086
        %v6103 = vmax.f32 %v6087, 0.0
        %v6104 = vmax.f32 %v6088, 0.0
        %v6105 = vmax.f32 %v6089, 0.0
        %v6106 = vmax.f32 %v6090, 0.0
        %v6107 = vmax.f32 %v6091, 0.0
        %v6108 = vmax.f32 %v6092, 0.0
        %v6109 = vmax.f32 %v6093, 0.0
        %v6110 = vmax.f32 %v6094, 0.0
        %v6111 = vmax.f32 %v6095, 0.0
        %v6112 = vmax.f32 %v6096, 0.0
        %v6113 = vmax.f32 %v6097, 0.0
        %v6114 = vmax.f32 %v6098, 0.0
        %v6115 = vmax.f32 %v6099, 0.0
        %v6116 = vmax.f32 %v6100, 0.0
        %v6117 = vmax.f32 %v6101, 0.0
        %v6118 = vmax.f32 %v6102, 0.0
        %6119 = vst [vmem:[%s397] sm:$0xff] %v6103
        %6120 = vst [vmem:[%s397 + $0x8] sm:$0xff] %v6104
        %6121 = vst [vmem:[%s397 + $0x10] sm:$0xff] %v6105
        %6122 = vst [vmem:[%s397 + $0x18] sm:$0xff] %v6106
        %6123 = vst [vmem:[%s397 + $0x20] sm:$0xff] %v6107
        %6124 = vst [vmem:[%s397 + $0x28] sm:$0xff] %v6108
        %6125 = vst [vmem:[%s397 + $0x30] sm:$0xff] %v6109
        %6126 = vst [vmem:[%s397 + $0x38] sm:$0xff] %v6110
        %6127 = vst [vmem:[%s397 + $0x40] sm:$0xff] %v6111
        %6128 = vst [vmem:[%s397 + $0x48] sm:$0xff] %v6112
        %6129 = vst [vmem:[%s397 + $0x50] sm:$0xff] %v6113
        %6130 = vst [vmem:[%s397 + $0x58] sm:$0xff] %v6114
        %6131 = vst [vmem:[%s397 + $0x60] sm:$0xff] %v6115
        %6132 = vst [vmem:[%s397 + $0x68] sm:$0xff] %v6116
        %6133 = vst [vmem:[%s397 + $0x70] sm:$0xff] %v6117
        %6134 = vst [vmem:[%s397 + $0x78] sm:$0xff] %v6118
        %s6135 = sand.u32 %s205, 1
        %s6136 = scalar_lea.sflag [#allocation4], %s6135
        %s6137 = sand.u32 %s205, 1
        %s6138 = smul.addr %s6137, 128
        %s6139 = scalar_lea.vmem [#allocation12], %s6138
        // Predicated region
        $region73: #{tpu_custom_call.1} parent=47 // pred_check
          %p6140 = pneg %p215
        $region74: #{tpu_custom_call.1} parent=47 // pred_check_branch
          %6142 = sbr.rel (%p6140) target = $region76
        $region75: #{tpu_custom_call.1} parent=47 // pred_region
          %s6143 = smul.u32 8, %s31
          %s6145 = ssub.s32 2048, 2048
          %6146 = vsyncadd %s6136, %s6145
          %s6147 = smul.addr %s6143, 2
          %s6148 = smul.addr %s30, 32
          %s6149 = sadd.s32 %s6147, %s6148
          %s6150 = smul.addr %s6149, 128
          %s6151 = scalar_lea.hbm %s7, %s6150
          %s6152 = sshll.u32 %s6139, 4
          %s6153 = int_to_ptr.vmem [resolvable:$true] %s6152
          %6158 = dma.vmem_to_hbm [thread:$0]  %s6153, 2048, %s6151, %s6136, 128, 128, 8
        $region76: #{tpu_custom_call.1} parent=47 // pred_fallthru
          _
      $region48: #{tpu_custom_call.1} parent=5 // pred_fallthru
        _
      %p6159 = scmp.le.s32.totalorder 2, %s21
      // Predicated region
      $region77: #{tpu_custom_call.1} parent=5 // pred_check
        %p6160 = pneg %p6159
      $region78: #{tpu_custom_call.1} parent=5 // pred_check_branch
        %6162 = sbr.rel (%p6160) target = $region80
      $region79: #{tpu_custom_call.1} parent=5 // pred_region
        %s6163 = ssub.s32 %s21, 2
        // Predicated region
        $region81: #{tpu_custom_call.1} parent=79 // pred_check
          %p6164 = pneg %p221
        $region82: #{tpu_custom_call.1} parent=79 // pred_check_branch
          %6166 = sbr.rel (%p6164) target = $region84
        $region83: #{tpu_custom_call.1} parent=79 // pred_region
          %s6167 = sand.u32 %s206, 1
          %s6168 = scalar_lea.sflag [#allocation4], %s6167
          %s6169 = sand.u32 %s206, 1
          %s6170 = smul.addr %s6169, 128
          %s6171 = scalar_lea.vmem [#allocation12], %s6170
          %6172 = dma.done %s6168, 2048
        $region84: #{tpu_custom_call.1} parent=79 // pred_fallthru
          _
      $region80: #{tpu_custom_call.1} parent=5 // pred_fallthru
        _
    $region6: #{tpu_custom_call.1} parent=1 // loop_footer
      %s25 = sadd.s32 1, %s21
    $region7: #{tpu_custom_call.1} parent=1 // loop_footer_branch
      %20 = sbr.rel target = $region3
    $region8: #{tpu_custom_call.1} parent=1 // loop_exit
      _
    %6173 = vsyncpa [#allocation3], 1
    %s6174 = scalar_lea.sflag [#allocation3], 1
    %6175 = vsyncpa %s6174, 1
    %6176 = vsyncpa [#allocation6], 1
    %6177 = vsyncpa [#allocation9], 1
    %6178 = vsyncpa [#allocation4], 1
    %s6179 = scalar_lea.sflag [#allocation4], 1
    %6180 = vsyncpa %s6179, 1

</llo_original>
